<compile_context>
chip_gen: v7x
topology: tpu7x:2x2x1
jax: 0.10.0
libtpu: 0.0.40
codegen_flags: <defaults>
</compile_context>

<pallas_src>
import jax
import jax.numpy as jnp
from jax.experimental import pallas as pl
from jax.experimental.pallas import tpu as pltpu

_VSPEC = pl.BlockSpec(memory_space=pltpu.MemorySpace.VMEM)
_MM_DTYPE = jnp.bfloat16      # MXU operand dtype (accumulation is f32); set jnp.float32 for
                              # bit-closer-to-PyTorch numerics.
_LANE = 128                   # logits padded to a lane-dense width
_BN_EPS = 1e-5
_LN_EPS = 1e-5


# ----------------------------------------------------------------------------
# Single fused kernel (one grid step == one image)
# ----------------------------------------------------------------------------
def _make_cnn_kernel(cfgs):
    """cfgs: tuple of (H, W, K, Cin, Cout) per conv block (static)."""

    def kernel(x_ref,
               w1_ref, b1_ref, w2_ref, b2_ref, w3_ref, b3_ref,
               pe1_ref, po1_ref, pe2_ref, po2_ref, pe3_ref, po3_ref,
               fc1w_ref, fc1b_ref, lng_ref, lnb_ref, fc2w_ref, fc2b_ref,
               lat_ref, logits_ref,
               y_scr, xp2_scr, xp3_scr):
        conv_w = (w1_ref, w2_ref, w3_ref)
        conv_b = (b1_ref, b2_ref, b3_ref)
        sels = ((pe1_ref, po1_ref), (pe2_ref, po2_ref), (pe3_ref, po3_ref))
        xp_scr = (xp2_scr, xp3_scr)

        pooled = None
        for bi, (h, w, k, cin, cout) in enumerate(cfgs):
            # ---- conv + folded-BN bias + ReLU: k row-shifted banded matmuls, vreg acc ----
            src = x_ref if bi == 0 else xp_scr[bi - 1]
            slabs = [src[pl.ds(ky, h), :].astype(_MM_DTYPE) for ky in range(k)]
            acc = jnp.dot(slabs[0], conv_w[bi][0], preferred_element_type=jnp.float32)
            for ky in range(1, k):
                acc = acc + jnp.dot(slabs[ky], conv_w[bi][ky],
                                    preferred_element_type=jnp.float32)
            y = jnp.maximum(acc + conv_b[bi][...], 0.0)            # [h, w*cout] f32
            # TODO(synk): nn.Dropout(p=0.2) — identity in inference mode (no RNG mask).

            # ---- 2x2 / stride-2 max pool + repack into next block's haloed layout -------
            ho = h // 2
            y_scr[pl.ds(0, h), :] = y
            vert = jnp.maximum(y_scr[pl.ds(0, ho, stride=2), :],
                               y_scr[pl.ds(1, ho, stride=2), :]).astype(_MM_DTYPE)
            pe, po = sels[bi]
            pooled = jnp.maximum(                                  # horizontal max + lane repack
                jnp.dot(vert, pe[...], preferred_element_type=jnp.float32),
                jnp.dot(vert, po[...], preferred_element_type=jnp.float32))
            if bi + 1 < len(cfgs):
                nxt = xp_scr[bi]
                p_next = cfgs[bi + 1][2] // 2
                nxt[...] = jnp.zeros(nxt.shape, nxt.dtype)         # keep halo rows exactly 0
                nxt[pl.ds(p_next, ho), :] = pooled

        # ---- head: fc1 (NCHW flatten folded into weight row order) + LayerNorm + fc2 ----
        h3, w3, _, _, c3 = cfgs[-1]
        ho3, chunk = h3 // 2, (w3 // 2) * c3
        pre = fc1b_ref[...]                                        # [1, d_lat]
        for r in range(ho3):
            xr = pooled[r:r + 1, :].astype(_MM_DTYPE)              # [1, chunk]
            wr = fc1w_ref[pl.ds(r * chunk, chunk), :]              # [chunk, d_lat]
            pre = pre + jnp.dot(xr, wr, preferred_element_type=jnp.float32)
        mu = jnp.mean(pre, axis=-1, keepdims=True)
        diff = pre - mu
        var = jnp.mean(diff * diff, axis=-1, keepdims=True)
        lat = diff * jax.lax.rsqrt(var + _LN_EPS) * lng_ref[...] + lnb_ref[...]
        lat_ref[...] = lat
        logits_ref[...] = (jnp.dot(lat.astype(_MM_DTYPE), fc2w_ref[...],
                                   preferred_element_type=jnp.float32) + fc2b_ref[...])

    return kernel


# ----------------------------------------------------------------------------
# Host-side constant builders (run once per call, outside the kernel)
# ----------------------------------------------------------------------------
def _banded_conv_weight(w_hwio, scale, w_out, mm_dtype):
    """[k,k,cin,cout] HWIO conv weight (BN scale folded) -> [k, Wp*Cin, W*Cout] banded mats."""
    k, _, cin, cout = w_hwio.shape
    wp = w_out + (k - 1)
    ws = w_hwio * scale[None, None, None, :]
    xp_idx = jnp.arange(wp)[:, None]                 # padded column index
    x_idx = jnp.arange(w_out)[None, :]               # output column index
    kx = xp_idx - x_idx                              # [wp, w_out]
    valid = (kx >= 0) & (kx < k)
    kx_c = jnp.clip(kx, 0, k - 1)
    g = ws[:, kx_c, :, :]                            # [k, wp, w_out, cin, cout]
    g = jnp.where(valid[None, :, :, None, None], g, 0.0)
    g = jnp.transpose(g, (0, 1, 3, 2, 4))            # [k, wp, cin, w_out, cout]
    return g.reshape(k, wp * cin, w_out * cout).astype(mm_dtype)


def _pool_select(w_out, cout, p_next, width_next, mm_dtype):
    """0/1 matrices picking even/odd horizontal positions of a [*, W*Cout] map into lanes
    (p_next + q)*cout + co of a width_next-lane (haloed) map."""
    wo = w_out // 2
    q = jnp.arange(wo)[:, None]
    co = jnp.arange(cout)[None, :]
    src_even = (2 * q) * cout + co
    src_odd = src_even + cout
    tgt = (p_next + q) * cout + co
    base = jnp.zeros((w_out * cout, width_next), jnp.float32)
    pe = base.at[src_even.ravel(), tgt.ravel()].set(1.0).astype(mm_dtype)
    po = base.at[src_odd.ravel(), tgt.ravel()].set(1.0).astype(mm_dtype)
    return pe, po


# ----------------------------------------------------------------------------
# Wrapper: layout/parameter glue + the single pallas_call
# ----------------------------------------------------------------------------
def cnn_forward(x_nchw, params):
    n, cin0, h0, w0 = x_nchw.shape
    assert h0 % 8 == 0 and w0 % 8 == 0, "three 2x2 pools need spatial dims divisible by 8"

    # Static per-block geometry from the conv weights.
    cfgs = []
    hh, ww = h0, w0
    for name in ("b1", "b2", "b3"):
        bk, _, wcin, wcout = params[name]["w"].shape
        cfgs.append((hh, ww, bk, wcin, wcout))
        hh, ww = hh // 2, ww // 2
    cfgs = tuple(cfgs)
    assert cfgs[0][3] == cin0
    width = cfgs[0][1] * cfgs[0][4]                  # conv-out lane width (same for all blocks)
    for (bh, bw, bk, bcin, bcout) in cfgs:
        assert bw * bcout == width
    h3, w3, _, _, c3 = cfgs[-1]
    n_flat = (h3 // 2) * (w3 // 2) * c3
    d_lat = params["fc1_w"].shape[1]
    num_classes = params["fc2_w"].shape[1]
    assert params["fc1_w"].shape[0] == n_flat

    # ---- host-side layout glue ----
    k1 = cfgs[0][2]
    p1 = k1 // 2
    hp1, wp1 = h0 + 2 * p1, w0 + 2 * p1
    x = jnp.transpose(x_nchw, (0, 2, 3, 1)).astype(jnp.float32)       # NCHW -> NHWC
    x = jnp.pad(x, ((0, 0), (p1, p1), (p1, p1), (0, 0)))
    x = x.reshape(n, hp1, wp1 * cin0)                                 # [n, Hp, Wp*Cin]

    conv_args = []
    for name, (bh, bw, bk, bcin, bcout) in zip(("b1", "b2", "b3"), cfgs):
        prm = params[name]
        scale = prm["bn_gamma"] * jax.lax.rsqrt(prm["bn_var"] + _BN_EPS)
        wb = _banded_conv_weight(prm["w"], scale, bw, _MM_DTYPE)      # BN scale folded in
        bias = (prm["b"] - prm["bn_mean"]) * scale + prm["bn_beta"]
        bias_lanes = jnp.tile(bias, bw).reshape(1, bw * bcout).astype(jnp.float32)
        conv_args += [wb, bias_lanes]

    sel_args = []
    for bi, (bh, bw, bk, bcin, bcout) in enumerate(cfgs):
        if bi + 1 < len(cfgs):
            hn, wn, kn, cinn, _ = cfgs[bi + 1]
            pn = kn // 2
            width_next = (wn + 2 * pn) * cinn
        else:
            pn = 0
            width_next = (bw // 2) * bcout
        pe, po = _pool_select(bw, bcout, pn, width_next, _MM_DTYPE)
        sel_args += [pe, po]

    fc1_w = params["fc1_w"].astype(_MM_DTYPE)                # rows already in HWC order
    fc1_b = params["fc1_b"].reshape(1, d_lat).astype(jnp.float32)
    ln_g = params["ln_g"].reshape(1, d_lat).astype(jnp.float32)
    ln_b = params["ln_b"].reshape(1, d_lat).astype(jnp.float32)
    pad_c = _LANE - num_classes                              # lane-dense logits output
    fc2_w = jnp.pad(params["fc2_w"], ((0, 0), (0, pad_c))).astype(_MM_DTYPE)
    fc2_b = jnp.pad(params["fc2_b"], (0, pad_c)).reshape(1, _LANE).astype(jnp.float32)

    # ---- per-image VMEM scratch (independent of batch size) ----
    scratch = [pltpu.VMEM((cfgs[0][0], width), jnp.float32)]          # conv-out buffer (reused)
    for (bh, bw, bk, bcin, bcout) in cfgs[1:]:                        # haloed inputs of blocks 2,3
        p = bk // 2
        scratch.append(pltpu.VMEM((bh + 2 * p, (bw + 2 * p) * bcin), jnp.float32))

    kernel = _make_cnn_kernel(cfgs)
    x_spec = pl.BlockSpec((pl.Squeezed(), hp1, wp1 * cin0), lambda b: (b, 0, 0))
    lat, logits_pad = pl.pallas_call(
        kernel,
        grid=(n,),
        out_shape=(jax.ShapeDtypeStruct((n, 1, d_lat), jnp.float32),
                   jax.ShapeDtypeStruct((n, 1, _LANE), jnp.float32)),
        in_specs=[x_spec] + [_VSPEC] * 18,
        out_specs=(pl.BlockSpec((pl.Squeezed(), 1, d_lat), lambda b: (b, 0, 0)),
                   pl.BlockSpec((pl.Squeezed(), 1, _LANE), lambda b: (b, 0, 0))),
        scratch_shapes=scratch,
        compiler_params=pltpu.CompilerParams(dimension_semantics=("parallel",)),
    )(x, *conv_args, *sel_args, fc1_w, fc1_b, ln_g, ln_b, fc2_w, fc2_b)
    return lat.reshape(n, d_lat), logits_pad.reshape(n, _LANE)[:, :num_classes]


# ----------------------------------------------------------------------------
# Deterministic parameter construction (shapes from the PyTorch __init__)
# ----------------------------------------------------------------------------
def make_params(key, num_channels=4, num_classes=3, input_size=(16, 16)):
    ks = jax.random.split(key, 8)

    def conv_params(k_rng, kk, cin, cout):
        std = 1.0 / jnp.sqrt(float(kk * kk * cin))
        # HWIO layout; a PyTorch OIHW weight would be transposed (2, 3, 1, 0) first.
        w = jax.random.normal(k_rng, (kk, kk, cin, cout), jnp.float32) * std
        b = jnp.zeros((cout,), jnp.float32)
        return {"w": w, "b": b,
                "bn_gamma": jnp.ones((cout,), jnp.float32),
                "bn_beta": jnp.zeros((cout,), jnp.float32),
                "bn_mean": jnp.zeros((cout,), jnp.float32),
                "bn_var": jnp.ones((cout,), jnp.float32)}

    params = {
        "b1": conv_params(ks[0], 5, num_channels, 8),
        "b2": conv_params(ks[1], 3, 8, 16),
        "b3": conv_params(ks[2], 3, 16, 32),
    }
    h, w = input_size
    flattened = 32 * (h // 8) * (w // 8)                 # three 2x2 pools
    # fc1 rows are stored in HWC order (the NCHW .view(N,-1) permutation is folded in).
    # From a PyTorch checkpoint: w_hwc[(hh*Wo+ww)*C + c, :] = fc1.weight[:, c*Ho*Wo + hh*Wo + ww].
    params["fc1_w"] = jax.random.normal(ks[3], (flattened, 256), jnp.float32) * 0.005
    params["fc1_b"] = jnp.zeros((256,), jnp.float32)
    params["ln_g"] = jnp.ones((256,), jnp.float32)
    params["ln_b"] = jnp.zeros((256,), jnp.float32)
    params["fc2_w"] = jax.random.normal(ks[4], (256, num_classes), jnp.float32) * 0.01
    params["fc2_b"] = jnp.zeros((num_classes,), jnp.float32)
    return params


if __name__ == "__main__":
    key = jax.random.PRNGKey(0)
    k_x, k_p = jax.random.split(key)

    num_channels, num_classes, input_size, batch = 4, 3, (16, 16), 2
    x = jax.random.normal(k_x, (batch, num_channels) + input_size, jnp.float32)
    params = make_params(k_p, num_channels, num_classes, input_size)

    fwd = jax.jit(cnn_forward)
    latent, logits = jax.block_until_ready(fwd(x, params))

    assert latent.shape == (batch, 256), latent.shape
    assert logits.shape == (batch, num_classes), logits.shape
    assert bool(jnp.all(jnp.isfinite(latent))) and bool(jnp.all(jnp.isfinite(logits)))
    print("KERNEL_OK")
</pallas_src>

<mosaic_0001>
module attributes {stable_mosaic.version = 11 : i64} {
  func.func @kernel(%arg0: i32, %arg1: memref<1x20x80xf32, #tpu.memory_space<vmem>>, %arg2: memref<5x80x128xbf16, #tpu.memory_space<vmem>>, %arg3: memref<1x128xf32, #tpu.memory_space<vmem>>, %arg4: memref<3x80x128xbf16, #tpu.memory_space<vmem>>, %arg5: memref<1x128xf32, #tpu.memory_space<vmem>>, %arg6: memref<3x96x128xbf16, #tpu.memory_space<vmem>>, %arg7: memref<1x128xf32, #tpu.memory_space<vmem>>, %arg8: memref<128x80xbf16, #tpu.memory_space<vmem>>, %arg9: memref<128x80xbf16, #tpu.memory_space<vmem>>, %arg10: memref<128x96xbf16, #tpu.memory_space<vmem>>, %arg11: memref<128x96xbf16, #tpu.memory_space<vmem>>, %arg12: memref<128x64xbf16, #tpu.memory_space<vmem>>, %arg13: memref<128x64xbf16, #tpu.memory_space<vmem>>, %arg14: memref<128x256xbf16, #tpu.memory_space<vmem>>, %arg15: memref<1x256xf32, #tpu.memory_space<vmem>>, %arg16: memref<1x256xf32, #tpu.memory_space<vmem>>, %arg17: memref<1x256xf32, #tpu.memory_space<vmem>>, %arg18: memref<256x128xbf16, #tpu.memory_space<vmem>>, %arg19: memref<1x128xf32, #tpu.memory_space<vmem>>, %arg20: memref<1x1x256xf32, #tpu.memory_space<vmem>>, %arg21: memref<1x1x128xf32, #tpu.memory_space<vmem>>, %arg22: memref<16x128xf32, #tpu.memory_space<vmem>>, %arg23: memref<10x80xf32, #tpu.memory_space<vmem>>, %arg24: memref<6x96xf32, #tpu.memory_space<vmem>>) attributes {dimension_semantics = [#tpu.dimension_semantics<parallel>], iteration_bounds = array<i64: 2>, scalar_prefetch = 0 : i64, scratch_operands = 3 : i64, tpu.core_type = #tpu.core_type<tc>, window_params = [{transform_indices = @transform_0, window_bounds = array<i64: 1, 20, 80>}, {pipeline_mode = #tpu.pipeline_mode<synchronous>, transform_indices = @transform_1, window_bounds = array<i64: 5, 80, 128>}, {pipeline_mode = #tpu.pipeline_mode<synchronous>, transform_indices = @transform_2, window_bounds = array<i64: 1, 128>}, {pipeline_mode = #tpu.pipeline_mode<synchronous>, transform_indices = @transform_3, window_bounds = array<i64: 3, 80, 128>}, {pipeline_mode = #tpu.pipeline_mode<synchronous>, transform_indices = @transform_4, window_bounds = array<i64: 1, 128>}, {pipeline_mode = #tpu.pipeline_mode<synchronous>, transform_indices = @transform_5, window_bounds = array<i64: 3, 96, 128>}, {pipeline_mode = #tpu.pipeline_mode<synchronous>, transform_indices = @transform_6, window_bounds = array<i64: 1, 128>}, {pipeline_mode = #tpu.pipeline_mode<synchronous>, transform_indices = @transform_7, window_bounds = array<i64: 128, 80>}, {pipeline_mode = #tpu.pipeline_mode<synchronous>, transform_indices = @transform_8, window_bounds = array<i64: 128, 80>}, {pipeline_mode = #tpu.pipeline_mode<synchronous>, transform_indices = @transform_9, window_bounds = array<i64: 128, 96>}, {pipeline_mode = #tpu.pipeline_mode<synchronous>, transform_indices = @transform_10, window_bounds = array<i64: 128, 96>}, {pipeline_mode = #tpu.pipeline_mode<synchronous>, transform_indices = @transform_11, window_bounds = array<i64: 128, 64>}, {pipeline_mode = #tpu.pipeline_mode<synchronous>, transform_indices = @transform_12, window_bounds = array<i64: 128, 64>}, {pipeline_mode = #tpu.pipeline_mode<synchronous>, transform_indices = @transform_13, window_bounds = array<i64: 128, 256>}, {pipeline_mode = #tpu.pipeline_mode<synchronous>, transform_indices = @transform_14, window_bounds = array<i64: 1, 256>}, {pipeline_mode = #tpu.pipeline_mode<synchronous>, transform_indices = @transform_15, window_bounds = array<i64: 1, 256>}, {pipeline_mode = #tpu.pipeline_mode<synchronous>, transform_indices = @transform_16, window_bounds = array<i64: 1, 256>}, {pipeline_mode = #tpu.pipeline_mode<synchronous>, transform_indices = @transform_17, window_bounds = array<i64: 256, 128>}, {pipeline_mode = #tpu.pipeline_mode<synchronous>, transform_indices = @transform_18, window_bounds = array<i64: 1, 128>}, {transform_indices = @transform_19, window_bounds = array<i64: 1, 1, 256>}, {transform_indices = @transform_20, window_bounds = array<i64: 1, 1, 128>}]} {
    %c0 = arith.constant 0 : index
    %c0_0 = arith.constant 0 : index
    %c0_1 = arith.constant 0 : index
    %0 = vector.load %arg1[%c0, %c0_0, %c0_1] : memref<1x20x80xf32, #tpu.memory_space<vmem>>, vector<1x16x80xf32>
    %1 = vector.shape_cast %0 : vector<1x16x80xf32> to vector<16x80xf32>
    %2 = arith.truncf %1 : vector<16x80xf32> to vector<16x80xbf16>
    %c0_2 = arith.constant 0 : index
    %c1 = arith.constant 1 : index
    %c0_3 = arith.constant 0 : index
    %3 = vector.load %arg1[%c0_2, %c1, %c0_3] : memref<1x20x80xf32, #tpu.memory_space<vmem>>, vector<1x16x80xf32>
    %4 = vector.shape_cast %3 : vector<1x16x80xf32> to vector<16x80xf32>
    %5 = arith.truncf %4 : vector<16x80xf32> to vector<16x80xbf16>
    %c0_4 = arith.constant 0 : index
    %c2 = arith.constant 2 : index
    %c0_5 = arith.constant 0 : index
    %6 = vector.load %arg1[%c0_4, %c2, %c0_5] : memref<1x20x80xf32, #tpu.memory_space<vmem>>, vector<1x16x80xf32>
    %7 = vector.shape_cast %6 : vector<1x16x80xf32> to vector<16x80xf32>
    %8 = arith.truncf %7 : vector<16x80xf32> to vector<16x80xbf16>
    %c0_6 = arith.constant 0 : index
    %c3 = arith.constant 3 : index
    %c0_7 = arith.constant 0 : index
    %9 = vector.load %arg1[%c0_6, %c3, %c0_7] : memref<1x20x80xf32, #tpu.memory_space<vmem>>, vector<1x16x80xf32>
    %10 = vector.shape_cast %9 : vector<1x16x80xf32> to vector<16x80xf32>
    %11 = arith.truncf %10 : vector<16x80xf32> to vector<16x80xbf16>
    %c0_8 = arith.constant 0 : index
    %c4 = arith.constant 4 : index
    %c0_9 = arith.constant 0 : index
    %12 = vector.load %arg1[%c0_8, %c4, %c0_9] : memref<1x20x80xf32, #tpu.memory_space<vmem>>, vector<1x16x80xf32>
    %13 = vector.shape_cast %12 : vector<1x16x80xf32> to vector<16x80xf32>
    %14 = arith.truncf %13 : vector<16x80xf32> to vector<16x80xbf16>
    %c0_10 = arith.constant 0 : index
    %c0_11 = arith.constant 0 : index
    %c0_12 = arith.constant 0 : index
    %15 = vector.load %arg2[%c0_10, %c0_11, %c0_12] : memref<5x80x128xbf16, #tpu.memory_space<vmem>>, vector<1x80x128xbf16>
    %16 = vector.shape_cast %15 : vector<1x80x128xbf16> to vector<80x128xbf16>
    %cst = arith.constant dense<0.000000e+00> : vector<16x128xf32>
    %17 = tpu.matmul %2, %16, %cst {dimension_numbers = #tpu.dot_dimension_numbers<[1], [0], [0], [1], [0, 0, 1, 1], [], []>} : vector<16x80xbf16>, vector<80x128xbf16>, vector<16x128xf32> -> vector<16x128xf32>
    %c1_13 = arith.constant 1 : index
    %c0_14 = arith.constant 0 : index
    %c0_15 = arith.constant 0 : index
    %18 = vector.load %arg2[%c1_13, %c0_14, %c0_15] : memref<5x80x128xbf16, #tpu.memory_space<vmem>>, vector<1x80x128xbf16>
    %19 = vector.shape_cast %18 : vector<1x80x128xbf16> to vector<80x128xbf16>
    %cst_16 = arith.constant dense<0.000000e+00> : vector<16x128xf32>
    %20 = tpu.matmul %5, %19, %cst_16 {dimension_numbers = #tpu.dot_dimension_numbers<[1], [0], [0], [1], [0, 0, 1, 1], [], []>} : vector<16x80xbf16>, vector<80x128xbf16>, vector<16x128xf32> -> vector<16x128xf32>
    %21 = arith.addf %17, %20 : vector<16x128xf32>
    %c2_17 = arith.constant 2 : index
    %c0_18 = arith.constant 0 : index
    %c0_19 = arith.constant 0 : index
    %22 = vector.load %arg2[%c2_17, %c0_18, %c0_19] : memref<5x80x128xbf16, #tpu.memory_space<vmem>>, vector<1x80x128xbf16>
    %23 = vector.shape_cast %22 : vector<1x80x128xbf16> to vector<80x128xbf16>
    %cst_20 = arith.constant dense<0.000000e+00> : vector<16x128xf32>
    %24 = tpu.matmul %8, %23, %cst_20 {dimension_numbers = #tpu.dot_dimension_numbers<[1], [0], [0], [1], [0, 0, 1, 1], [], []>} : vector<16x80xbf16>, vector<80x128xbf16>, vector<16x128xf32> -> vector<16x128xf32>
    %25 = arith.addf %21, %24 : vector<16x128xf32>
    %c3_21 = arith.constant 3 : index
    %c0_22 = arith.constant 0 : index
    %c0_23 = arith.constant 0 : index
    %26 = vector.load %arg2[%c3_21, %c0_22, %c0_23] : memref<5x80x128xbf16, #tpu.memory_space<vmem>>, vector<1x80x128xbf16>
    %27 = vector.shape_cast %26 : vector<1x80x128xbf16> to vector<80x128xbf16>
    %cst_24 = arith.constant dense<0.000000e+00> : vector<16x128xf32>
    %28 = tpu.matmul %11, %27, %cst_24 {dimension_numbers = #tpu.dot_dimension_numbers<[1], [0], [0], [1], [0, 0, 1, 1], [], []>} : vector<16x80xbf16>, vector<80x128xbf16>, vector<16x128xf32> -> vector<16x128xf32>
    %29 = arith.addf %25, %28 : vector<16x128xf32>
    %c4_25 = arith.constant 4 : index
    %c0_26 = arith.constant 0 : index
    %c0_27 = arith.constant 0 : index
    %30 = vector.load %arg2[%c4_25, %c0_26, %c0_27] : memref<5x80x128xbf16, #tpu.memory_space<vmem>>, vector<1x80x128xbf16>
    %31 = vector.shape_cast %30 : vector<1x80x128xbf16> to vector<80x128xbf16>
    %cst_28 = arith.constant dense<0.000000e+00> : vector<16x128xf32>
    %32 = tpu.matmul %14, %31, %cst_28 {dimension_numbers = #tpu.dot_dimension_numbers<[1], [0], [0], [1], [0, 0, 1, 1], [], []>} : vector<16x80xbf16>, vector<80x128xbf16>, vector<16x128xf32> -> vector<16x128xf32>
    %33 = arith.addf %29, %32 : vector<16x128xf32>
    %c0_29 = arith.constant 0 : index
    %c0_30 = arith.constant 0 : index
    %34 = vector.load %arg3[%c0_29, %c0_30] : memref<1x128xf32, #tpu.memory_space<vmem>>, vector<1x128xf32>
    %35 = vector.broadcast %34 : vector<1x128xf32> to vector<16x128xf32>
    %36 = arith.addf %33, %35 : vector<16x128xf32>
    %cst_31 = arith.constant 0.000000e+00 : f32
    %37 = vector.broadcast %cst_31 : f32 to vector<16x128xf32>
    %38 = arith.maximumf %36, %37 : vector<16x128xf32>
    %c0_32 = arith.constant 0 : index
    %c0_33 = arith.constant 0 : index
    %39 = vector.load %arg22[%c0_32, %c0_33] : memref<16x128xf32, #tpu.memory_space<vmem>>, vector<16x128xf32>
    tpu.vector_store %arg22[%c0_32, %c0_33], %38 {strides = array<i32>} : memref<16x128xf32, #tpu.memory_space<vmem>>, vector<16x128xf32>,
    %c0_34 = arith.constant 0 : index
    %c0_35 = arith.constant 0 : index
    %40 = tpu.strided_load %arg22[%c0_34, %c0_35] {strides = array<i32: 2, 1>} : memref<16x128xf32, #tpu.memory_space<vmem>>, vector<8x128xf32>
    %c1_36 = arith.constant 1 : index
    %c0_37 = arith.constant 0 : index
    %41 = tpu.strided_load %arg22[%c1_36, %c0_37] {strides = array<i32: 2, 1>} : memref<16x128xf32, #tpu.memory_space<vmem>>, vector<8x128xf32>
    %42 = arith.maximumf %40, %41 : vector<8x128xf32>
    %43 = arith.truncf %42 : vector<8x128xf32> to vector<8x128xbf16>
    %c0_38 = arith.constant 0 : index
    %c0_39 = arith.constant 0 : index
    %44 = vector.load %arg8[%c0_38, %c0_39] : memref<128x80xbf16, #tpu.memory_space<vmem>>, vector<128x80xbf16>
    %cst_40 = arith.constant dense<0.000000e+00> : vector<8x80xf32>
    %45 = tpu.matmul %43, %44, %cst_40 {dimension_numbers = #tpu.dot_dimension_numbers<[1], [0], [0], [1], [0, 0, 1, 1], [], []>} : vector<8x128xbf16>, vector<128x80xbf16>, vector<8x80xf32> -> vector<8x80xf32>
    %c0_41 = arith.constant 0 : index
    %c0_42 = arith.constant 0 : index
    %46 = vector.load %arg9[%c0_41, %c0_42] : memref<128x80xbf16, #tpu.memory_space<vmem>>, vector<128x80xbf16>
    %cst_43 = arith.constant dense<0.000000e+00> : vector<8x80xf32>
    %47 = tpu.matmul %43, %46, %cst_43 {dimension_numbers = #tpu.dot_dimension_numbers<[1], [0], [0], [1], [0, 0, 1, 1], [], []>} : vector<8x128xbf16>, vector<128x80xbf16>, vector<8x80xf32> -> vector<8x80xf32>
    %48 = arith.maximumf %45, %47 : vector<8x80xf32>
    %cst_44 = arith.constant 0.000000e+00 : f32
    %49 = vector.broadcast %cst_44 : f32 to vector<10x80xf32>
    %c0_45 = arith.constant 0 : index
    %c0_46 = arith.constant 0 : index
    %50 = vector.load %arg23[%c0_45, %c0_46] : memref<10x80xf32, #tpu.memory_space<vmem>>, vector<10x80xf32>
    tpu.vector_store %arg23[%c0_45, %c0_46], %49 {strides = array<i32>} : memref<10x80xf32, #tpu.memory_space<vmem>>, vector<10x80xf32>,
    %c1_47 = arith.constant 1 : index
    %c0_48 = arith.constant 0 : index
    %51 = vector.load %arg23[%c1_47, %c0_48] : memref<10x80xf32, #tpu.memory_space<vmem>>, vector<8x80xf32>
    tpu.vector_store %arg23[%c1_47, %c0_48], %48 {strides = array<i32>} : memref<10x80xf32, #tpu.memory_space<vmem>>, vector<8x80xf32>,
    %c0_49 = arith.constant 0 : index
    %c0_50 = arith.constant 0 : index
    %52 = vector.load %arg23[%c0_49, %c0_50] : memref<10x80xf32, #tpu.memory_space<vmem>>, vector<8x80xf32>
    %53 = arith.truncf %52 : vector<8x80xf32> to vector<8x80xbf16>
    %c1_51 = arith.constant 1 : index
    %c0_52 = arith.constant 0 : index
    %54 = vector.load %arg23[%c1_51, %c0_52] : memref<10x80xf32, #tpu.memory_space<vmem>>, vector<8x80xf32>
    %55 = arith.truncf %54 : vector<8x80xf32> to vector<8x80xbf16>
    %c2_53 = arith.constant 2 : index
    %c0_54 = arith.constant 0 : index
    %56 = vector.load %arg23[%c2_53, %c0_54] : memref<10x80xf32, #tpu.memory_space<vmem>>, vector<8x80xf32>
    %57 = arith.truncf %56 : vector<8x80xf32> to vector<8x80xbf16>
    %c0_55 = arith.constant 0 : index
    %c0_56 = arith.constant 0 : index
    %c0_57 = arith.constant 0 : index
    %58 = vector.load %arg4[%c0_55, %c0_56, %c0_57] : memref<3x80x128xbf16, #tpu.memory_space<vmem>>, vector<1x80x128xbf16>
    %59 = vector.shape_cast %58 : vector<1x80x128xbf16> to vector<80x128xbf16>
    %cst_58 = arith.constant dense<0.000000e+00> : vector<8x128xf32>
    %60 = tpu.matmul %53, %59, %cst_58 {dimension_numbers = #tpu.dot_dimension_numbers<[1], [0], [0], [1], [0, 0, 1, 1], [], []>} : vector<8x80xbf16>, vector<80x128xbf16>, vector<8x128xf32> -> vector<8x128xf32>
    %c1_59 = arith.constant 1 : index
    %c0_60 = arith.constant 0 : index
    %c0_61 = arith.constant 0 : index
    %61 = vector.load %arg4[%c1_59, %c0_60, %c0_61] : memref<3x80x128xbf16, #tpu.memory_space<vmem>>, vector<1x80x128xbf16>
    %62 = vector.shape_cast %61 : vector<1x80x128xbf16> to vector<80x128xbf16>
    %cst_62 = arith.constant dense<0.000000e+00> : vector<8x128xf32>
    %63 = tpu.matmul %55, %62, %cst_62 {dimension_numbers = #tpu.dot_dimension_numbers<[1], [0], [0], [1], [0, 0, 1, 1], [], []>} : vector<8x80xbf16>, vector<80x128xbf16>, vector<8x128xf32> -> vector<8x128xf32>
    %64 = arith.addf %60, %63 : vector<8x128xf32>
    %c2_63 = arith.constant 2 : index
    %c0_64 = arith.constant 0 : index
    %c0_65 = arith.constant 0 : index
    %65 = vector.load %arg4[%c2_63, %c0_64, %c0_65] : memref<3x80x128xbf16, #tpu.memory_space<vmem>>, vector<1x80x128xbf16>
    %66 = vector.shape_cast %65 : vector<1x80x128xbf16> to vector<80x128xbf16>
    %cst_66 = arith.constant dense<0.000000e+00> : vector<8x128xf32>
    %67 = tpu.matmul %57, %66, %cst_66 {dimension_numbers = #tpu.dot_dimension_numbers<[1], [0], [0], [1], [0, 0, 1, 1], [], []>} : vector<8x80xbf16>, vector<80x128xbf16>, vector<8x128xf32> -> vector<8x128xf32>
    %68 = arith.addf %64, %67 : vector<8x128xf32>
    %c0_67 = arith.constant 0 : index
    %c0_68 = arith.constant 0 : index
    %69 = vector.load %arg5[%c0_67, %c0_68] : memref<1x128xf32, #tpu.memory_space<vmem>>, vector<1x128xf32>
    %70 = vector.broadcast %69 : vector<1x128xf32> to vector<8x128xf32>
    %71 = arith.addf %68, %70 : vector<8x128xf32>
    %cst_69 = arith.constant 0.000000e+00 : f32
    %72 = vector.broadcast %cst_69 : f32 to vector<8x128xf32>
    %73 = arith.maximumf %71, %72 : vector<8x128xf32>
    %c0_70 = arith.constant 0 : index
    %c0_71 = arith.constant 0 : index
    %74 = vector.load %arg22[%c0_70, %c0_71] : memref<16x128xf32, #tpu.memory_space<vmem>>, vector<8x128xf32>
    tpu.vector_store %arg22[%c0_70, %c0_71], %73 {strides = array<i32>} : memref<16x128xf32, #tpu.memory_space<vmem>>, vector<8x128xf32>,
    %c0_72 = arith.constant 0 : index
    %c0_73 = arith.constant 0 : index
    %75 = tpu.strided_load %arg22[%c0_72, %c0_73] {strides = array<i32: 2, 1>} : memref<16x128xf32, #tpu.memory_space<vmem>>, vector<4x128xf32>
    %c1_74 = arith.constant 1 : index
    %c0_75 = arith.constant 0 : index
    %76 = tpu.strided_load %arg22[%c1_74, %c0_75] {strides = array<i32: 2, 1>} : memref<16x128xf32, #tpu.memory_space<vmem>>, vector<4x128xf32>
    %77 = arith.maximumf %75, %76 : vector<4x128xf32>
    %78 = arith.truncf %77 : vector<4x128xf32> to vector<4x128xbf16>
    %c0_76 = arith.constant 0 : index
    %c0_77 = arith.constant 0 : index
    %79 = vector.load %arg10[%c0_76, %c0_77] : memref<128x96xbf16, #tpu.memory_space<vmem>>, vector<128x96xbf16>
    %cst_78 = arith.constant dense<0.000000e+00> : vector<4x96xf32>
    %80 = tpu.matmul %78, %79, %cst_78 {dimension_numbers = #tpu.dot_dimension_numbers<[1], [0], [0], [1], [0, 0, 1, 1], [], []>} : vector<4x128xbf16>, vector<128x96xbf16>, vector<4x96xf32> -> vector<4x96xf32>
    %c0_79 = arith.constant 0 : index
    %c0_80 = arith.constant 0 : index
    %81 = vector.load %arg11[%c0_79, %c0_80] : memref<128x96xbf16, #tpu.memory_space<vmem>>, vector<128x96xbf16>
    %cst_81 = arith.constant dense<0.000000e+00> : vector<4x96xf32>
    %82 = tpu.matmul %78, %81, %cst_81 {dimension_numbers = #tpu.dot_dimension_numbers<[1], [0], [0], [1], [0, 0, 1, 1], [], []>} : vector<4x128xbf16>, vector<128x96xbf16>, vector<4x96xf32> -> vector<4x96xf32>
    %83 = arith.maximumf %80, %82 : vector<4x96xf32>
    %cst_82 = arith.constant 0.000000e+00 : f32
    %84 = vector.broadcast %cst_82 : f32 to vector<6x96xf32>
    %c0_83 = arith.constant 0 : index
    %c0_84 = arith.constant 0 : index
    %85 = vector.load %arg24[%c0_83, %c0_84] : memref<6x96xf32, #tpu.memory_space<vmem>>, vector<6x96xf32>
    tpu.vector_store %arg24[%c0_83, %c0_84], %84 {strides = array<i32>} : memref<6x96xf32, #tpu.memory_space<vmem>>, vector<6x96xf32>,
    %c1_85 = arith.constant 1 : index
    %c0_86 = arith.constant 0 : index
    %86 = vector.load %arg24[%c1_85, %c0_86] : memref<6x96xf32, #tpu.memory_space<vmem>>, vector<4x96xf32>
    tpu.vector_store %arg24[%c1_85, %c0_86], %83 {strides = array<i32>} : memref<6x96xf32, #tpu.memory_space<vmem>>, vector<4x96xf32>,
    %c0_87 = arith.constant 0 : index
    %c0_88 = arith.constant 0 : index
    %87 = vector.load %arg24[%c0_87, %c0_88] : memref<6x96xf32, #tpu.memory_space<vmem>>, vector<4x96xf32>
    %88 = arith.truncf %87 : vector<4x96xf32> to vector<4x96xbf16>
    %c1_89 = arith.constant 1 : index
    %c0_90 = arith.constant 0 : index
    %89 = vector.load %arg24[%c1_89, %c0_90] : memref<6x96xf32, #tpu.memory_space<vmem>>, vector<4x96xf32>
    %90 = arith.truncf %89 : vector<4x96xf32> to vector<4x96xbf16>
    %c2_91 = arith.constant 2 : index
    %c0_92 = arith.constant 0 : index
    %91 = vector.load %arg24[%c2_91, %c0_92] : memref<6x96xf32, #tpu.memory_space<vmem>>, vector<4x96xf32>
    %92 = arith.truncf %91 : vector<4x96xf32> to vector<4x96xbf16>
    %c0_93 = arith.constant 0 : index
    %c0_94 = arith.constant 0 : index
    %c0_95 = arith.constant 0 : index
    %93 = vector.load %arg6[%c0_93, %c0_94, %c0_95] : memref<3x96x128xbf16, #tpu.memory_space<vmem>>, vector<1x96x128xbf16>
    %94 = vector.shape_cast %93 : vector<1x96x128xbf16> to vector<96x128xbf16>
    %cst_96 = arith.constant dense<0.000000e+00> : vector<4x128xf32>
    %95 = tpu.matmul %88, %94, %cst_96 {dimension_numbers = #tpu.dot_dimension_numbers<[1], [0], [0], [1], [0, 0, 1, 1], [], []>} : vector<4x96xbf16>, vector<96x128xbf16>, vector<4x128xf32> -> vector<4x128xf32>
    %c1_97 = arith.constant 1 : index
    %c0_98 = arith.constant 0 : index
    %c0_99 = arith.constant 0 : index
    %96 = vector.load %arg6[%c1_97, %c0_98, %c0_99] : memref<3x96x128xbf16, #tpu.memory_space<vmem>>, vector<1x96x128xbf16>
    %97 = vector.shape_cast %96 : vector<1x96x128xbf16> to vector<96x128xbf16>
    %cst_100 = arith.constant dense<0.000000e+00> : vector<4x128xf32>
    %98 = tpu.matmul %90, %97, %cst_100 {dimension_numbers = #tpu.dot_dimension_numbers<[1], [0], [0], [1], [0, 0, 1, 1], [], []>} : vector<4x96xbf16>, vector<96x128xbf16>, vector<4x128xf32> -> vector<4x128xf32>
    %99 = arith.addf %95, %98 : vector<4x128xf32>
    %c2_101 = arith.constant 2 : index
    %c0_102 = arith.constant 0 : index
    %c0_103 = arith.constant 0 : index
    %100 = vector.load %arg6[%c2_101, %c0_102, %c0_103] : memref<3x96x128xbf16, #tpu.memory_space<vmem>>, vector<1x96x128xbf16>
    %101 = vector.shape_cast %100 : vector<1x96x128xbf16> to vector<96x128xbf16>
    %cst_104 = arith.constant dense<0.000000e+00> : vector<4x128xf32>
    %102 = tpu.matmul %92, %101, %cst_104 {dimension_numbers = #tpu.dot_dimension_numbers<[1], [0], [0], [1], [0, 0, 1, 1], [], []>} : vector<4x96xbf16>, vector<96x128xbf16>, vector<4x128xf32> -> vector<4x128xf32>
    %103 = arith.addf %99, %102 : vector<4x128xf32>
    %c0_105 = arith.constant 0 : index
    %c0_106 = arith.constant 0 : index
    %104 = vector.load %arg7[%c0_105, %c0_106] : memref<1x128xf32, #tpu.memory_space<vmem>>, vector<1x128xf32>
    %105 = vector.broadcast %104 : vector<1x128xf32> to vector<4x128xf32>
    %106 = arith.addf %103, %105 : vector<4x128xf32>
    %cst_107 = arith.constant 0.000000e+00 : f32
    %107 = vector.broadcast %cst_107 : f32 to vector<4x128xf32>
    %108 = arith.maximumf %106, %107 : vector<4x128xf32>
    %c0_108 = arith.constant 0 : index
    %c0_109 = arith.constant 0 : index
    %109 = vector.load %arg22[%c0_108, %c0_109] : memref<16x128xf32, #tpu.memory_space<vmem>>, vector<4x128xf32>
    tpu.vector_store %arg22[%c0_108, %c0_109], %108 {strides = array<i32>} : memref<16x128xf32, #tpu.memory_space<vmem>>, vector<4x128xf32>,
    %c0_110 = arith.constant 0 : index
    %c0_111 = arith.constant 0 : index
    %110 = tpu.strided_load %arg22[%c0_110, %c0_111] {strides = array<i32: 2, 1>} : memref<16x128xf32, #tpu.memory_space<vmem>>, vector<2x128xf32>
    %c1_112 = arith.constant 1 : index
    %c0_113 = arith.constant 0 : index
    %111 = tpu.strided_load %arg22[%c1_112, %c0_113] {strides = array<i32: 2, 1>} : memref<16x128xf32, #tpu.memory_space<vmem>>, vector<2x128xf32>
    %112 = arith.maximumf %110, %111 : vector<2x128xf32>
    %113 = arith.truncf %112 : vector<2x128xf32> to vector<2x128xbf16>
    %c0_114 = arith.constant 0 : index
    %c0_115 = arith.constant 0 : index
    %114 = vector.load %arg12[%c0_114, %c0_115] : memref<128x64xbf16, #tpu.memory_space<vmem>>, vector<128x64xbf16>
    %cst_116 = arith.constant dense<0.000000e+00> : vector<2x64xf32>
    %115 = tpu.matmul %113, %114, %cst_116 {dimension_numbers = #tpu.dot_dimension_numbers<[1], [0], [0], [1], [0, 0, 1, 1], [], []>} : vector<2x128xbf16>, vector<128x64xbf16>, vector<2x64xf32> -> vector<2x64xf32>
    %c0_117 = arith.constant 0 : index
    %c0_118 = arith.constant 0 : index
    %116 = vector.load %arg13[%c0_117, %c0_118] : memref<128x64xbf16, #tpu.memory_space<vmem>>, vector<128x64xbf16>
    %cst_119 = arith.constant dense<0.000000e+00> : vector<2x64xf32>
    %117 = tpu.matmul %113, %116, %cst_119 {dimension_numbers = #tpu.dot_dimension_numbers<[1], [0], [0], [1], [0, 0, 1, 1], [], []>} : vector<2x128xbf16>, vector<128x64xbf16>, vector<2x64xf32> -> vector<2x64xf32>
    %118 = arith.maximumf %115, %117 : vector<2x64xf32>
    %c0_120 = arith.constant 0 : index
    %c0_121 = arith.constant 0 : index
    %119 = vector.load %arg15[%c0_120, %c0_121] : memref<1x256xf32, #tpu.memory_space<vmem>>, vector<1x256xf32>
    %120 = vector.extract_strided_slice %118 {offsets = [0, 0], sizes = [1, 64], strides = [1, 1]} : vector<2x64xf32> to vector<1x64xf32>
    %121 = arith.truncf %120 : vector<1x64xf32> to vector<1x64xbf16>
    %c0_122 = arith.constant 0 : index
    %c0_123 = arith.constant 0 : index
    %122 = vector.load %arg14[%c0_122, %c0_123] : memref<128x256xbf16, #tpu.memory_space<vmem>>, vector<64x256xbf16>
    %cst_124 = arith.constant dense<0.000000e+00> : vector<1x256xf32>
    %123 = tpu.matmul %121, %122, %cst_124 {dimension_numbers = #tpu.dot_dimension_numbers<[1], [0], [0], [1], [0, 0, 1, 1], [], []>} : vector<1x64xbf16>, vector<64x256xbf16>, vector<1x256xf32> -> vector<1x256xf32>
    %124 = arith.addf %119, %123 : vector<1x256xf32>
    %125 = vector.extract_strided_slice %118 {offsets = [1, 0], sizes = [1, 64], strides = [1, 1]} : vector<2x64xf32> to vector<1x64xf32>
    %126 = arith.truncf %125 : vector<1x64xf32> to vector<1x64xbf16>
    %c64 = arith.constant 64 : index
    %c0_125 = arith.constant 0 : index
    %127 = vector.load %arg14[%c64, %c0_125] : memref<128x256xbf16, #tpu.memory_space<vmem>>, vector<64x256xbf16>
    %cst_126 = arith.constant dense<0.000000e+00> : vector<1x256xf32>
    %128 = tpu.matmul %126, %127, %cst_126 {dimension_numbers = #tpu.dot_dimension_numbers<[1], [0], [0], [1], [0, 0, 1, 1], [], []>} : vector<1x64xbf16>, vector<64x256xbf16>, vector<1x256xf32> -> vector<1x256xf32>
    %129 = arith.addf %124, %128 : vector<1x256xf32>
    %cst_127 = arith.constant dense<0.000000e+00> : vector<1xf32>
    %130 = vector.multi_reduction <add>, %129, %cst_127 [1] : vector<1x256xf32> to vector<1xf32>
    %131 = vector.shape_cast %130 : vector<1xf32> to vector<1x1xf32>
    %cst_128 = arith.constant 2.560000e+02 : f32
    %132 = vector.broadcast %cst_128 : f32 to vector<1x1xf32>
    %133 = arith.divf %131, %132 : vector<1x1xf32>
    %134 = vector.broadcast %133 : vector<1x1xf32> to vector<1x256xf32>
    %135 = arith.subf %129, %134 : vector<1x256xf32>
    %136 = arith.mulf %135, %135 : vector<1x256xf32>
    %cst_129 = arith.constant dense<0.000000e+00> : vector<1xf32>
    %137 = vector.multi_reduction <add>, %136, %cst_129 [1] : vector<1x256xf32> to vector<1xf32>
    %138 = vector.shape_cast %137 : vector<1xf32> to vector<1x1xf32>
    %cst_130 = arith.constant 2.560000e+02 : f32
    %139 = vector.broadcast %cst_130 : f32 to vector<1x1xf32>
    %140 = arith.divf %138, %139 : vector<1x1xf32>
    %cst_131 = arith.constant 9.99999974E-6 : f32
    %141 = vector.broadcast %cst_131 : f32 to vector<1x1xf32>
    %142 = arith.addf %140, %141 : vector<1x1xf32>
    %143 = math.rsqrt %142 : vector<1x1xf32>
    %144 = vector.broadcast %143 : vector<1x1xf32> to vector<1x256xf32>
    %145 = arith.mulf %135, %144 : vector<1x256xf32>
    %c0_132 = arith.constant 0 : index
    %c0_133 = arith.constant 0 : index
    %146 = vector.load %arg16[%c0_132, %c0_133] : memref<1x256xf32, #tpu.memory_space<vmem>>, vector<1x256xf32>
    %147 = arith.mulf %145, %146 : vector<1x256xf32>
    %c0_134 = arith.constant 0 : index
    %c0_135 = arith.constant 0 : index
    %148 = vector.load %arg17[%c0_134, %c0_135] : memref<1x256xf32, #tpu.memory_space<vmem>>, vector<1x256xf32>
    %149 = arith.addf %147, %148 : vector<1x256xf32>
    %c0_136 = arith.constant 0 : index
    %c0_137 = arith.constant 0 : index
    %c0_138 = arith.constant 0 : index
    %150 = vector.load %arg20[%c0_136, %c0_137, %c0_138] : memref<1x1x256xf32, #tpu.memory_space<vmem>>, vector<1x1x256xf32>
    %151 = vector.shape_cast %150 : vector<1x1x256xf32> to vector<1x256xf32>
    %152 = vector.shape_cast %149 : vector<1x256xf32> to vector<1x1x256xf32>
    tpu.vector_store %arg20[%c0_136, %c0_137, %c0_138], %152 {strides = array<i32>} : memref<1x1x256xf32, #tpu.memory_space<vmem>>, vector<1x1x256xf32>,
    %153 = arith.truncf %149 : vector<1x256xf32> to vector<1x256xbf16>
    %c0_139 = arith.constant 0 : index
    %c0_140 = arith.constant 0 : index
    %154 = vector.load %arg18[%c0_139, %c0_140] : memref<256x128xbf16, #tpu.memory_space<vmem>>, vector<256x128xbf16>
    %cst_141 = arith.constant dense<0.000000e+00> : vector<1x128xf32>
    %155 = tpu.matmul %153, %154, %cst_141 {dimension_numbers = #tpu.dot_dimension_numbers<[1], [0], [0], [1], [0, 0, 1, 1], [], []>} : vector<1x256xbf16>, vector<256x128xbf16>, vector<1x128xf32> -> vector<1x128xf32>
    %c0_142 = arith.constant 0 : index
    %c0_143 = arith.constant 0 : index
    %156 = vector.load %arg19[%c0_142, %c0_143] : memref<1x128xf32, #tpu.memory_space<vmem>>, vector<1x128xf32>
    %157 = arith.addf %155, %156 : vector<1x128xf32>
    %c0_144 = arith.constant 0 : index
    %c0_145 = arith.constant 0 : index
    %c0_146 = arith.constant 0 : index
    %158 = vector.load %arg21[%c0_144, %c0_145, %c0_146] : memref<1x1x128xf32, #tpu.memory_space<vmem>>, vector<1x1x128xf32>
    %159 = vector.shape_cast %158 : vector<1x1x128xf32> to vector<1x128xf32>
    %160 = vector.shape_cast %157 : vector<1x128xf32> to vector<1x1x128xf32>
    tpu.vector_store %arg21[%c0_144, %c0_145, %c0_146], %160 {strides = array<i32>} : memref<1x1x128xf32, #tpu.memory_space<vmem>>, vector<1x1x128xf32>,
    return
  }
  func.func @transform_0(%arg0: i32) -> (i32, i32, i32) {
    %c0_i32 = arith.constant 0 : i32
    %c0_i32_0 = arith.constant 0 : i32
    %c0_i32_1 = arith.constant 0 : i32
    return %arg0, %c0_i32, %c0_i32_0 : i32, i32, i32
  }
  func.func @transform_1(%arg0: i32) -> (i32, i32, i32) {
    %c0_i32 = arith.constant 0 : i32
    %c0_i32_0 = arith.constant 0 : i32
    %c0_i32_1 = arith.constant 0 : i32
    %c0_i32_2 = arith.constant 0 : i32
    return %c0_i32, %c0_i32_0, %c0_i32_1 : i32, i32, i32
  }
  func.func @transform_2(%arg0: i32) -> (i32, i32) {
    %c0_i32 = arith.constant 0 : i32
    %c0_i32_0 = arith.constant 0 : i32
    %c0_i32_1 = arith.constant 0 : i32
    return %c0_i32, %c0_i32_0 : i32, i32
  }
  func.func @transform_3(%arg0: i32) -> (i32, i32, i32) {
    %c0_i32 = arith.constant 0 : i32
    %c0_i32_0 = arith.constant 0 : i32
    %c0_i32_1 = arith.constant 0 : i32
    %c0_i32_2 = arith.constant 0 : i32
    return %c0_i32, %c0_i32_0, %c0_i32_1 : i32, i32, i32
  }
  func.func @transform_4(%arg0: i32) -> (i32, i32) {
    %c0_i32 = arith.constant 0 : i32
    %c0_i32_0 = arith.constant 0 : i32
    %c0_i32_1 = arith.constant 0 : i32
    return %c0_i32, %c0_i32_0 : i32, i32
  }
  func.func @transform_5(%arg0: i32) -> (i32, i32, i32) {
    %c0_i32 = arith.constant 0 : i32
    %c0_i32_0 = arith.constant 0 : i32
    %c0_i32_1 = arith.constant 0 : i32
    %c0_i32_2 = arith.constant 0 : i32
    return %c0_i32, %c0_i32_0, %c0_i32_1 : i32, i32, i32
  }
  func.func @transform_6(%arg0: i32) -> (i32, i32) {
    %c0_i32 = arith.constant 0 : i32
    %c0_i32_0 = arith.constant 0 : i32
    %c0_i32_1 = arith.constant 0 : i32
    return %c0_i32, %c0_i32_0 : i32, i32
  }
  func.func @transform_7(%arg0: i32) -> (i32, i32) {
    %c0_i32 = arith.constant 0 : i32
    %c0_i32_0 = arith.constant 0 : i32
    %c0_i32_1 = arith.constant 0 : i32
    return %c0_i32, %c0_i32_0 : i32, i32
  }
  func.func @transform_8(%arg0: i32) -> (i32, i32) {
    %c0_i32 = arith.constant 0 : i32
    %c0_i32_0 = arith.constant 0 : i32
    %c0_i32_1 = arith.constant 0 : i32
    return %c0_i32, %c0_i32_0 : i32, i32
  }
  func.func @transform_9(%arg0: i32) -> (i32, i32) {
    %c0_i32 = arith.constant 0 : i32
    %c0_i32_0 = arith.constant 0 : i32
    %c0_i32_1 = arith.constant 0 : i32
    return %c0_i32, %c0_i32_0 : i32, i32
  }
  func.func @transform_10(%arg0: i32) -> (i32, i32) {
    %c0_i32 = arith.constant 0 : i32
    %c0_i32_0 = arith.constant 0 : i32
    %c0_i32_1 = arith.constant 0 : i32
    return %c0_i32, %c0_i32_0 : i32, i32
  }
  func.func @transform_11(%arg0: i32) -> (i32, i32) {
    %c0_i32 = arith.constant 0 : i32
    %c0_i32_0 = arith.constant 0 : i32
    %c0_i32_1 = arith.constant 0 : i32
    return %c0_i32, %c0_i32_0 : i32, i32
  }
  func.func @transform_12(%arg0: i32) -> (i32, i32) {
    %c0_i32 = arith.constant 0 : i32
    %c0_i32_0 = arith.constant 0 : i32
    %c0_i32_1 = arith.constant 0 : i32
    return %c0_i32, %c0_i32_0 : i32, i32
  }
  func.func @transform_13(%arg0: i32) -> (i32, i32) {
    %c0_i32 = arith.constant 0 : i32
    %c0_i32_0 = arith.constant 0 : i32
    %c0_i32_1 = arith.constant 0 : i32
    return %c0_i32, %c0_i32_0 : i32, i32
  }
  func.func @transform_14(%arg0: i32) -> (i32, i32) {
    %c0_i32 = arith.constant 0 : i32
    %c0_i32_0 = arith.constant 0 : i32
    %c0_i32_1 = arith.constant 0 : i32
    return %c0_i32, %c0_i32_0 : i32, i32
  }
  func.func @transform_15(%arg0: i32) -> (i32, i32) {
    %c0_i32 = arith.constant 0 : i32
    %c0_i32_0 = arith.constant 0 : i32
    %c0_i32_1 = arith.constant 0 : i32
    return %c0_i32, %c0_i32_0 : i32, i32
  }
  func.func @transform_16(%arg0: i32) -> (i32, i32) {
    %c0_i32 = arith.constant 0 : i32
    %c0_i32_0 = arith.constant 0 : i32
    %c0_i32_1 = arith.constant 0 : i32
    return %c0_i32, %c0_i32_0 : i32, i32
  }
  func.func @transform_17(%arg0: i32) -> (i32, i32) {
    %c0_i32 = arith.constant 0 : i32
    %c0_i32_0 = arith.constant 0 : i32
    %c0_i32_1 = arith.constant 0 : i32
    return %c0_i32, %c0_i32_0 : i32, i32
  }
  func.func @transform_18(%arg0: i32) -> (i32, i32) {
    %c0_i32 = arith.constant 0 : i32
    %c0_i32_0 = arith.constant 0 : i32
    %c0_i32_1 = arith.constant 0 : i32
    return %c0_i32, %c0_i32_0 : i32, i32
  }
  func.func @transform_19(%arg0: i32) -> (i32, i32, i32) {
    %c0_i32 = arith.constant 0 : i32
    %c0_i32_0 = arith.constant 0 : i32
    %c0_i32_1 = arith.constant 0 : i32
    return %arg0, %c0_i32, %c0_i32_0 : i32, i32, i32
  }
  func.func @transform_20(%arg0: i32) -> (i32, i32, i32) {
    %c0_i32 = arith.constant 0 : i32
    %c0_i32_0 = arith.constant 0 : i32
    %c0_i32_1 = arith.constant 0 : i32
    return %arg0, %c0_i32, %c0_i32_0 : i32, i32, i32
  }
}

</mosaic_0001>

<llo_original>
// kernel: tile.18
$region0: #{tile.18}
  #allocation0 [shape = 's32[1]{0}', space=sflag, size = 0x4, scoped, tag = 'scoped memory for tile.18']
  %s0 = inlined_call_operand.vmem [shape: f32[8], index: 0, kind: input, shape index: {}]
  %s1 = inlined_call_operand.vmem [shape: f32[16,8], index: 1, kind: output, shape index: {}]
  // Predicated region
  $region2: #{tile.18} parent=0 // pred_check
    _
  $region3: #{tile.18} parent=0 // pred_check_branch
    %3 = sbr.rel (0) target = $region5
  $region4: #{tile.18} parent=0 // pred_region
    _
  $region5: #{tile.18} parent=0 // pred_fallthru
    _
  %v4 = vld [vmem:[%s0] ss:$0 sm:$0xff]
  %5 = vst [vmem:[%s1] sm:$0xff] %v4
  %s6 = scalar_lea.vmem %s1, 8
  %7 = vst [vmem:[%s6] sm:$0xff] %v4

// kernel: tile.19
$region0: #{tile.19}
  %s0 = inlined_call_operand.vmem [shape: f32[16,8], index: 0, kind: input, shape index: {}]
  %s1 = inlined_call_operand.vmem [shape: f32[1,128], index: 1, kind: output, shape index: {}]
  $region1: #{tile.19} parent=0
    #allocation0 [shape = 'u8[4096]{0}', space=vmem, size = 0x1000, scoped, tag = 'scoped mem for output reshape']
    %v2 = vld [vmem:[%s0] sm:$0x1]
    %vm3 = vcmask 64512
    %4 = vst.msk [vmem:[#allocation0] sm:$0x1] %vm3, %v2
    %s5 = scalar_lea.vmem %s0, 15
    %v6 = vld [vmem:[%s5] sm:$0x1]
    %7 = vrot.lane.b32.xlu0 %v6, 120
    %v8 = vpop.permute.xlu0 %7
    %vm9 = vcmask 1048512
    %10 = vst.msk [vmem:[#allocation0] sm:$0x1] %vm9, %v8
    %s11 = scalar_lea.vmem %s0, 14
    %v12 = vld [vmem:[%s11] sm:$0x1]
    %13 = vrot.lane.b32.xlu0 %v12, 112
    %v14 = vpop.permute.xlu0 %13
    %vm15 = vcmask 982912
    %16 = vst.msk [vmem:[#allocation0] sm:$0x1] %vm15, %v14
    %s17 = scalar_lea.vmem %s0, 13
    %v18 = vld [vmem:[%s17] sm:$0x1]
    %19 = vrot.lane.b32.xlu0 %v18, 104
    %v20 = vpop.permute.xlu0 %19
    %vm21 = vcmask 917312
    %22 = vst.msk [vmem:[#allocation0] sm:$0x1] %vm21, %v20
    %s23 = scalar_lea.vmem %s0, 12
    %v24 = vld [vmem:[%s23] sm:$0x1]
    %25 = vrot.lane.b32.xlu0 %v24, 96
    %v26 = vpop.permute.xlu0 %25
    %vm27 = vcmask 851712
    %28 = vst.msk [vmem:[#allocation0] sm:$0x1] %vm27, %v26
    %s29 = scalar_lea.vmem %s0, 11
    %v30 = vld [vmem:[%s29] sm:$0x1]
    %31 = vrot.lane.b32.xlu0 %v30, 88
    %v32 = vpop.permute.xlu0 %31
    %vm33 = vcmask 786112
    %34 = vst.msk [vmem:[#allocation0] sm:$0x1] %vm33, %v32
    %s35 = scalar_lea.vmem %s0, 10
    %v36 = vld [vmem:[%s35] sm:$0x1]
    %37 = vrot.lane.b32.xlu0 %v36, 80
    %v38 = vpop.permute.xlu0 %37
    %vm39 = vcmask 720512
    %40 = vst.msk [vmem:[#allocation0] sm:$0x1] %vm39, %v38
    %s41 = scalar_lea.vmem %s0, 9
    %v42 = vld [vmem:[%s41] sm:$0x1]
    %43 = vrot.lane.b32.xlu0 %v42, 72
    %v44 = vpop.permute.xlu0 %43
    %vm45 = vcmask 654912
    %46 = vst.msk [vmem:[#allocation0] sm:$0x1] %vm45, %v44
    %s47 = scalar_lea.vmem %s0, 8
    %v48 = vld [vmem:[%s47] sm:$0x1]
    %49 = vrot.lane.b32.xlu0 %v48, 64
    %v50 = vpop.permute.xlu0 %49
    %vm51 = vcmask 589312
    %52 = vst.msk [vmem:[#allocation0] sm:$0x1] %vm51, %v50
    %s53 = scalar_lea.vmem %s0, 7
    %v54 = vld [vmem:[%s53] sm:$0x1]
    %55 = vrot.lane.b32.xlu0 %v54, 56
    %v56 = vpop.permute.xlu0 %55
    %vm57 = vcmask 523712
    %58 = vst.msk [vmem:[#allocation0] sm:$0x1] %vm57, %v56
    %s59 = scalar_lea.vmem %s0, 6
    %v60 = vld [vmem:[%s59] sm:$0x1]
    %61 = vrot.lane.b32.xlu0 %v60, 48
    %v62 = vpop.permute.xlu0 %61
    %vm63 = vcmask 458112
    %64 = vst.msk [vmem:[#allocation0] sm:$0x1] %vm63, %v62
    %s65 = scalar_lea.vmem %s0, 5
    %v66 = vld [vmem:[%s65] sm:$0x1]
    %67 = vrot.lane.b32.xlu0 %v66, 40
    %v68 = vpop.permute.xlu0 %67
    %vm69 = vcmask 392512
    %70 = vst.msk [vmem:[#allocation0] sm:$0x1] %vm69, %v68
    %s71 = scalar_lea.vmem %s0, 4
    %v72 = vld [vmem:[%s71] sm:$0x1]
    %73 = vrot.lane.b32.xlu0 %v72, 32
    %v74 = vpop.permute.xlu0 %73
    %vm75 = vcmask 326912
    %76 = vst.msk [vmem:[#allocation0] sm:$0x1] %vm75, %v74
    %s77 = scalar_lea.vmem %s0, 3
    %v78 = vld [vmem:[%s77] sm:$0x1]
    %79 = vrot.lane.b32.xlu0 %v78, 24
    %v80 = vpop.permute.xlu0 %79
    %vm81 = vcmask 261312
    %82 = vst.msk [vmem:[#allocation0] sm:$0x1] %vm81, %v80
    %s83 = scalar_lea.vmem %s0, 2
    %v84 = vld [vmem:[%s83] sm:$0x1]
    %85 = vrot.lane.b32.xlu0 %v84, 16
    %v86 = vpop.permute.xlu0 %85
    %vm87 = vcmask 195712
    %88 = vst.msk [vmem:[#allocation0] sm:$0x1] %vm87, %v86
    %s89 = scalar_lea.vmem %s0, 1
    %v90 = vld [vmem:[%s89] sm:$0x1]
    %91 = vrot.lane.b32.xlu0 %v90, 8
    %v92 = vpop.permute.xlu0 %91
    %vm93 = vcmask 130112
    %94 = vst.msk [vmem:[#allocation0] sm:$0x1] %vm93, %v92
    %s96 = sshllo.u32 0, 1
    %v98 = vld [vmem:[#allocation0] sm:%s96]
    %s99 = sshllo.u32 0, 1
    %100 = vst [vmem:[%s1] sm:%s99] %v98

// kernel: tile.23
$region0: #{tile.23}
  #allocation0 [shape = 's32[1]{0}', space=sflag, size = 0x4, scoped, tag = 'scoped memory for tile.23']
  %s0 = inlined_call_operand.vmem [shape: f32[16], index: 0, kind: input, shape index: {}]
  %s1 = inlined_call_operand.vmem [shape: f32[8,16], index: 1, kind: output, shape index: {}]
  // Predicated region
  $region2: #{tile.23} parent=0 // pred_check
    _
  $region3: #{tile.23} parent=0 // pred_check_branch
    %3 = sbr.rel (0) target = $region5
  $region4: #{tile.23} parent=0 // pred_region
    _
  $region5: #{tile.23} parent=0 // pred_fallthru
    _
  %v4 = vld [vmem:[%s0] ss:$0 sm:$0xff]
  %5 = vst [vmem:[%s1] sm:$0xff] %v4

// kernel: tile.24
$region0: #{tile.24}
  %s0 = inlined_call_operand.vmem [shape: f32[8,16], index: 0, kind: input, shape index: {}]
  %s1 = inlined_call_operand.vmem [shape: f32[1,128], index: 1, kind: output, shape index: {}]
  $region1: #{tile.24} parent=0
    #allocation0 [shape = 'u8[4096]{0}', space=vmem, size = 0x1000, scoped, tag = 'scoped mem for output reshape']
    %v2 = vld [vmem:[%s0] sm:$0x1]
    %vm3 = vcmask 130048
    %4 = vst.msk [vmem:[#allocation0] sm:$0x1] %vm3, %v2
    %s5 = scalar_lea.vmem %s0, 7
    %v6 = vld [vmem:[%s5] sm:$0x1]
    %7 = vrot.lane.b32.xlu0 %v6, 112
    %v8 = vpop.permute.xlu0 %7
    %vm9 = vcmask 1048448
    %10 = vst.msk [vmem:[#allocation0] sm:$0x1] %vm9, %v8
    %s11 = scalar_lea.vmem %s0, 6
    %v12 = vld [vmem:[%s11] sm:$0x1]
    %13 = vrot.lane.b32.xlu0 %v12, 96
    %v14 = vpop.permute.xlu0 %13
    %vm15 = vcmask 917248
    %16 = vst.msk [vmem:[#allocation0] sm:$0x1] %vm15, %v14
    %s17 = scalar_lea.vmem %s0, 5
    %v18 = vld [vmem:[%s17] sm:$0x1]
    %19 = vrot.lane.b32.xlu0 %v18, 80
    %v20 = vpop.permute.xlu0 %19
    %vm21 = vcmask 786048
    %22 = vst.msk [vmem:[#allocation0] sm:$0x1] %vm21, %v20
    %s23 = scalar_lea.vmem %s0, 4
    %v24 = vld [vmem:[%s23] sm:$0x1]
    %25 = vrot.lane.b32.xlu0 %v24, 64
    %v26 = vpop.permute.xlu0 %25
    %vm27 = vcmask 654848
    %28 = vst.msk [vmem:[#allocation0] sm:$0x1] %vm27, %v26
    %s29 = scalar_lea.vmem %s0, 3
    %v30 = vld [vmem:[%s29] sm:$0x1]
    %31 = vrot.lane.b32.xlu0 %v30, 48
    %v32 = vpop.permute.xlu0 %31
    %vm33 = vcmask 523648
    %34 = vst.msk [vmem:[#allocation0] sm:$0x1] %vm33, %v32
    %s35 = scalar_lea.vmem %s0, 2
    %v36 = vld [vmem:[%s35] sm:$0x1]
    %37 = vrot.lane.b32.xlu0 %v36, 32
    %v38 = vpop.permute.xlu0 %37
    %vm39 = vcmask 392448
    %40 = vst.msk [vmem:[#allocation0] sm:$0x1] %vm39, %v38
    %s41 = scalar_lea.vmem %s0, 1
    %v42 = vld [vmem:[%s41] sm:$0x1]
    %43 = vrot.lane.b32.xlu0 %v42, 16
    %v44 = vpop.permute.xlu0 %43
    %vm45 = vcmask 261248
    %46 = vst.msk [vmem:[#allocation0] sm:$0x1] %vm45, %v44
    %s48 = sshllo.u32 0, 1
    %v50 = vld [vmem:[#allocation0] sm:%s48]
    %s51 = sshllo.u32 0, 1
    %52 = vst [vmem:[%s1] sm:%s51] %v50

// kernel: tile.28
$region0: #{tile.28}
  #allocation0 [shape = 's32[1]{0}', space=sflag, size = 0x4, scoped, tag = 'scoped memory for tile.28']
  %s0 = inlined_call_operand.vmem [shape: f32[32], index: 0, kind: input, shape index: {}]
  %s1 = inlined_call_operand.vmem [shape: f32[4,32], index: 1, kind: output, shape index: {}]
  // Predicated region
  $region2: #{tile.28} parent=0 // pred_check
    _
  $region3: #{tile.28} parent=0 // pred_check_branch
    %3 = sbr.rel (0) target = $region5
  $region4: #{tile.28} parent=0 // pred_region
    _
  $region5: #{tile.28} parent=0 // pred_fallthru
    _
  %v4 = vld [vmem:[%s0] ss:$0 sm:$0xff]
  %5 = vst [vmem:[%s1] sm:$0xf] %v4

// kernel: tile.29
$region0: #{tile.29}
  %s0 = inlined_call_operand.vmem [shape: f32[4,32], index: 0, kind: input, shape index: {}]
  %s1 = inlined_call_operand.vmem [shape: f32[1,128], index: 1, kind: output, shape index: {}]
  $region1: #{tile.29} parent=0
    #allocation0 [shape = 'u8[4096]{0}', space=vmem, size = 0x1000, scoped, tag = 'scoped mem for output reshape']
    #allocation1 [shape = 'u8[4096]{0}', space=vmem, size = 0x1000, scoped, tag = 'scoped mem for input reshape']
    %s3 = sshllo.u32 0, 4
    %v4 = vld [vmem:[%s0] sm:%s3]
    %5 = vst [vmem:[#allocation1] sm:%s3] %v4
    %v6 = vld [vmem:[#allocation1] sm:$0x1]
    %vm7 = vcmask 261120
    %8 = vst.msk [vmem:[#allocation0] sm:$0x1] %vm7, %v6
    %s9 = scalar_lea.vmem [#allocation1], 3
    %v10 = vld [vmem:[%s9] sm:$0x1]
    %11 = vrot.lane.b32.xlu0 %v10, 96
    %v12 = vpop.permute.xlu0 %11
    %vm13 = vcmask 1048320
    %14 = vst.msk [vmem:[#allocation0] sm:$0x1] %vm13, %v12
    %s15 = scalar_lea.vmem [#allocation1], 2
    %v16 = vld [vmem:[%s15] sm:$0x1]
    %17 = vrot.lane.b32.xlu0 %v16, 64
    %v18 = vpop.permute.xlu0 %17
    %vm19 = vcmask 785920
    %20 = vst.msk [vmem:[#allocation0] sm:$0x1] %vm19, %v18
    %s21 = scalar_lea.vmem [#allocation1], 1
    %v22 = vld [vmem:[%s21] sm:$0x1]
    %23 = vrot.lane.b32.xlu0 %v22, 32
    %v24 = vpop.permute.xlu0 %23
    %vm25 = vcmask 523520
    %26 = vst.msk [vmem:[#allocation0] sm:$0x1] %vm25, %v24
    %s28 = sshllo.u32 0, 1
    %v30 = vld [vmem:[#allocation0] sm:%s28]
    %s31 = sshllo.u32 0, 1
    %32 = vst [vmem:[%s1] sm:%s31] %v30

// kernel: cnn_forward.1
$region0: #{cnn_forward.1}
  #allocation0 [shape = 'u32[]', space=smem, size = 0x4, offset = 0x4, fixed_abs, tag = 'smem constant byte address 0x4 - core index']
  #allocation1 [shape = 'u32[144,128]{1,0:T(1,128)}', space=vmem, size = 0x12000, scoped, tag = 'internal scratch']
  #allocation2 [shape = 'f32[16,128]{1,0:T(8,128)}', space=vmem, size = 0x2000, scoped, tag = 'scratch operand']
  #allocation3 [shape = 'f32[10,80]{1,0:T(8,128)}', space=vmem, size = 0x2000, scoped, tag = 'scratch operand']
  #allocation4 [shape = 'f32[6,96]{1,0:T(8,128)}', space=vmem, size = 0x1000, scoped, tag = 'scratch operand']
  %s0 = inlined_call_operand.vmem [shape: f32[2,20,80], index: 0, kind: input, shape index: {}]
  %s1 = inlined_call_operand.vmem [shape: bf16[5,80,128], index: 1, kind: input, shape index: {}]
  %s2 = inlined_call_operand.vmem [shape: f32[1,128], index: 2, kind: input, shape index: {}]
  %s3 = inlined_call_operand.vmem [shape: bf16[3,80,128], index: 3, kind: input, shape index: {}]
  %s4 = inlined_call_operand.vmem [shape: f32[1,128], index: 4, kind: input, shape index: {}]
  %s5 = inlined_call_operand.vmem [shape: bf16[3,96,128], index: 5, kind: input, shape index: {}]
  %s6 = inlined_call_operand.vmem [shape: f32[1,128], index: 6, kind: input, shape index: {}]
  %s7 = inlined_call_operand.vmem [shape: bf16[128,80], index: 7, kind: input, shape index: {}]
  %s8 = inlined_call_operand.vmem [shape: bf16[128,80], index: 8, kind: input, shape index: {}]
  %s9 = inlined_call_operand.vmem [shape: bf16[128,96], index: 9, kind: input, shape index: {}]
  %s10 = inlined_call_operand.vmem [shape: bf16[128,96], index: 10, kind: input, shape index: {}]
  %s11 = inlined_call_operand.vmem [shape: bf16[128,64], index: 11, kind: input, shape index: {}]
  %s12 = inlined_call_operand.vmem [shape: bf16[128,64], index: 12, kind: input, shape index: {}]
  %s13 = inlined_call_operand.vmem [shape: bf16[128,256], index: 13, kind: input, shape index: {}]
  %s14 = inlined_call_operand.vmem [shape: f32[1,256], index: 14, kind: input, shape index: {}]
  %s15 = inlined_call_operand.vmem [shape: f32[1,256], index: 15, kind: input, shape index: {}]
  %s16 = inlined_call_operand.vmem [shape: f32[1,256], index: 16, kind: input, shape index: {}]
  %s17 = inlined_call_operand.vmem [shape: bf16[256,128], index: 17, kind: input, shape index: {}]
  %s18 = inlined_call_operand.vmem [shape: f32[1,128], index: 18, kind: input, shape index: {}]
  %s19 = inlined_call_operand.vmem [shape: f32[2,1,256], index: 19, kind: output, shape index: {0}]
  %s20 = inlined_call_operand.hbm [shape: f32[2,1,128], index: 20, kind: output, shape index: {1}]
  %21 = xla_tuple %s19, %s20
  %s22 = sld [smem:[#allocation0]]
  $region117: #{cnn_forward.1} parent=0
    _
  %s24 = ssub.s32 1, %s22
  %s25 = scalar_select 0, %s24, %s22
  $region1: #{cnn_forward.1} parent=0
    #allocation5 [shape = 'u8[1024]{0}', space=vmem, size = 0x400, scoped, tag = 'output window, operand 1']
    #allocation6 [shape = 's32[2]{0}', space=sflag, size = 0x8, scoped, tag = 'scoped memory for cnn_forward.1']
    %26 = vsyncpa [#allocation6], 0
    %s27 = scalar_lea.sflag [#allocation6], 1
    %28 = vsyncpa %s27, 0
    loop: start=0, step=1, limit=4
    $region2: #{cnn_forward.1} parent=1 // loop_pre_header
      _
    $region3: #{cnn_forward.1} parent=1 // loop_header
      %s30 = sphi 0, %s34
      %p31 = scmp.ge.s32.totalorder %s30, 4
      %s40 = sphi 0, %s42
      %s43 = sphi 0, %s40
      %s44 = sphi 0, %s43
      %s60 = sphi 0, %s44
      %s64 = sphi 0, %s64
      %s66 = sphi 0, %s64
      %s67 = sphi 0, %s66
      %s81 = sphi 0, %s67
      %s85 = sphi 0, %s85
      %s87 = sphi 0, %s85
      %s88 = sphi 0, %s87
      %s102 = sphi 0, %s88
      %s106 = sphi 0, %s106
      %s108 = sphi 0, %s106
      %s109 = sphi 0, %s108
      %s123 = sphi 0, %s109
      %s127 = sphi 0, %s127
      %s129 = sphi 0, %s127
      %s130 = sphi 0, %s129
      %s144 = sphi 0, %s130
      %s148 = sphi 0, %s148
      %s150 = sphi 0, %s148
      %s151 = sphi 0, %s150
      %s165 = sphi 0, %s151
      %s169 = sphi 0, %s169
      %s171 = sphi 0, %s169
      %s172 = sphi 0, %s171
      %s186 = sphi 0, %s172
      %s190 = sphi 0, %s190
      %s192 = sphi 0, %s190
      %s193 = sphi 0, %s192
      %s207 = sphi 0, %s193
      %s211 = sphi 0, %s211
      %s213 = sphi 0, %s211
      %s214 = sphi 0, %s213
      %s228 = sphi 0, %s214
      %s232 = sphi 0, %s232
      %s234 = sphi 0, %s232
      %s235 = sphi 0, %s234
      %s249 = sphi 0, %s235
      %s253 = sphi 0, %s253
      %s255 = sphi 0, %s253
      %s256 = sphi 0, %s255
      %s270 = sphi 0, %s256
      %s274 = sphi 0, %s274
      %s276 = sphi 0, %s274
      %s277 = sphi 0, %s276
      %s291 = sphi 0, %s277
      %s295 = sphi 0, %s295
      %s297 = sphi 0, %s295
      %s298 = sphi 0, %s297
      %s312 = sphi 0, %s298
      %s316 = sphi 0, %s316
      %s318 = sphi 0, %s316
      %s319 = sphi 0, %s318
      %s333 = sphi 0, %s319
      %s337 = sphi 0, %s337
      %s339 = sphi 0, %s337
      %s340 = sphi 0, %s339
      %s354 = sphi 0, %s340
      %s358 = sphi 0, %s358
      %s360 = sphi 0, %s358
      %s361 = sphi 0, %s360
      %s375 = sphi 0, %s361
      %s379 = sphi 0, %s379
      %s381 = sphi 0, %s379
      %s382 = sphi 0, %s381
      %s396 = sphi 0, %s382
      %s400 = sphi 0, %s400
      %s402 = sphi 0, %s400
      %s403 = sphi 0, %s402
      %s417 = sphi 0, %s403
      %s421 = sphi 0, %s421
      %s423 = sphi 0, %s421
      %s424 = sphi 0, %s423
      %s438 = sphi 0, %s424
      %s444 = sphi 0, %s446
      %s447 = sphi 0, %s444
      %s448 = sphi 0, %s447
      %s464 = sphi 0, %s448
      %s470 = sphi 0, %s472
      %s473 = sphi 0, %s470
      %s474 = sphi 0, %s473
      %s490 = sphi 0, %s474
    $region4: #{cnn_forward.1} parent=1 // loop_header_branch
      %33 = sbr.rel (%p31) target = $region8
    $region5: #{cnn_forward.1} parent=1 // loop_body
      %s35 = ssub.s32 %s30, 1
      %s36 = ssub.s32 %s30, 2
      %s37 = sadd.s32 %s30, 1
      %s38 = ssub.s32 %s30, %s37
      %p39 = scmp.eq.s32.totalorder %s38, 0
      %s41 = sadd.s32 %s40, 1
      %s42 = scalar_select %p39, %s40, %s41
      %p45 = pneg %p39
      %p46 = scmp.eq.s32.totalorder %s30, 1
      %p47 = por %p45, %p46
      %p48 = scmp.ne.s32.totalorder %s40, %s43
      %p49 = scmp.eq.s32.totalorder %s30, 0
      %p50 = por %p48, %p49
      %p51 = scmp.ne.s32.totalorder %s40, %s43
      %p52 = scmp.eq.s32.totalorder %s35, 1
      %p53 = por %p51, %p52
      %p54 = scmp.ne.s32.totalorder %s43, %s44
      %p55 = scmp.eq.s32.totalorder %s35, 0
      %p56 = por %p54, %p55
      %p57 = scmp.ne.s32.totalorder %s43, %s44
      %p58 = scmp.eq.s32.totalorder %s36, 1
      %p59 = por %p57, %p58
      %p61 = scmp.ne.s32.totalorder %s44, %s60
      %p62 = scmp.eq.s32.totalorder %s36, 0
      %p63 = por %p61, %p62
      %s65 = sadd.s32 %s64, 1
      %p68 = scmp.eq.s32.totalorder %s30, 1
      %p69 = scmp.ne.s32.totalorder %s64, %s66
      %p70 = scmp.eq.s32.totalorder %s30, 0
      %p71 = por %p69, %p70
      %p72 = scmp.ne.s32.totalorder %s64, %s66
      %p73 = scmp.eq.s32.totalorder %s35, 1
      %p74 = por %p72, %p73
      %p75 = scmp.ne.s32.totalorder %s66, %s67
      %p76 = scmp.eq.s32.totalorder %s35, 0
      %p77 = por %p75, %p76
      %p78 = scmp.ne.s32.totalorder %s66, %s67
      %p79 = scmp.eq.s32.totalorder %s36, 1
      %p80 = por %p78, %p79
      %p82 = scmp.ne.s32.totalorder %s67, %s81
      %p83 = scmp.eq.s32.totalorder %s36, 0
      %p84 = por %p82, %p83
      %s86 = sadd.s32 %s85, 1
      %p89 = scmp.eq.s32.totalorder %s30, 1
      %p90 = scmp.ne.s32.totalorder %s85, %s87
      %p91 = scmp.eq.s32.totalorder %s30, 0
      %p92 = por %p90, %p91
      %p93 = scmp.ne.s32.totalorder %s85, %s87
      %p94 = scmp.eq.s32.totalorder %s35, 1
      %p95 = por %p93, %p94
      %p96 = scmp.ne.s32.totalorder %s87, %s88
      %p97 = scmp.eq.s32.totalorder %s35, 0
      %p98 = por %p96, %p97
      %p99 = scmp.ne.s32.totalorder %s87, %s88
      %p100 = scmp.eq.s32.totalorder %s36, 1
      %p101 = por %p99, %p100
      %p103 = scmp.ne.s32.totalorder %s88, %s102
      %p104 = scmp.eq.s32.totalorder %s36, 0
      %p105 = por %p103, %p104
      %s107 = sadd.s32 %s106, 1
      %p110 = scmp.eq.s32.totalorder %s30, 1
      %p111 = scmp.ne.s32.totalorder %s106, %s108
      %p112 = scmp.eq.s32.totalorder %s30, 0
      %p113 = por %p111, %p112
      %p114 = scmp.ne.s32.totalorder %s106, %s108
      %p115 = scmp.eq.s32.totalorder %s35, 1
      %p116 = por %p114, %p115
      %p117 = scmp.ne.s32.totalorder %s108, %s109
      %p118 = scmp.eq.s32.totalorder %s35, 0
      %p119 = por %p117, %p118
      %p120 = scmp.ne.s32.totalorder %s108, %s109
      %p121 = scmp.eq.s32.totalorder %s36, 1
      %p122 = por %p120, %p121
      %p124 = scmp.ne.s32.totalorder %s109, %s123
      %p125 = scmp.eq.s32.totalorder %s36, 0
      %p126 = por %p124, %p125
      %s128 = sadd.s32 %s127, 1
      %p131 = scmp.eq.s32.totalorder %s30, 1
      %p132 = scmp.ne.s32.totalorder %s127, %s129
      %p133 = scmp.eq.s32.totalorder %s30, 0
      %p134 = por %p132, %p133
      %p135 = scmp.ne.s32.totalorder %s127, %s129
      %p136 = scmp.eq.s32.totalorder %s35, 1
      %p137 = por %p135, %p136
      %p138 = scmp.ne.s32.totalorder %s129, %s130
      %p139 = scmp.eq.s32.totalorder %s35, 0
      %p140 = por %p138, %p139
      %p141 = scmp.ne.s32.totalorder %s129, %s130
      %p142 = scmp.eq.s32.totalorder %s36, 1
      %p143 = por %p141, %p142
      %p145 = scmp.ne.s32.totalorder %s130, %s144
      %p146 = scmp.eq.s32.totalorder %s36, 0
      %p147 = por %p145, %p146
      %s149 = sadd.s32 %s148, 1
      %p152 = scmp.eq.s32.totalorder %s30, 1
      %p153 = scmp.ne.s32.totalorder %s148, %s150
      %p154 = scmp.eq.s32.totalorder %s30, 0
      %p155 = por %p153, %p154
      %p156 = scmp.ne.s32.totalorder %s148, %s150
      %p157 = scmp.eq.s32.totalorder %s35, 1
      %p158 = por %p156, %p157
      %p159 = scmp.ne.s32.totalorder %s150, %s151
      %p160 = scmp.eq.s32.totalorder %s35, 0
      %p161 = por %p159, %p160
      %p162 = scmp.ne.s32.totalorder %s150, %s151
      %p163 = scmp.eq.s32.totalorder %s36, 1
      %p164 = por %p162, %p163
      %p166 = scmp.ne.s32.totalorder %s151, %s165
      %p167 = scmp.eq.s32.totalorder %s36, 0
      %p168 = por %p166, %p167
      %s170 = sadd.s32 %s169, 1
      %p173 = scmp.eq.s32.totalorder %s30, 1
      %p174 = scmp.ne.s32.totalorder %s169, %s171
      %p175 = scmp.eq.s32.totalorder %s30, 0
      %p176 = por %p174, %p175
      %p177 = scmp.ne.s32.totalorder %s169, %s171
      %p178 = scmp.eq.s32.totalorder %s35, 1
      %p179 = por %p177, %p178
      %p180 = scmp.ne.s32.totalorder %s171, %s172
      %p181 = scmp.eq.s32.totalorder %s35, 0
      %p182 = por %p180, %p181
      %p183 = scmp.ne.s32.totalorder %s171, %s172
      %p184 = scmp.eq.s32.totalorder %s36, 1
      %p185 = por %p183, %p184
      %p187 = scmp.ne.s32.totalorder %s172, %s186
      %p188 = scmp.eq.s32.totalorder %s36, 0
      %p189 = por %p187, %p188
      %s191 = sadd.s32 %s190, 1
      %p194 = scmp.eq.s32.totalorder %s30, 1
      %p195 = scmp.ne.s32.totalorder %s190, %s192
      %p196 = scmp.eq.s32.totalorder %s30, 0
      %p197 = por %p195, %p196
      %p198 = scmp.ne.s32.totalorder %s190, %s192
      %p199 = scmp.eq.s32.totalorder %s35, 1
      %p200 = por %p198, %p199
      %p201 = scmp.ne.s32.totalorder %s192, %s193
      %p202 = scmp.eq.s32.totalorder %s35, 0
      %p203 = por %p201, %p202
      %p204 = scmp.ne.s32.totalorder %s192, %s193
      %p205 = scmp.eq.s32.totalorder %s36, 1
      %p206 = por %p204, %p205
      %p208 = scmp.ne.s32.totalorder %s193, %s207
      %p209 = scmp.eq.s32.totalorder %s36, 0
      %p210 = por %p208, %p209
      %s212 = sadd.s32 %s211, 1
      %p215 = scmp.eq.s32.totalorder %s30, 1
      %p216 = scmp.ne.s32.totalorder %s211, %s213
      %p217 = scmp.eq.s32.totalorder %s30, 0
      %p218 = por %p216, %p217
      %p219 = scmp.ne.s32.totalorder %s211, %s213
      %p220 = scmp.eq.s32.totalorder %s35, 1
      %p221 = por %p219, %p220
      %p222 = scmp.ne.s32.totalorder %s213, %s214
      %p223 = scmp.eq.s32.totalorder %s35, 0
      %p224 = por %p222, %p223
      %p225 = scmp.ne.s32.totalorder %s213, %s214
      %p226 = scmp.eq.s32.totalorder %s36, 1
      %p227 = por %p225, %p226
      %p229 = scmp.ne.s32.totalorder %s214, %s228
      %p230 = scmp.eq.s32.totalorder %s36, 0
      %p231 = por %p229, %p230
      %s233 = sadd.s32 %s232, 1
      %p236 = scmp.eq.s32.totalorder %s30, 1
      %p237 = scmp.ne.s32.totalorder %s232, %s234
      %p238 = scmp.eq.s32.totalorder %s30, 0
      %p239 = por %p237, %p238
      %p240 = scmp.ne.s32.totalorder %s232, %s234
      %p241 = scmp.eq.s32.totalorder %s35, 1
      %p242 = por %p240, %p241
      %p243 = scmp.ne.s32.totalorder %s234, %s235
      %p244 = scmp.eq.s32.totalorder %s35, 0
      %p245 = por %p243, %p244
      %p246 = scmp.ne.s32.totalorder %s234, %s235
      %p247 = scmp.eq.s32.totalorder %s36, 1
      %p248 = por %p246, %p247
      %p250 = scmp.ne.s32.totalorder %s235, %s249
      %p251 = scmp.eq.s32.totalorder %s36, 0
      %p252 = por %p250, %p251
      %s254 = sadd.s32 %s253, 1
      %p257 = scmp.eq.s32.totalorder %s30, 1
      %p258 = scmp.ne.s32.totalorder %s253, %s255
      %p259 = scmp.eq.s32.totalorder %s30, 0
      %p260 = por %p258, %p259
      %p261 = scmp.ne.s32.totalorder %s253, %s255
      %p262 = scmp.eq.s32.totalorder %s35, 1
      %p263 = por %p261, %p262
      %p264 = scmp.ne.s32.totalorder %s255, %s256
      %p265 = scmp.eq.s32.totalorder %s35, 0
      %p266 = por %p264, %p265
      %p267 = scmp.ne.s32.totalorder %s255, %s256
      %p268 = scmp.eq.s32.totalorder %s36, 1
      %p269 = por %p267, %p268
      %p271 = scmp.ne.s32.totalorder %s256, %s270
      %p272 = scmp.eq.s32.totalorder %s36, 0
      %p273 = por %p271, %p272
      %s275 = sadd.s32 %s274, 1
      %p278 = scmp.eq.s32.totalorder %s30, 1
      %p279 = scmp.ne.s32.totalorder %s274, %s276
      %p280 = scmp.eq.s32.totalorder %s30, 0
      %p281 = por %p279, %p280
      %p282 = scmp.ne.s32.totalorder %s274, %s276
      %p283 = scmp.eq.s32.totalorder %s35, 1
      %p284 = por %p282, %p283
      %p285 = scmp.ne.s32.totalorder %s276, %s277
      %p286 = scmp.eq.s32.totalorder %s35, 0
      %p287 = por %p285, %p286
      %p288 = scmp.ne.s32.totalorder %s276, %s277
      %p289 = scmp.eq.s32.totalorder %s36, 1
      %p290 = por %p288, %p289
      %p292 = scmp.ne.s32.totalorder %s277, %s291
      %p293 = scmp.eq.s32.totalorder %s36, 0
      %p294 = por %p292, %p293
      %s296 = sadd.s32 %s295, 1
      %p299 = scmp.eq.s32.totalorder %s30, 1
      %p300 = scmp.ne.s32.totalorder %s295, %s297
      %p301 = scmp.eq.s32.totalorder %s30, 0
      %p302 = por %p300, %p301
      %p303 = scmp.ne.s32.totalorder %s295, %s297
      %p304 = scmp.eq.s32.totalorder %s35, 1
      %p305 = por %p303, %p304
      %p306 = scmp.ne.s32.totalorder %s297, %s298
      %p307 = scmp.eq.s32.totalorder %s35, 0
      %p308 = por %p306, %p307
      %p309 = scmp.ne.s32.totalorder %s297, %s298
      %p310 = scmp.eq.s32.totalorder %s36, 1
      %p311 = por %p309, %p310
      %p313 = scmp.ne.s32.totalorder %s298, %s312
      %p314 = scmp.eq.s32.totalorder %s36, 0
      %p315 = por %p313, %p314
      %s317 = sadd.s32 %s316, 1
      %p320 = scmp.eq.s32.totalorder %s30, 1
      %p321 = scmp.ne.s32.totalorder %s316, %s318
      %p322 = scmp.eq.s32.totalorder %s30, 0
      %p323 = por %p321, %p322
      %p324 = scmp.ne.s32.totalorder %s316, %s318
      %p325 = scmp.eq.s32.totalorder %s35, 1
      %p326 = por %p324, %p325
      %p327 = scmp.ne.s32.totalorder %s318, %s319
      %p328 = scmp.eq.s32.totalorder %s35, 0
      %p329 = por %p327, %p328
      %p330 = scmp.ne.s32.totalorder %s318, %s319
      %p331 = scmp.eq.s32.totalorder %s36, 1
      %p332 = por %p330, %p331
      %p334 = scmp.ne.s32.totalorder %s319, %s333
      %p335 = scmp.eq.s32.totalorder %s36, 0
      %p336 = por %p334, %p335
      %s338 = sadd.s32 %s337, 1
      %p341 = scmp.eq.s32.totalorder %s30, 1
      %p342 = scmp.ne.s32.totalorder %s337, %s339
      %p343 = scmp.eq.s32.totalorder %s30, 0
      %p344 = por %p342, %p343
      %p345 = scmp.ne.s32.totalorder %s337, %s339
      %p346 = scmp.eq.s32.totalorder %s35, 1
      %p347 = por %p345, %p346
      %p348 = scmp.ne.s32.totalorder %s339, %s340
      %p349 = scmp.eq.s32.totalorder %s35, 0
      %p350 = por %p348, %p349
      %p351 = scmp.ne.s32.totalorder %s339, %s340
      %p352 = scmp.eq.s32.totalorder %s36, 1
      %p353 = por %p351, %p352
      %p355 = scmp.ne.s32.totalorder %s340, %s354
      %p356 = scmp.eq.s32.totalorder %s36, 0
      %p357 = por %p355, %p356
      %s359 = sadd.s32 %s358, 1
      %p362 = scmp.eq.s32.totalorder %s30, 1
      %p363 = scmp.ne.s32.totalorder %s358, %s360
      %p364 = scmp.eq.s32.totalorder %s30, 0
      %p365 = por %p363, %p364
      %p366 = scmp.ne.s32.totalorder %s358, %s360
      %p367 = scmp.eq.s32.totalorder %s35, 1
      %p368 = por %p366, %p367
      %p369 = scmp.ne.s32.totalorder %s360, %s361
      %p370 = scmp.eq.s32.totalorder %s35, 0
      %p371 = por %p369, %p370
      %p372 = scmp.ne.s32.totalorder %s360, %s361
      %p373 = scmp.eq.s32.totalorder %s36, 1
      %p374 = por %p372, %p373
      %p376 = scmp.ne.s32.totalorder %s361, %s375
      %p377 = scmp.eq.s32.totalorder %s36, 0
      %p378 = por %p376, %p377
      %s380 = sadd.s32 %s379, 1
      %p383 = scmp.eq.s32.totalorder %s30, 1
      %p384 = scmp.ne.s32.totalorder %s379, %s381
      %p385 = scmp.eq.s32.totalorder %s30, 0
      %p386 = por %p384, %p385
      %p387 = scmp.ne.s32.totalorder %s379, %s381
      %p388 = scmp.eq.s32.totalorder %s35, 1
      %p389 = por %p387, %p388
      %p390 = scmp.ne.s32.totalorder %s381, %s382
      %p391 = scmp.eq.s32.totalorder %s35, 0
      %p392 = por %p390, %p391
      %p393 = scmp.ne.s32.totalorder %s381, %s382
      %p394 = scmp.eq.s32.totalorder %s36, 1
      %p395 = por %p393, %p394
      %p397 = scmp.ne.s32.totalorder %s382, %s396
      %p398 = scmp.eq.s32.totalorder %s36, 0
      %p399 = por %p397, %p398
      %s401 = sadd.s32 %s400, 1
      %p404 = scmp.eq.s32.totalorder %s30, 1
      %p405 = scmp.ne.s32.totalorder %s400, %s402
      %p406 = scmp.eq.s32.totalorder %s30, 0
      %p407 = por %p405, %p406
      %p408 = scmp.ne.s32.totalorder %s400, %s402
      %p409 = scmp.eq.s32.totalorder %s35, 1
      %p410 = por %p408, %p409
      %p411 = scmp.ne.s32.totalorder %s402, %s403
      %p412 = scmp.eq.s32.totalorder %s35, 0
      %p413 = por %p411, %p412
      %p414 = scmp.ne.s32.totalorder %s402, %s403
      %p415 = scmp.eq.s32.totalorder %s36, 1
      %p416 = por %p414, %p415
      %p418 = scmp.ne.s32.totalorder %s403, %s417
      %p419 = scmp.eq.s32.totalorder %s36, 0
      %p420 = por %p418, %p419
      %s422 = sadd.s32 %s421, 1
      %p425 = scmp.eq.s32.totalorder %s30, 1
      %p426 = scmp.ne.s32.totalorder %s421, %s423
      %p427 = scmp.eq.s32.totalorder %s30, 0
      %p428 = por %p426, %p427
      %p429 = scmp.ne.s32.totalorder %s421, %s423
      %p430 = scmp.eq.s32.totalorder %s35, 1
      %p431 = por %p429, %p430
      %p432 = scmp.ne.s32.totalorder %s423, %s424
      %p433 = scmp.eq.s32.totalorder %s35, 0
      %p434 = por %p432, %p433
      %p435 = scmp.ne.s32.totalorder %s423, %s424
      %p436 = scmp.eq.s32.totalorder %s36, 1
      %p437 = por %p435, %p436
      %p439 = scmp.ne.s32.totalorder %s424, %s438
      %p440 = scmp.eq.s32.totalorder %s36, 0
      %p441 = por %p439, %p440
      %s442 = ssub.s32 %s30, %s37
      %p443 = scmp.eq.s32.totalorder %s442, 0
      %s445 = sadd.s32 %s444, 1
      %s446 = scalar_select %p443, %s444, %s445
      %p449 = pneg %p443
      %p450 = scmp.eq.s32.totalorder %s30, 1
      %p451 = por %p449, %p450
      %p452 = scmp.ne.s32.totalorder %s444, %s447
      %p453 = scmp.eq.s32.totalorder %s30, 0
      %p454 = por %p452, %p453
      %p455 = scmp.ne.s32.totalorder %s444, %s447
      %p456 = scmp.eq.s32.totalorder %s35, 1
      %p457 = por %p455, %p456
      %p458 = scmp.ne.s32.totalorder %s447, %s448
      %p459 = scmp.eq.s32.totalorder %s35, 0
      %p460 = por %p458, %p459
      %p461 = scmp.ne.s32.totalorder %s447, %s448
      %p462 = scmp.eq.s32.totalorder %s36, 1
      %p463 = por %p461, %p462
      %p465 = scmp.ne.s32.totalorder %s448, %s464
      %p466 = scmp.eq.s32.totalorder %s36, 0
      %p467 = por %p465, %p466
      %s468 = ssub.s32 %s30, %s37
      %p469 = scmp.eq.s32.totalorder %s468, 0
      %s471 = sadd.s32 %s470, 1
      %s472 = scalar_select %p469, %s470, %s471
      %p475 = pneg %p469
      %p476 = scmp.eq.s32.totalorder %s30, 1
      %p477 = por %p475, %p476
      %p478 = scmp.ne.s32.totalorder %s470, %s473
      %p479 = scmp.eq.s32.totalorder %s30, 0
      %p480 = por %p478, %p479
      %p481 = scmp.ne.s32.totalorder %s470, %s473
      %p482 = scmp.eq.s32.totalorder %s35, 1
      %p483 = por %p481, %p482
      %p484 = scmp.ne.s32.totalorder %s473, %s474
      %p485 = scmp.eq.s32.totalorder %s35, 0
      %p486 = por %p484, %p485
      %p487 = scmp.ne.s32.totalorder %s473, %s474
      %p488 = scmp.eq.s32.totalorder %s36, 1
      %p489 = por %p487, %p488
      %p491 = scmp.ne.s32.totalorder %s474, %s490
      %p492 = scmp.eq.s32.totalorder %s36, 0
      %p493 = por %p491, %p492
      %p494 = scmp.le.s32.totalorder 1, %s30
      %p495 = scmp.lt.s32.totalorder %s30, 3
      %p496 = pnand %p494, %p495
      %p497 = pneg %p496
      // Predicated region
      $region9: #{cnn_forward.1} parent=5 // pred_check
        _
      $region10: #{cnn_forward.1} parent=5 // pred_check_branch
        %499 = sbr.rel (%p496) target = $region12
      $region11: #{cnn_forward.1} parent=5 // pred_region
        %s500 = ssub.s32 %s30, 1
        // Predicated region
        $region13: #{cnn_forward.1} parent=11 // pred_check
          %p501 = pneg %p77
        $region14: #{cnn_forward.1} parent=11 // pred_check_branch
          %503 = sbr.rel (%p501) target = $region16
        $region15: #{cnn_forward.1} parent=11 // pred_region
          _
        $region16: #{cnn_forward.1} parent=11 // pred_fallthru
          _
        // Predicated region
        $region17: #{cnn_forward.1} parent=11 // pred_check
          %p504 = pneg %p98
        $region18: #{cnn_forward.1} parent=11 // pred_check_branch
          %506 = sbr.rel (%p504) target = $region20
        $region19: #{cnn_forward.1} parent=11 // pred_region
          _
        $region20: #{cnn_forward.1} parent=11 // pred_fallthru
          _
        // Predicated region
        $region21: #{cnn_forward.1} parent=11 // pred_check
          %p507 = pneg %p119
        $region22: #{cnn_forward.1} parent=11 // pred_check_branch
          %509 = sbr.rel (%p507) target = $region24
        $region23: #{cnn_forward.1} parent=11 // pred_region
          _
        $region24: #{cnn_forward.1} parent=11 // pred_fallthru
          _
        // Predicated region
        $region25: #{cnn_forward.1} parent=11 // pred_check
          %p510 = pneg %p140
        $region26: #{cnn_forward.1} parent=11 // pred_check_branch
          %512 = sbr.rel (%p510) target = $region28
        $region27: #{cnn_forward.1} parent=11 // pred_region
          _
        $region28: #{cnn_forward.1} parent=11 // pred_fallthru
          _
        // Predicated region
        $region29: #{cnn_forward.1} parent=11 // pred_check
          %p513 = pneg %p161
        $region30: #{cnn_forward.1} parent=11 // pred_check_branch
          %515 = sbr.rel (%p513) target = $region32
        $region31: #{cnn_forward.1} parent=11 // pred_region
          _
        $region32: #{cnn_forward.1} parent=11 // pred_fallthru
          _
        // Predicated region
        $region33: #{cnn_forward.1} parent=11 // pred_check
          %p516 = pneg %p182
        $region34: #{cnn_forward.1} parent=11 // pred_check_branch
          %518 = sbr.rel (%p516) target = $region36
        $region35: #{cnn_forward.1} parent=11 // pred_region
          _
        $region36: #{cnn_forward.1} parent=11 // pred_fallthru
          _
        // Predicated region
        $region37: #{cnn_forward.1} parent=11 // pred_check
          %p519 = pneg %p203
        $region38: #{cnn_forward.1} parent=11 // pred_check_branch
          %521 = sbr.rel (%p519) target = $region40
        $region39: #{cnn_forward.1} parent=11 // pred_region
          _
        $region40: #{cnn_forward.1} parent=11 // pred_fallthru
          _
        // Predicated region
        $region41: #{cnn_forward.1} parent=11 // pred_check
          %p522 = pneg %p224
        $region42: #{cnn_forward.1} parent=11 // pred_check_branch
          %524 = sbr.rel (%p522) target = $region44
        $region43: #{cnn_forward.1} parent=11 // pred_region
          _
        $region44: #{cnn_forward.1} parent=11 // pred_fallthru
          _
        // Predicated region
        $region45: #{cnn_forward.1} parent=11 // pred_check
          %p525 = pneg %p245
        $region46: #{cnn_forward.1} parent=11 // pred_check_branch
          %527 = sbr.rel (%p525) target = $region48
        $region47: #{cnn_forward.1} parent=11 // pred_region
          _
        $region48: #{cnn_forward.1} parent=11 // pred_fallthru
          _
        // Predicated region
        $region49: #{cnn_forward.1} parent=11 // pred_check
          %p528 = pneg %p266
        $region50: #{cnn_forward.1} parent=11 // pred_check_branch
          %530 = sbr.rel (%p528) target = $region52
        $region51: #{cnn_forward.1} parent=11 // pred_region
          _
        $region52: #{cnn_forward.1} parent=11 // pred_fallthru
          _
        // Predicated region
        $region53: #{cnn_forward.1} parent=11 // pred_check
          %p531 = pneg %p287
        $region54: #{cnn_forward.1} parent=11 // pred_check_branch
          %533 = sbr.rel (%p531) target = $region56
        $region55: #{cnn_forward.1} parent=11 // pred_region
          _
        $region56: #{cnn_forward.1} parent=11 // pred_fallthru
          _
        // Predicated region
        $region57: #{cnn_forward.1} parent=11 // pred_check
          %p534 = pneg %p308
        $region58: #{cnn_forward.1} parent=11 // pred_check_branch
          %536 = sbr.rel (%p534) target = $region60
        $region59: #{cnn_forward.1} parent=11 // pred_region
          _
        $region60: #{cnn_forward.1} parent=11 // pred_fallthru
          _
        // Predicated region
        $region61: #{cnn_forward.1} parent=11 // pred_check
          %p537 = pneg %p329
        $region62: #{cnn_forward.1} parent=11 // pred_check_branch
          %539 = sbr.rel (%p537) target = $region64
        $region63: #{cnn_forward.1} parent=11 // pred_region
          _
        $region64: #{cnn_forward.1} parent=11 // pred_fallthru
          _
        // Predicated region
        $region65: #{cnn_forward.1} parent=11 // pred_check
          %p540 = pneg %p350
        $region66: #{cnn_forward.1} parent=11 // pred_check_branch
          %542 = sbr.rel (%p540) target = $region68
        $region67: #{cnn_forward.1} parent=11 // pred_region
          _
        $region68: #{cnn_forward.1} parent=11 // pred_fallthru
          _
        // Predicated region
        $region69: #{cnn_forward.1} parent=11 // pred_check
          %p543 = pneg %p371
        $region70: #{cnn_forward.1} parent=11 // pred_check_branch
          %545 = sbr.rel (%p543) target = $region72
        $region71: #{cnn_forward.1} parent=11 // pred_region
          _
        $region72: #{cnn_forward.1} parent=11 // pred_fallthru
          _
        // Predicated region
        $region73: #{cnn_forward.1} parent=11 // pred_check
          %p546 = pneg %p392
        $region74: #{cnn_forward.1} parent=11 // pred_check_branch
          %548 = sbr.rel (%p546) target = $region76
        $region75: #{cnn_forward.1} parent=11 // pred_region
          _
        $region76: #{cnn_forward.1} parent=11 // pred_fallthru
          _
        // Predicated region
        $region77: #{cnn_forward.1} parent=11 // pred_check
          %p549 = pneg %p413
        $region78: #{cnn_forward.1} parent=11 // pred_check_branch
          %551 = sbr.rel (%p549) target = $region80
        $region79: #{cnn_forward.1} parent=11 // pred_region
          _
        $region80: #{cnn_forward.1} parent=11 // pred_fallthru
          _
        // Predicated region
        $region81: #{cnn_forward.1} parent=11 // pred_check
          %p552 = pneg %p434
        $region82: #{cnn_forward.1} parent=11 // pred_check_branch
          %554 = sbr.rel (%p552) target = $region84
        $region83: #{cnn_forward.1} parent=11 // pred_region
          _
        $region84: #{cnn_forward.1} parent=11 // pred_fallthru
          _
      $region12: #{cnn_forward.1} parent=5 // pred_fallthru
        _
      %p555 = scmp.lt.s32.totalorder %s30, 2
      // Predicated region
      $region85: #{cnn_forward.1} parent=5 // pred_check
        %p556 = pneg %p555
      $region86: #{cnn_forward.1} parent=5 // pred_check_branch
        %558 = sbr.rel (%p556) target = $region88
      $region87: #{cnn_forward.1} parent=5 // pred_region
        // Predicated region
        $region89: #{cnn_forward.1} parent=87 // pred_check
          %p559 = pneg %p50
        $region90: #{cnn_forward.1} parent=87 // pred_check_branch
          %561 = sbr.rel (%p559) target = $region92
        $region91: #{cnn_forward.1} parent=87 // pred_region
          %p562 = scmp.lt.s32.totalorder %s30, 1
          %s563 = scalar_select %p562, %s30, 1
          %s564 = smul.addr %s563, 3
          %s565 = smul.addr %s564, 8
          %s566 = scalar_lea.vmem %s0, %s565
        $region92: #{cnn_forward.1} parent=87 // pred_fallthru
          _
      $region88: #{cnn_forward.1} parent=5 // pred_fallthru
        _
      %p567 = scmp.le.s32.totalorder 1, %s30
      %p568 = scmp.lt.s32.totalorder %s30, 3
      %p569 = pnand %p567, %p568
      %p570 = pneg %p569
      // Predicated region
      $region93: #{cnn_forward.1} parent=5 // pred_check
        _
      $region94: #{cnn_forward.1} parent=5 // pred_check_branch
        %572 = sbr.rel (%p569) target = $region96
      $region95: #{cnn_forward.1} parent=5 // pred_region
        %s573 = ssub.s32 %s30, 1
        %p574 = scmp.lt.s32.totalorder %s35, 1
        %s575 = scalar_select %p574, %s35, 1
        %s576 = smul.addr %s575, 3
        %s577 = smul.addr %s576, 8
        %s578 = scalar_lea.vmem %s0, %s577
        %p579 = pneg %p56
        %p580 = pneg %p53
        %p581 = pneg %p77
        %p582 = pneg %p74
        %p583 = pneg %p98
        %p584 = pneg %p95
        %p585 = pneg %p119
        %p586 = pneg %p116
        %p587 = pneg %p140
        %p588 = pneg %p137
        %p589 = pneg %p161
        %p590 = pneg %p158
        %p591 = pneg %p182
        %p592 = pneg %p179
        %p593 = pneg %p203
        %p594 = pneg %p200
        %p595 = pneg %p224
        %p596 = pneg %p221
        %p597 = pneg %p245
        %p598 = pneg %p242
        %p599 = pneg %p266
        %p600 = pneg %p263
        %p601 = pneg %p287
        %p602 = pneg %p284
        %p603 = pneg %p308
        %p604 = pneg %p305
        %p605 = pneg %p329
        %p606 = pneg %p326
        %p607 = pneg %p350
        %p608 = pneg %p347
        %p609 = pneg %p371
        %p610 = pneg %p368
        %p611 = pneg %p392
        %p612 = pneg %p389
        %p613 = pneg %p413
        %p614 = pneg %p410
        %p615 = pneg %p434
        %p616 = pneg %p431
        %p617 = pneg %p460
        %p618 = pneg %p457
        %p619 = scmp.lt.s32.totalorder %s35, 1
        %s620 = scalar_select %p619, %s35, 1
        %s621 = smul.addr %s620, 2
        %s622 = scalar_lea.vmem %s19, %s621
        %p623 = pneg %p486
        %p624 = pneg %p483
        %s625 = sand.u32 %s473, 1
        %s626 = scalar_lea.sflag [#allocation6], %s625
        %s627 = sand.u32 %s473, 1
        %s628 = scalar_lea.vmem [#allocation5], %s627
        %p629 = scmp.lt.s32.totalorder %s35, 1
        %s630 = scalar_select %p629, %s35, 1
        %s631 = smul.addr %s630, 3
        %s632 = smul.addr %s631, 8
        %s633 = scalar_lea.vmem %s0, %s632
        %p634 = scmp.lt.s32.totalorder %s35, 1
        %s635 = scalar_select %p634, %s35, 1
        %s636 = smul.addr %s635, 2
        %s637 = scalar_lea.vmem %s19, %s636
        %v639 = vld [vmem:[%s633] sm:$0xff]
        %v640 = vld [vmem:[%s633 + $0x8] sm:$0xff]
        %v641 = vpack.c.bf16 %v640, %v639
        %v642 = vld [vmem:[%s633 + $0x1] sm:$0xff]
        %v643 = vld [vmem:[%s633 + $0x9] sm:$0xff]
        %v644 = vpack.c.bf16 %v643, %v642
        %v645 = vld [vmem:[%s633 + $0x2] sm:$0xff]
        %v646 = vld [vmem:[%s633 + $0xa] sm:$0xff]
        %v647 = vpack.c.bf16 %v646, %v645
        %v648 = vld [vmem:[%s633 + $0x3] sm:$0xff]
        %v649 = vld [vmem:[%s633 + $0xb] sm:$0xff]
        %v650 = vpack.c.bf16 %v649, %v648
        %v651 = vld [vmem:[%s633 + $0x4] sm:$0xff]
        %v652 = vld [vmem:[%s633 + $0xc] sm:$0xff]
        %v653 = vpack.c.bf16 %v652, %v651
        %v654 = vld [vmem:[%s1] sm:$0xf]
        %v655 = vld [vmem:[%s1 + $0x4] sm:$0xf]
        %v656 = vld [vmem:[%s1 + $0x8] sm:$0xf]
        %v657 = vld [vmem:[%s1 + $0xc] sm:$0xf]
        %v658 = vld [vmem:[%s1 + $0x10] sm:$0xf]
        %v659 = vld [vmem:[%s1 + $0x14] sm:$0xf]
        %v660 = vld [vmem:[%s1 + $0x18] sm:$0xf]
        %v661 = vld [vmem:[%s1 + $0x1c] sm:$0xf]
        %v662 = vld [vmem:[%s1 + $0x20] sm:$0xf]
        %v663 = vld [vmem:[%s1 + $0x24] sm:$0xf]
        %s664 = scalar_lea.vmem %s1, 40
        %v665 = vld [vmem:[%s664] sm:$0xf]
        %v666 = vld [vmem:[%s664 + $0x4] sm:$0xf]
        %v667 = vld [vmem:[%s664 + $0x8] sm:$0xf]
        %v668 = vld [vmem:[%s664 + $0xc] sm:$0xf]
        %v669 = vld [vmem:[%s664 + $0x10] sm:$0xf]
        %v670 = vld [vmem:[%s664 + $0x14] sm:$0xf]
        %v671 = vld [vmem:[%s664 + $0x18] sm:$0xf]
        %v672 = vld [vmem:[%s664 + $0x1c] sm:$0xf]
        %v673 = vld [vmem:[%s664 + $0x20] sm:$0xf]
        %v674 = vld [vmem:[%s664 + $0x24] sm:$0xf]
        %v685 = vunpack.c.l.b16 %v665
        %v686 = vunpack.c.l.b16 %v666
        %v687 = vunpack.c.l.b16 %v667
        %v688 = vunpack.c.l.b16 %v668
        %v689 = vunpack.c.l.b16 %v669
        %v690 = vunpack.c.l.b16 %v670
        %v691 = vunpack.c.l.b16 %v671
        %v692 = vunpack.c.l.b16 %v672
        %v693 = vunpack.c.l.b16 %v673
        %v694 = vunpack.c.l.b16 %v674
        %v695 = vpack.c.b16 %v686, %v685
        %v696 = vpack.c.b16 %v688, %v687
        %v697 = vpack.c.b16 %v690, %v689
        %v698 = vpack.c.b16 %v692, %v691
        %v699 = vpack.c.b16 %v694, %v693
        %vm705 = vcmask 654336
        %v707 = vsel %vm705, %v644, 0
        %709 = vmatprep.subr.bf16.mxu0 0
        %710 = vmatpush1.bf16.msra.mxu0 %v695
        %711 = vmatprep.subr.bf16.mxu0 0
        %712 = vmatpush1.bf16.msra.mxu0 %v696
        %713 = vmatprep.subr.bf16.mxu0 0
        %714 = vmatpush1.bf16.msra.mxu0 %v697
        %715 = vmatprep.subr.bf16.mxu0 0
        %716 = vmatpush1.bf16.msra.mxu0 %v698
        %717 = vmatprep.subr.bf16.mxu0 0
        %718 = vmatpush1.bf16.msra.mxu0 %v699
        %719 = vmatprep.subr.bf16.mxu0 0
        %720 = vmatpush1.bf16.msra.mxu0 0
        %721 = vmatprep.subr.bf16.mxu0 0
        %722 = vmatpush1.bf16.msra.mxu0 0
        %723 = vmatprep.subr.bf16.mxu0 0
        %724 = vmatpush1.bf16.msra.mxu0 0
        %725 = vmatprep.subr.bf16.mxu0 0
        %726 = vmatpush1.bf16.msra.mxu0 0
        %727 = vmatprep.subr.bf16.mxu0 0
        %728 = vmatpush1.bf16.msra.mxu0 0
        %729 = vmatprep.subr.bf16.mxu0 0
        %730 = vmatpush1.bf16.msra.mxu0 0
        %731 = vmatprep.subr.bf16.mxu0 0
        %732 = vmatpush1.bf16.msra.mxu0 0
        %733 = vmatprep.subr.bf16.mxu0 0
        %734 = vmatpush1.bf16.msra.mxu0 0
        %735 = vmatprep.subr.bf16.mxu0 0
        %736 = vmatpush1.bf16.msra.mxu0 0
        %737 = vmatprep.subr.bf16.mxu0 0
        %738 = vmatpush1.bf16.msra.mxu0 0
        %739 = vmatprep.subr.bf16.mxu0 0
        %740 = vmatpush1.bf16.msra.mxu0 0
        %741 = vmatprep.mubr.bf16.mxu0 0
        %742 = vmatmul.mubr.bf16.gmra.mrb[0].mxu0 %v707
        %v743 = vpop.f32.mrb[0].mxu0
        %v744 = vadd.f32 0.0, %v743
        %v745 = vpop.f32.mrb[0].mxu0
        %v746 = vpop.f32.mrb[0].mxu0
        %v747 = vadd.f32 0.0, %v746
        %v748 = vpop.f32.mrb[0].mxu0
        %749 = vdwg.mxu0
        %v760 = vunpack.c.l.b16 %v654
        %v761 = vunpack.c.l.b16 %v655
        %v762 = vunpack.c.l.b16 %v656
        %v763 = vunpack.c.l.b16 %v657
        %v764 = vunpack.c.l.b16 %v658
        %v765 = vunpack.c.l.b16 %v659
        %v766 = vunpack.c.l.b16 %v660
        %v767 = vunpack.c.l.b16 %v661
        %v768 = vunpack.c.l.b16 %v662
        %v769 = vunpack.c.l.b16 %v663
        %v770 = vpack.c.b16 %v761, %v760
        %v771 = vpack.c.b16 %v763, %v762
        %v772 = vpack.c.b16 %v765, %v764
        %v773 = vpack.c.b16 %v767, %v766
        %v774 = vpack.c.b16 %v769, %v768
        %v781 = vsel %vm705, %v641, 0
        %783 = vmatprep.subr.bf16.mxu0 0
        %784 = vmatpush1.bf16.msra.mxu0 %v770
        %785 = vmatprep.subr.bf16.mxu0 0
        %786 = vmatpush1.bf16.msra.mxu0 %v771
        %787 = vmatprep.subr.bf16.mxu0 0
        %788 = vmatpush1.bf16.msra.mxu0 %v772
        %789 = vmatprep.subr.bf16.mxu0 0
        %790 = vmatpush1.bf16.msra.mxu0 %v773
        %791 = vmatprep.subr.bf16.mxu0 0
        %792 = vmatpush1.bf16.msra.mxu0 %v774
        %793 = vmatprep.subr.bf16.mxu0 0
        %794 = vmatpush1.bf16.msra.mxu0 0
        %795 = vmatprep.subr.bf16.mxu0 0
        %796 = vmatpush1.bf16.msra.mxu0 0
        %797 = vmatprep.subr.bf16.mxu0 0
        %798 = vmatpush1.bf16.msra.mxu0 0
        %799 = vmatprep.subr.bf16.mxu0 0
        %800 = vmatpush1.bf16.msra.mxu0 0
        %801 = vmatprep.subr.bf16.mxu0 0
        %802 = vmatpush1.bf16.msra.mxu0 0
        %803 = vmatprep.subr.bf16.mxu0 0
        %804 = vmatpush1.bf16.msra.mxu0 0
        %805 = vmatprep.subr.bf16.mxu0 0
        %806 = vmatpush1.bf16.msra.mxu0 0
        %807 = vmatprep.subr.bf16.mxu0 0
        %808 = vmatpush1.bf16.msra.mxu0 0
        %809 = vmatprep.subr.bf16.mxu0 0
        %810 = vmatpush1.bf16.msra.mxu0 0
        %811 = vmatprep.subr.bf16.mxu0 0
        %812 = vmatpush1.bf16.msra.mxu0 0
        %813 = vmatprep.subr.bf16.mxu0 0
        %814 = vmatpush1.bf16.msra.mxu0 0
        %815 = vmatprep.mubr.bf16.mxu0 0
        %816 = vmatmul.mubr.bf16.gmra.mrb[0].mxu0 %v781
        %v817 = vpop.f32.mrb[0].mxu0
        %v818 = vadd.f32 %v744, %v817
        %v819 = vpop.f32.mrb[0].mxu0
        %v820 = vpop.f32.mrb[0].mxu0
        %v821 = vadd.f32 %v747, %v820
        %v822 = vpop.f32.mrb[0].mxu0
        %823 = vdwg.mxu0
        %s824 = scalar_lea.vmem %s1, 80
        %v825 = vld [vmem:[%s824] sm:$0xf]
        %v826 = vld [vmem:[%s824 + $0x4] sm:$0xf]
        %v827 = vld [vmem:[%s824 + $0x8] sm:$0xf]
        %v828 = vld [vmem:[%s824 + $0xc] sm:$0xf]
        %v829 = vld [vmem:[%s824 + $0x10] sm:$0xf]
        %v830 = vld [vmem:[%s824 + $0x14] sm:$0xf]
        %v831 = vld [vmem:[%s824 + $0x18] sm:$0xf]
        %v832 = vld [vmem:[%s824 + $0x1c] sm:$0xf]
        %v833 = vld [vmem:[%s824 + $0x20] sm:$0xf]
        %v834 = vld [vmem:[%s824 + $0x24] sm:$0xf]
        %v845 = vunpack.c.l.b16 %v825
        %v846 = vunpack.c.l.b16 %v826
        %v847 = vunpack.c.l.b16 %v827
        %v848 = vunpack.c.l.b16 %v828
        %v849 = vunpack.c.l.b16 %v829
        %v850 = vunpack.c.l.b16 %v830
        %v851 = vunpack.c.l.b16 %v831
        %v852 = vunpack.c.l.b16 %v832
        %v853 = vunpack.c.l.b16 %v833
        %v854 = vunpack.c.l.b16 %v834
        %v855 = vpack.c.b16 %v846, %v845
        %v856 = vpack.c.b16 %v848, %v847
        %v857 = vpack.c.b16 %v850, %v849
        %v858 = vpack.c.b16 %v852, %v851
        %v859 = vpack.c.b16 %v854, %v853
        %v866 = vsel %vm705, %v647, 0
        %868 = vmatprep.subr.bf16.mxu0 0
        %869 = vmatpush1.bf16.msra.mxu0 %v855
        %870 = vmatprep.subr.bf16.mxu0 0
        %871 = vmatpush1.bf16.msra.mxu0 %v856
        %872 = vmatprep.subr.bf16.mxu0 0
        %873 = vmatpush1.bf16.msra.mxu0 %v857
        %874 = vmatprep.subr.bf16.mxu0 0
        %875 = vmatpush1.bf16.msra.mxu0 %v858
        %876 = vmatprep.subr.bf16.mxu0 0
        %877 = vmatpush1.bf16.msra.mxu0 %v859
        %878 = vmatprep.subr.bf16.mxu0 0
        %879 = vmatpush1.bf16.msra.mxu0 0
        %880 = vmatprep.subr.bf16.mxu0 0
        %881 = vmatpush1.bf16.msra.mxu0 0
        %882 = vmatprep.subr.bf16.mxu0 0
        %883 = vmatpush1.bf16.msra.mxu0 0
        %884 = vmatprep.subr.bf16.mxu0 0
        %885 = vmatpush1.bf16.msra.mxu0 0
        %886 = vmatprep.subr.bf16.mxu0 0
        %887 = vmatpush1.bf16.msra.mxu0 0
        %888 = vmatprep.subr.bf16.mxu0 0
        %889 = vmatpush1.bf16.msra.mxu0 0
        %890 = vmatprep.subr.bf16.mxu0 0
        %891 = vmatpush1.bf16.msra.mxu0 0
        %892 = vmatprep.subr.bf16.mxu0 0
        %893 = vmatpush1.bf16.msra.mxu0 0
        %894 = vmatprep.subr.bf16.mxu0 0
        %895 = vmatpush1.bf16.msra.mxu0 0
        %896 = vmatprep.subr.bf16.mxu0 0
        %897 = vmatpush1.bf16.msra.mxu0 0
        %898 = vmatprep.subr.bf16.mxu0 0
        %899 = vmatpush1.bf16.msra.mxu0 0
        %900 = vmatprep.mubr.bf16.mxu0 0
        %901 = vmatmul.mubr.bf16.gmra.mrb[0].mxu0 %v866
        %v902 = vpop.f32.mrb[0].mxu0
        %v903 = vadd.f32 0.0, %v902
        %v904 = vpop.f32.mrb[0].mxu0
        %v905 = vpop.f32.mrb[0].mxu0
        %v906 = vadd.f32 0.0, %v905
        %v907 = vpop.f32.mrb[0].mxu0
        %908 = vdwg.mxu0
        %v909 = vadd.f32 %v818, %v903
        %v910 = vadd.f32 %v821, %v906
        %s911 = scalar_lea.vmem %s1, 120
        %v912 = vld [vmem:[%s911] sm:$0xf]
        %v913 = vld [vmem:[%s911 + $0x4] sm:$0xf]
        %v914 = vld [vmem:[%s911 + $0x8] sm:$0xf]
        %v915 = vld [vmem:[%s911 + $0xc] sm:$0xf]
        %v916 = vld [vmem:[%s911 + $0x10] sm:$0xf]
        %v917 = vld [vmem:[%s911 + $0x14] sm:$0xf]
        %v918 = vld [vmem:[%s911 + $0x18] sm:$0xf]
        %v919 = vld [vmem:[%s911 + $0x1c] sm:$0xf]
        %v920 = vld [vmem:[%s911 + $0x20] sm:$0xf]
        %v921 = vld [vmem:[%s911 + $0x24] sm:$0xf]
        %v932 = vunpack.c.l.b16 %v912
        %v933 = vunpack.c.l.b16 %v913
        %v934 = vunpack.c.l.b16 %v914
        %v935 = vunpack.c.l.b16 %v915
        %v936 = vunpack.c.l.b16 %v916
        %v937 = vunpack.c.l.b16 %v917
        %v938 = vunpack.c.l.b16 %v918
        %v939 = vunpack.c.l.b16 %v919
        %v940 = vunpack.c.l.b16 %v920
        %v941 = vunpack.c.l.b16 %v921
        %v942 = vpack.c.b16 %v933, %v932
        %v943 = vpack.c.b16 %v935, %v934
        %v944 = vpack.c.b16 %v937, %v936
        %v945 = vpack.c.b16 %v939, %v938
        %v946 = vpack.c.b16 %v941, %v940
        %v953 = vsel %vm705, %v650, 0
        %955 = vmatprep.subr.bf16.mxu0 0
        %956 = vmatpush1.bf16.msra.mxu0 %v942
        %957 = vmatprep.subr.bf16.mxu0 0
        %958 = vmatpush1.bf16.msra.mxu0 %v943
        %959 = vmatprep.subr.bf16.mxu0 0
        %960 = vmatpush1.bf16.msra.mxu0 %v944
        %961 = vmatprep.subr.bf16.mxu0 0
        %962 = vmatpush1.bf16.msra.mxu0 %v945
        %963 = vmatprep.subr.bf16.mxu0 0
        %964 = vmatpush1.bf16.msra.mxu0 %v946
        %965 = vmatprep.subr.bf16.mxu0 0
        %966 = vmatpush1.bf16.msra.mxu0 0
        %967 = vmatprep.subr.bf16.mxu0 0
        %968 = vmatpush1.bf16.msra.mxu0 0
        %969 = vmatprep.subr.bf16.mxu0 0
        %970 = vmatpush1.bf16.msra.mxu0 0
        %971 = vmatprep.subr.bf16.mxu0 0
        %972 = vmatpush1.bf16.msra.mxu0 0
        %973 = vmatprep.subr.bf16.mxu0 0
        %974 = vmatpush1.bf16.msra.mxu0 0
        %975 = vmatprep.subr.bf16.mxu0 0
        %976 = vmatpush1.bf16.msra.mxu0 0
        %977 = vmatprep.subr.bf16.mxu0 0
        %978 = vmatpush1.bf16.msra.mxu0 0
        %979 = vmatprep.subr.bf16.mxu0 0
        %980 = vmatpush1.bf16.msra.mxu0 0
        %981 = vmatprep.subr.bf16.mxu0 0
        %982 = vmatpush1.bf16.msra.mxu0 0
        %983 = vmatprep.subr.bf16.mxu0 0
        %984 = vmatpush1.bf16.msra.mxu0 0
        %985 = vmatprep.subr.bf16.mxu0 0
        %986 = vmatpush1.bf16.msra.mxu0 0
        %987 = vmatprep.mubr.bf16.mxu0 0
        %988 = vmatmul.mubr.bf16.gmra.mrb[0].mxu0 %v953
        %v989 = vpop.f32.mrb[0].mxu0
        %v990 = vadd.f32 0.0, %v989
        %v991 = vpop.f32.mrb[0].mxu0
        %v992 = vpop.f32.mrb[0].mxu0
        %v993 = vadd.f32 0.0, %v992
        %v994 = vpop.f32.mrb[0].mxu0
        %995 = vdwg.mxu0
        %v996 = vadd.f32 %v909, %v990
        %v997 = vadd.f32 %v910, %v993
        %s998 = scalar_lea.vmem %s1, 160
        %v999 = vld [vmem:[%s998] sm:$0xf]
        %v1000 = vld [vmem:[%s998 + $0x4] sm:$0xf]
        %v1001 = vld [vmem:[%s998 + $0x8] sm:$0xf]
        %v1002 = vld [vmem:[%s998 + $0xc] sm:$0xf]
        %v1003 = vld [vmem:[%s998 + $0x10] sm:$0xf]
        %v1004 = vld [vmem:[%s998 + $0x14] sm:$0xf]
        %v1005 = vld [vmem:[%s998 + $0x18] sm:$0xf]
        %v1006 = vld [vmem:[%s998 + $0x1c] sm:$0xf]
        %v1007 = vld [vmem:[%s998 + $0x20] sm:$0xf]
        %v1008 = vld [vmem:[%s998 + $0x24] sm:$0xf]
        %v1019 = vunpack.c.l.b16 %v999
        %v1020 = vunpack.c.l.b16 %v1000
        %v1021 = vunpack.c.l.b16 %v1001
        %v1022 = vunpack.c.l.b16 %v1002
        %v1023 = vunpack.c.l.b16 %v1003
        %v1024 = vunpack.c.l.b16 %v1004
        %v1025 = vunpack.c.l.b16 %v1005
        %v1026 = vunpack.c.l.b16 %v1006
        %v1027 = vunpack.c.l.b16 %v1007
        %v1028 = vunpack.c.l.b16 %v1008
        %v1029 = vpack.c.b16 %v1020, %v1019
        %v1030 = vpack.c.b16 %v1022, %v1021
        %v1031 = vpack.c.b16 %v1024, %v1023
        %v1032 = vpack.c.b16 %v1026, %v1025
        %v1033 = vpack.c.b16 %v1028, %v1027
        %v1040 = vsel %vm705, %v653, 0
        %1042 = vmatprep.subr.bf16.mxu0 0
        %1043 = vmatpush1.bf16.msra.mxu0 %v1029
        %1044 = vmatprep.subr.bf16.mxu0 0
        %1045 = vmatpush1.bf16.msra.mxu0 %v1030
        %1046 = vmatprep.subr.bf16.mxu0 0
        %1047 = vmatpush1.bf16.msra.mxu0 %v1031
        %1048 = vmatprep.subr.bf16.mxu0 0
        %1049 = vmatpush1.bf16.msra.mxu0 %v1032
        %1050 = vmatprep.subr.bf16.mxu0 0
        %1051 = vmatpush1.bf16.msra.mxu0 %v1033
        %1052 = vmatprep.subr.bf16.mxu0 0
        %1053 = vmatpush1.bf16.msra.mxu0 0
        %1054 = vmatprep.subr.bf16.mxu0 0
        %1055 = vmatpush1.bf16.msra.mxu0 0
        %1056 = vmatprep.subr.bf16.mxu0 0
        %1057 = vmatpush1.bf16.msra.mxu0 0
        %1058 = vmatprep.subr.bf16.mxu0 0
        %1059 = vmatpush1.bf16.msra.mxu0 0
        %1060 = vmatprep.subr.bf16.mxu0 0
        %1061 = vmatpush1.bf16.msra.mxu0 0
        %1062 = vmatprep.subr.bf16.mxu0 0
        %1063 = vmatpush1.bf16.msra.mxu0 0
        %1064 = vmatprep.subr.bf16.mxu0 0
        %1065 = vmatpush1.bf16.msra.mxu0 0
        %1066 = vmatprep.subr.bf16.mxu0 0
        %1067 = vmatpush1.bf16.msra.mxu0 0
        %1068 = vmatprep.subr.bf16.mxu0 0
        %1069 = vmatpush1.bf16.msra.mxu0 0
        %1070 = vmatprep.subr.bf16.mxu0 0
        %1071 = vmatpush1.bf16.msra.mxu0 0
        %1072 = vmatprep.subr.bf16.mxu0 0
        %1073 = vmatpush1.bf16.msra.mxu0 0
        %1074 = vmatprep.mubr.bf16.mxu0 0
        %1075 = vmatmul.mubr.bf16.gmra.mrb[0].mxu0 %v1040
        %v1076 = vpop.f32.mrb[0].mxu0
        %v1077 = vadd.f32 0.0, %v1076
        %v1078 = vpop.f32.mrb[0].mxu0
        %v1079 = vpop.f32.mrb[0].mxu0
        %v1080 = vadd.f32 0.0, %v1079
        %v1081 = vpop.f32.mrb[0].mxu0
        %1082 = vdwg.mxu0
        %v1083 = vadd.f32 %v996, %v1077
        %v1084 = vadd.f32 %v997, %v1080
        %v1085 = vld [vmem:[%s2] sm:$0x1]
        %v1087 = vlaneseq
        %v1088 = vshrl.u32 %v1087, 7
        %v1089 = vsub.s32 0, %v1088
        %v1090 = vrot.slane %v1085, %v1089
        %v1092 = vadd.f32 %v1083, %v1090
        %v1093 = vadd.f32 %v1084, %v1090
        %v1094 = vmax.f32 %v1092, 0.0
        %v1095 = vmax.f32 %v1093, 0.0
        %1096 = vst [vmem:[#allocation2] sm:$0xff] %v1094
        %1097 = vst [vmem:[#allocation2 + $0x8] sm:$0xff] %v1095
        %v1098 = vld [vmem:[#allocation2] ss:$2 sm:$0xff]
        %s1099 = scalar_lea.vmem [#allocation2], 1
        %v1100 = vld [vmem:[%s1099] ss:$2 sm:$0xff]
        %v1101 = vmax.f32 %v1098, %v1100
        %v1102 = vpack.c.bf16 %v1101, %v1101
        %v1103 = vld [vmem:[%s7] sm:$0xf]
        %v1104 = vld [vmem:[%s7 + $0x4] sm:$0xf]
        %v1105 = vld [vmem:[%s7 + $0x8] sm:$0xf]
        %v1106 = vld [vmem:[%s7 + $0xc] sm:$0xf]
        %v1107 = vld [vmem:[%s7 + $0x10] sm:$0xf]
        %v1108 = vld [vmem:[%s7 + $0x14] sm:$0xf]
        %v1109 = vld [vmem:[%s7 + $0x18] sm:$0xf]
        %v1110 = vld [vmem:[%s7 + $0x1c] sm:$0xf]
        %v1111 = vld [vmem:[%s7 + $0x20] sm:$0xf]
        %v1112 = vld [vmem:[%s7 + $0x24] sm:$0xf]
        %v1113 = vld [vmem:[%s7 + $0x28] sm:$0xf]
        %v1114 = vld [vmem:[%s7 + $0x2c] sm:$0xf]
        %v1115 = vld [vmem:[%s7 + $0x30] sm:$0xf]
        %v1116 = vld [vmem:[%s7 + $0x34] sm:$0xf]
        %v1117 = vld [vmem:[%s7 + $0x38] sm:$0xf]
        %v1118 = vld [vmem:[%s7 + $0x3c] sm:$0xf]
        %v1135 = vunpack.c.l.b16 %v1103
        %v1136 = vunpack.c.l.b16 %v1104
        %v1137 = vunpack.c.l.b16 %v1105
        %v1138 = vunpack.c.l.b16 %v1106
        %v1139 = vunpack.c.l.b16 %v1107
        %v1140 = vunpack.c.l.b16 %v1108
        %v1141 = vunpack.c.l.b16 %v1109
        %v1142 = vunpack.c.l.b16 %v1110
        %v1143 = vunpack.c.l.b16 %v1111
        %v1144 = vunpack.c.l.b16 %v1112
        %v1145 = vunpack.c.l.b16 %v1113
        %v1146 = vunpack.c.l.b16 %v1114
        %v1147 = vunpack.c.l.b16 %v1115
        %v1148 = vunpack.c.l.b16 %v1116
        %v1149 = vunpack.c.l.b16 %v1117
        %v1150 = vunpack.c.l.b16 %v1118
        %v1151 = vpack.c.b16 %v1136, %v1135
        %v1152 = vpack.c.b16 %v1138, %v1137
        %v1153 = vpack.c.b16 %v1140, %v1139
        %v1154 = vpack.c.b16 %v1142, %v1141
        %v1155 = vpack.c.b16 %v1144, %v1143
        %v1156 = vpack.c.b16 %v1146, %v1145
        %v1157 = vpack.c.b16 %v1148, %v1147
        %v1158 = vpack.c.b16 %v1150, %v1149
        %1167 = vmatprep.subr.bf16.mxu0 0
        %1168 = vmatpush1.bf16.msra.mxu0 %v1151
        %1169 = vmatprep.subr.bf16.mxu0 0
        %1170 = vmatpush1.bf16.msra.mxu0 %v1152
        %1171 = vmatprep.subr.bf16.mxu0 0
        %1172 = vmatpush1.bf16.msra.mxu0 %v1153
        %1173 = vmatprep.subr.bf16.mxu0 0
        %1174 = vmatpush1.bf16.msra.mxu0 %v1154
        %1175 = vmatprep.subr.bf16.mxu0 0
        %1176 = vmatpush1.bf16.msra.mxu0 %v1155
        %1177 = vmatprep.subr.bf16.mxu0 0
        %1178 = vmatpush1.bf16.msra.mxu0 %v1156
        %1179 = vmatprep.subr.bf16.mxu0 0
        %1180 = vmatpush1.bf16.msra.mxu0 %v1157
        %1181 = vmatprep.subr.bf16.mxu0 0
        %1182 = vmatpush1.bf16.msra.mxu0 %v1158
        %1183 = vmatprep.subr.bf16.mxu0 0
        %1184 = vmatpush1.bf16.msra.mxu0 0
        %1185 = vmatprep.subr.bf16.mxu0 0
        %1186 = vmatpush1.bf16.msra.mxu0 0
        %1187 = vmatprep.subr.bf16.mxu0 0
        %1188 = vmatpush1.bf16.msra.mxu0 0
        %1189 = vmatprep.subr.bf16.mxu0 0
        %1190 = vmatpush1.bf16.msra.mxu0 0
        %1191 = vmatprep.subr.bf16.mxu0 0
        %1192 = vmatpush1.bf16.msra.mxu0 0
        %1193 = vmatprep.subr.bf16.mxu0 0
        %1194 = vmatpush1.bf16.msra.mxu0 0
        %1195 = vmatprep.subr.bf16.mxu0 0
        %1196 = vmatpush1.bf16.msra.mxu0 0
        %1197 = vmatprep.subr.bf16.mxu0 0
        %1198 = vmatpush1.bf16.msra.mxu0 0
        %1199 = vmatprep.mubr.bf16.mxu0 0
        %1200 = vmatmul.mubr.bf16.gmra.mrb[0].mxu0 %v1102
        %v1201 = vpop.f32.mrb[0].mxu0
        %v1202 = vadd.f32 0.0, %v1201
        %v1203 = vpop.f32.mrb[0].mxu0
        %v1204 = vpop.f32.mrb[0].mxu0
        %v1205 = vpop.f32.mrb[0].mxu0
        %1206 = vdwg.mxu0
        %v1207 = vld [vmem:[%s8] sm:$0xf]
        %v1208 = vld [vmem:[%s8 + $0x4] sm:$0xf]
        %v1209 = vld [vmem:[%s8 + $0x8] sm:$0xf]
        %v1210 = vld [vmem:[%s8 + $0xc] sm:$0xf]
        %v1211 = vld [vmem:[%s8 + $0x10] sm:$0xf]
        %v1212 = vld [vmem:[%s8 + $0x14] sm:$0xf]
        %v1213 = vld [vmem:[%s8 + $0x18] sm:$0xf]
        %v1214 = vld [vmem:[%s8 + $0x1c] sm:$0xf]
        %v1215 = vld [vmem:[%s8 + $0x20] sm:$0xf]
        %v1216 = vld [vmem:[%s8 + $0x24] sm:$0xf]
        %v1217 = vld [vmem:[%s8 + $0x28] sm:$0xf]
        %v1218 = vld [vmem:[%s8 + $0x2c] sm:$0xf]
        %v1219 = vld [vmem:[%s8 + $0x30] sm:$0xf]
        %v1220 = vld [vmem:[%s8 + $0x34] sm:$0xf]
        %v1221 = vld [vmem:[%s8 + $0x38] sm:$0xf]
        %v1222 = vld [vmem:[%s8 + $0x3c] sm:$0xf]
        %v1239 = vunpack.c.l.b16 %v1207
        %v1240 = vunpack.c.l.b16 %v1208
        %v1241 = vunpack.c.l.b16 %v1209
        %v1242 = vunpack.c.l.b16 %v1210
        %v1243 = vunpack.c.l.b16 %v1211
        %v1244 = vunpack.c.l.b16 %v1212
        %v1245 = vunpack.c.l.b16 %v1213
        %v1246 = vunpack.c.l.b16 %v1214
        %v1247 = vunpack.c.l.b16 %v1215
        %v1248 = vunpack.c.l.b16 %v1216
        %v1249 = vunpack.c.l.b16 %v1217
        %v1250 = vunpack.c.l.b16 %v1218
        %v1251 = vunpack.c.l.b16 %v1219
        %v1252 = vunpack.c.l.b16 %v1220
        %v1253 = vunpack.c.l.b16 %v1221
        %v1254 = vunpack.c.l.b16 %v1222
        %v1255 = vpack.c.b16 %v1240, %v1239
        %v1256 = vpack.c.b16 %v1242, %v1241
        %v1257 = vpack.c.b16 %v1244, %v1243
        %v1258 = vpack.c.b16 %v1246, %v1245
        %v1259 = vpack.c.b16 %v1248, %v1247
        %v1260 = vpack.c.b16 %v1250, %v1249
        %v1261 = vpack.c.b16 %v1252, %v1251
        %v1262 = vpack.c.b16 %v1254, %v1253
        %1271 = vmatprep.subr.bf16.mxu0 0
        %1272 = vmatpush1.bf16.msra.mxu0 %v1255
        %1273 = vmatprep.subr.bf16.mxu0 0
        %1274 = vmatpush1.bf16.msra.mxu0 %v1256
        %1275 = vmatprep.subr.bf16.mxu0 0
        %1276 = vmatpush1.bf16.msra.mxu0 %v1257
        %1277 = vmatprep.subr.bf16.mxu0 0
        %1278 = vmatpush1.bf16.msra.mxu0 %v1258
        %1279 = vmatprep.subr.bf16.mxu0 0
        %1280 = vmatpush1.bf16.msra.mxu0 %v1259
        %1281 = vmatprep.subr.bf16.mxu0 0
        %1282 = vmatpush1.bf16.msra.mxu0 %v1260
        %1283 = vmatprep.subr.bf16.mxu0 0
        %1284 = vmatpush1.bf16.msra.mxu0 %v1261
        %1285 = vmatprep.subr.bf16.mxu0 0
        %1286 = vmatpush1.bf16.msra.mxu0 %v1262
        %1287 = vmatprep.subr.bf16.mxu0 0
        %1288 = vmatpush1.bf16.msra.mxu0 0
        %1289 = vmatprep.subr.bf16.mxu0 0
        %1290 = vmatpush1.bf16.msra.mxu0 0
        %1291 = vmatprep.subr.bf16.mxu0 0
        %1292 = vmatpush1.bf16.msra.mxu0 0
        %1293 = vmatprep.subr.bf16.mxu0 0
        %1294 = vmatpush1.bf16.msra.mxu0 0
        %1295 = vmatprep.subr.bf16.mxu0 0
        %1296 = vmatpush1.bf16.msra.mxu0 0
        %1297 = vmatprep.subr.bf16.mxu0 0
        %1298 = vmatpush1.bf16.msra.mxu0 0
        %1299 = vmatprep.subr.bf16.mxu0 0
        %1300 = vmatpush1.bf16.msra.mxu0 0
        %1301 = vmatprep.subr.bf16.mxu0 0
        %1302 = vmatpush1.bf16.msra.mxu0 0
        %1303 = vmatprep.mubr.bf16.mxu0 0
        %1304 = vmatmul.mubr.bf16.gmra.mrb[0].mxu0 %v1102
        %v1305 = vpop.f32.mrb[0].mxu0
        %v1306 = vadd.f32 0.0, %v1305
        %v1307 = vpop.f32.mrb[0].mxu0
        %v1308 = vpop.f32.mrb[0].mxu0
        %v1309 = vpop.f32.mrb[0].mxu0
        %1310 = vdwg.mxu0
        %v1311 = vmax.f32 %v1202, %v1306
        %1312 = vst.msk [vmem:[#allocation3] sm:$0xff] %vm705, 0.0
        %vm1313 = vcmask 648192
        %1314 = vst.msk [vmem:[#allocation3 + $0x8] sm:$0x3] %vm1313, 0.0
        %1315 = vst.msk [vmem:[#allocation3 + $0x1] sm:$0xff] %vm705, %v1311
        %v1316 = vld [vmem:[#allocation3] sm:$0xff]
        %v1317 = vpack.c.bf16 %v1316, %v1316
        %v1318 = vld [vmem:[#allocation3 + $0x1] sm:$0xff]
        %v1319 = vpack.c.bf16 %v1318, %v1318
        %v1320 = vld [vmem:[#allocation3 + $0x2] sm:$0xff]
        %v1321 = vpack.c.bf16 %v1320, %v1320
        %v1322 = vld [vmem:[%s3] sm:$0xf]
        %v1323 = vld [vmem:[%s3 + $0x4] sm:$0xf]
        %v1324 = vld [vmem:[%s3 + $0x8] sm:$0xf]
        %v1325 = vld [vmem:[%s3 + $0xc] sm:$0xf]
        %v1326 = vld [vmem:[%s3 + $0x10] sm:$0xf]
        %v1327 = vld [vmem:[%s3 + $0x14] sm:$0xf]
        %v1328 = vld [vmem:[%s3 + $0x18] sm:$0xf]
        %v1329 = vld [vmem:[%s3 + $0x1c] sm:$0xf]
        %v1330 = vld [vmem:[%s3 + $0x20] sm:$0xf]
        %v1331 = vld [vmem:[%s3 + $0x24] sm:$0xf]
        %s1332 = scalar_lea.vmem %s3, 40
        %v1333 = vld [vmem:[%s1332] sm:$0xf]
        %v1334 = vld [vmem:[%s1332 + $0x4] sm:$0xf]
        %v1335 = vld [vmem:[%s1332 + $0x8] sm:$0xf]
        %v1336 = vld [vmem:[%s1332 + $0xc] sm:$0xf]
        %v1337 = vld [vmem:[%s1332 + $0x10] sm:$0xf]
        %v1338 = vld [vmem:[%s1332 + $0x14] sm:$0xf]
        %v1339 = vld [vmem:[%s1332 + $0x18] sm:$0xf]
        %v1340 = vld [vmem:[%s1332 + $0x1c] sm:$0xf]
        %v1341 = vld [vmem:[%s1332 + $0x20] sm:$0xf]
        %v1342 = vld [vmem:[%s1332 + $0x24] sm:$0xf]
        %v1353 = vunpack.c.l.b16 %v1333
        %v1354 = vunpack.c.l.b16 %v1334
        %v1355 = vunpack.c.l.b16 %v1335
        %v1356 = vunpack.c.l.b16 %v1336
        %v1357 = vunpack.c.l.b16 %v1337
        %v1358 = vunpack.c.l.b16 %v1338
        %v1359 = vunpack.c.l.b16 %v1339
        %v1360 = vunpack.c.l.b16 %v1340
        %v1361 = vunpack.c.l.b16 %v1341
        %v1362 = vunpack.c.l.b16 %v1342
        %v1363 = vpack.c.b16 %v1354, %v1353
        %v1364 = vpack.c.b16 %v1356, %v1355
        %v1365 = vpack.c.b16 %v1358, %v1357
        %v1366 = vpack.c.b16 %v1360, %v1359
        %v1367 = vpack.c.b16 %v1362, %v1361
        %v1374 = vsel %vm705, %v1319, 0
        %1376 = vmatprep.subr.bf16.mxu0 0
        %1377 = vmatpush1.bf16.msra.mxu0 %v1363
        %1378 = vmatprep.subr.bf16.mxu0 0
        %1379 = vmatpush1.bf16.msra.mxu0 %v1364
        %1380 = vmatprep.subr.bf16.mxu0 0
        %1381 = vmatpush1.bf16.msra.mxu0 %v1365
        %1382 = vmatprep.subr.bf16.mxu0 0
        %1383 = vmatpush1.bf16.msra.mxu0 %v1366
        %1384 = vmatprep.subr.bf16.mxu0 0
        %1385 = vmatpush1.bf16.msra.mxu0 %v1367
        %1386 = vmatprep.subr.bf16.mxu0 0
        %1387 = vmatpush1.bf16.msra.mxu0 0
        %1388 = vmatprep.subr.bf16.mxu0 0
        %1389 = vmatpush1.bf16.msra.mxu0 0
        %1390 = vmatprep.subr.bf16.mxu0 0
        %1391 = vmatpush1.bf16.msra.mxu0 0
        %1392 = vmatprep.subr.bf16.mxu0 0
        %1393 = vmatpush1.bf16.msra.mxu0 0
        %1394 = vmatprep.subr.bf16.mxu0 0
        %1395 = vmatpush1.bf16.msra.mxu0 0
        %1396 = vmatprep.subr.bf16.mxu0 0
        %1397 = vmatpush1.bf16.msra.mxu0 0
        %1398 = vmatprep.subr.bf16.mxu0 0
        %1399 = vmatpush1.bf16.msra.mxu0 0
        %1400 = vmatprep.subr.bf16.mxu0 0
        %1401 = vmatpush1.bf16.msra.mxu0 0
        %1402 = vmatprep.subr.bf16.mxu0 0
        %1403 = vmatpush1.bf16.msra.mxu0 0
        %1404 = vmatprep.subr.bf16.mxu0 0
        %1405 = vmatpush1.bf16.msra.mxu0 0
        %1406 = vmatprep.subr.bf16.mxu0 0
        %1407 = vmatpush1.bf16.msra.mxu0 0
        %1408 = vmatprep.mubr.bf16.mxu0 0
        %1409 = vmatmul.mubr.bf16.gmra.mrb[0].mxu0 %v1374
        %v1410 = vpop.f32.mrb[0].mxu0
        %v1411 = vadd.f32 0.0, %v1410
        %v1412 = vpop.f32.mrb[0].mxu0
        %v1413 = vpop.f32.mrb[0].mxu0
        %v1414 = vpop.f32.mrb[0].mxu0
        %1415 = vdwg.mxu0
        %v1426 = vunpack.c.l.b16 %v1322
        %v1427 = vunpack.c.l.b16 %v1323
        %v1428 = vunpack.c.l.b16 %v1324
        %v1429 = vunpack.c.l.b16 %v1325
        %v1430 = vunpack.c.l.b16 %v1326
        %v1431 = vunpack.c.l.b16 %v1327
        %v1432 = vunpack.c.l.b16 %v1328
        %v1433 = vunpack.c.l.b16 %v1329
        %v1434 = vunpack.c.l.b16 %v1330
        %v1435 = vunpack.c.l.b16 %v1331
        %v1436 = vpack.c.b16 %v1427, %v1426
        %v1437 = vpack.c.b16 %v1429, %v1428
        %v1438 = vpack.c.b16 %v1431, %v1430
        %v1439 = vpack.c.b16 %v1433, %v1432
        %v1440 = vpack.c.b16 %v1435, %v1434
        %v1447 = vsel %vm705, %v1317, 0
        %1449 = vmatprep.subr.bf16.mxu0 0
        %1450 = vmatpush1.bf16.msra.mxu0 %v1436
        %1451 = vmatprep.subr.bf16.mxu0 0
        %1452 = vmatpush1.bf16.msra.mxu0 %v1437
        %1453 = vmatprep.subr.bf16.mxu0 0
        %1454 = vmatpush1.bf16.msra.mxu0 %v1438
        %1455 = vmatprep.subr.bf16.mxu0 0
        %1456 = vmatpush1.bf16.msra.mxu0 %v1439
        %1457 = vmatprep.subr.bf16.mxu0 0
        %1458 = vmatpush1.bf16.msra.mxu0 %v1440
        %1459 = vmatprep.subr.bf16.mxu0 0
        %1460 = vmatpush1.bf16.msra.mxu0 0
        %1461 = vmatprep.subr.bf16.mxu0 0
        %1462 = vmatpush1.bf16.msra.mxu0 0
        %1463 = vmatprep.subr.bf16.mxu0 0
        %1464 = vmatpush1.bf16.msra.mxu0 0
        %1465 = vmatprep.subr.bf16.mxu0 0
        %1466 = vmatpush1.bf16.msra.mxu0 0
        %1467 = vmatprep.subr.bf16.mxu0 0
        %1468 = vmatpush1.bf16.msra.mxu0 0
        %1469 = vmatprep.subr.bf16.mxu0 0
        %1470 = vmatpush1.bf16.msra.mxu0 0
        %1471 = vmatprep.subr.bf16.mxu0 0
        %1472 = vmatpush1.bf16.msra.mxu0 0
        %1473 = vmatprep.subr.bf16.mxu0 0
        %1474 = vmatpush1.bf16.msra.mxu0 0
        %1475 = vmatprep.subr.bf16.mxu0 0
        %1476 = vmatpush1.bf16.msra.mxu0 0
        %1477 = vmatprep.subr.bf16.mxu0 0
        %1478 = vmatpush1.bf16.msra.mxu0 0
        %1479 = vmatprep.subr.bf16.mxu0 0
        %1480 = vmatpush1.bf16.msra.mxu0 0
        %1481 = vmatprep.mubr.bf16.mxu0 0
        %1482 = vmatmul.mubr.bf16.gmra.mrb[0].mxu0 %v1447
        %v1483 = vpop.f32.mrb[0].mxu0
        %v1484 = vadd.f32 %v1411, %v1483
        %v1485 = vpop.f32.mrb[0].mxu0
        %v1486 = vpop.f32.mrb[0].mxu0
        %v1487 = vpop.f32.mrb[0].mxu0
        %1488 = vdwg.mxu0
        %s1489 = scalar_lea.vmem %s3, 80
        %v1490 = vld [vmem:[%s1489] sm:$0xf]
        %v1491 = vld [vmem:[%s1489 + $0x4] sm:$0xf]
        %v1492 = vld [vmem:[%s1489 + $0x8] sm:$0xf]
        %v1493 = vld [vmem:[%s1489 + $0xc] sm:$0xf]
        %v1494 = vld [vmem:[%s1489 + $0x10] sm:$0xf]
        %v1495 = vld [vmem:[%s1489 + $0x14] sm:$0xf]
        %v1496 = vld [vmem:[%s1489 + $0x18] sm:$0xf]
        %v1497 = vld [vmem:[%s1489 + $0x1c] sm:$0xf]
        %v1498 = vld [vmem:[%s1489 + $0x20] sm:$0xf]
        %v1499 = vld [vmem:[%s1489 + $0x24] sm:$0xf]
        %v1510 = vunpack.c.l.b16 %v1490
        %v1511 = vunpack.c.l.b16 %v1491
        %v1512 = vunpack.c.l.b16 %v1492
        %v1513 = vunpack.c.l.b16 %v1493
        %v1514 = vunpack.c.l.b16 %v1494
        %v1515 = vunpack.c.l.b16 %v1495
        %v1516 = vunpack.c.l.b16 %v1496
        %v1517 = vunpack.c.l.b16 %v1497
        %v1518 = vunpack.c.l.b16 %v1498
        %v1519 = vunpack.c.l.b16 %v1499
        %v1520 = vpack.c.b16 %v1511, %v1510
        %v1521 = vpack.c.b16 %v1513, %v1512
        %v1522 = vpack.c.b16 %v1515, %v1514
        %v1523 = vpack.c.b16 %v1517, %v1516
        %v1524 = vpack.c.b16 %v1519, %v1518
        %v1531 = vsel %vm705, %v1321, 0
        %1533 = vmatprep.subr.bf16.mxu0 0
        %1534 = vmatpush1.bf16.msra.mxu0 %v1520
        %1535 = vmatprep.subr.bf16.mxu0 0
        %1536 = vmatpush1.bf16.msra.mxu0 %v1521
        %1537 = vmatprep.subr.bf16.mxu0 0
        %1538 = vmatpush1.bf16.msra.mxu0 %v1522
        %1539 = vmatprep.subr.bf16.mxu0 0
        %1540 = vmatpush1.bf16.msra.mxu0 %v1523
        %1541 = vmatprep.subr.bf16.mxu0 0
        %1542 = vmatpush1.bf16.msra.mxu0 %v1524
        %1543 = vmatprep.subr.bf16.mxu0 0
        %1544 = vmatpush1.bf16.msra.mxu0 0
        %1545 = vmatprep.subr.bf16.mxu0 0
        %1546 = vmatpush1.bf16.msra.mxu0 0
        %1547 = vmatprep.subr.bf16.mxu0 0
        %1548 = vmatpush1.bf16.msra.mxu0 0
        %1549 = vmatprep.subr.bf16.mxu0 0
        %1550 = vmatpush1.bf16.msra.mxu0 0
        %1551 = vmatprep.subr.bf16.mxu0 0
        %1552 = vmatpush1.bf16.msra.mxu0 0
        %1553 = vmatprep.subr.bf16.mxu0 0
        %1554 = vmatpush1.bf16.msra.mxu0 0
        %1555 = vmatprep.subr.bf16.mxu0 0
        %1556 = vmatpush1.bf16.msra.mxu0 0
        %1557 = vmatprep.subr.bf16.mxu0 0
        %1558 = vmatpush1.bf16.msra.mxu0 0
        %1559 = vmatprep.subr.bf16.mxu0 0
        %1560 = vmatpush1.bf16.msra.mxu0 0
        %1561 = vmatprep.subr.bf16.mxu0 0
        %1562 = vmatpush1.bf16.msra.mxu0 0
        %1563 = vmatprep.subr.bf16.mxu0 0
        %1564 = vmatpush1.bf16.msra.mxu0 0
        %1565 = vmatprep.mubr.bf16.mxu0 0
        %1566 = vmatmul.mubr.bf16.gmra.mrb[0].mxu0 %v1531
        %v1567 = vpop.f32.mrb[0].mxu0
        %v1568 = vadd.f32 0.0, %v1567
        %v1569 = vpop.f32.mrb[0].mxu0
        %v1570 = vpop.f32.mrb[0].mxu0
        %v1571 = vpop.f32.mrb[0].mxu0
        %1572 = vdwg.mxu0
        %v1573 = vadd.f32 %v1484, %v1568
        %v1574 = vld [vmem:[%s4] sm:$0x1]
        %v1576 = vlaneseq
        %v1577 = vshrl.u32 %v1576, 7
        %v1578 = vsub.s32 0, %v1577
        %v1579 = vrot.slane %v1574, %v1578
        %v1581 = vadd.f32 %v1573, %v1579
        %v1582 = vmax.f32 %v1581, 0.0
        %1583 = vst [vmem:[#allocation2] sm:$0xff] %v1582
        %v1584 = vld [vmem:[#allocation2] ss:$2 sm:$0xf]
        %v1585 = vld [vmem:[%s1099] ss:$2 sm:$0xf]
        %v1586 = vmax.f32 %v1584, %v1585
        %v1587 = vpack.c.bf16 %v1586, %v1586
        %v1588 = vld [vmem:[%s9] sm:$0xf]
        %v1589 = vld [vmem:[%s9 + $0x4] sm:$0xf]
        %v1590 = vld [vmem:[%s9 + $0x8] sm:$0xf]
        %v1591 = vld [vmem:[%s9 + $0xc] sm:$0xf]
        %v1592 = vld [vmem:[%s9 + $0x10] sm:$0xf]
        %v1593 = vld [vmem:[%s9 + $0x14] sm:$0xf]
        %v1594 = vld [vmem:[%s9 + $0x18] sm:$0xf]
        %v1595 = vld [vmem:[%s9 + $0x1c] sm:$0xf]
        %v1596 = vld [vmem:[%s9 + $0x20] sm:$0xf]
        %v1597 = vld [vmem:[%s9 + $0x24] sm:$0xf]
        %v1598 = vld [vmem:[%s9 + $0x28] sm:$0xf]
        %v1599 = vld [vmem:[%s9 + $0x2c] sm:$0xf]
        %v1600 = vld [vmem:[%s9 + $0x30] sm:$0xf]
        %v1601 = vld [vmem:[%s9 + $0x34] sm:$0xf]
        %v1602 = vld [vmem:[%s9 + $0x38] sm:$0xf]
        %v1603 = vld [vmem:[%s9 + $0x3c] sm:$0xf]
        %v1620 = vunpack.c.l.b16 %v1588
        %v1621 = vunpack.c.l.b16 %v1589
        %v1622 = vunpack.c.l.b16 %v1590
        %v1623 = vunpack.c.l.b16 %v1591
        %v1624 = vunpack.c.l.b16 %v1592
        %v1625 = vunpack.c.l.b16 %v1593
        %v1626 = vunpack.c.l.b16 %v1594
        %v1627 = vunpack.c.l.b16 %v1595
        %v1628 = vunpack.c.l.b16 %v1596
        %v1629 = vunpack.c.l.b16 %v1597
        %v1630 = vunpack.c.l.b16 %v1598
        %v1631 = vunpack.c.l.b16 %v1599
        %v1632 = vunpack.c.l.b16 %v1600
        %v1633 = vunpack.c.l.b16 %v1601
        %v1634 = vunpack.c.l.b16 %v1602
        %v1635 = vunpack.c.l.b16 %v1603
        %v1636 = vpack.c.b16 %v1621, %v1620
        %v1637 = vpack.c.b16 %v1623, %v1622
        %v1638 = vpack.c.b16 %v1625, %v1624
        %v1639 = vpack.c.b16 %v1627, %v1626
        %v1640 = vpack.c.b16 %v1629, %v1628
        %v1641 = vpack.c.b16 %v1631, %v1630
        %v1642 = vpack.c.b16 %v1633, %v1632
        %v1643 = vpack.c.b16 %v1635, %v1634
        %1652 = vmatprep.subr.bf16.mxu0 0
        %1653 = vmatpush1.bf16.msra.mxu0 %v1636
        %1654 = vmatprep.subr.bf16.mxu0 0
        %1655 = vmatpush1.bf16.msra.mxu0 %v1637
        %1656 = vmatprep.subr.bf16.mxu0 0
        %1657 = vmatpush1.bf16.msra.mxu0 %v1638
        %1658 = vmatprep.subr.bf16.mxu0 0
        %1659 = vmatpush1.bf16.msra.mxu0 %v1639
        %1660 = vmatprep.subr.bf16.mxu0 0
        %1661 = vmatpush1.bf16.msra.mxu0 %v1640
        %1662 = vmatprep.subr.bf16.mxu0 0
        %1663 = vmatpush1.bf16.msra.mxu0 %v1641
        %1664 = vmatprep.subr.bf16.mxu0 0
        %1665 = vmatpush1.bf16.msra.mxu0 %v1642
        %1666 = vmatprep.subr.bf16.mxu0 0
        %1667 = vmatpush1.bf16.msra.mxu0 %v1643
        %1668 = vmatprep.subr.bf16.mxu0 0
        %1669 = vmatpush1.bf16.msra.mxu0 0
        %1670 = vmatprep.subr.bf16.mxu0 0
        %1671 = vmatpush1.bf16.msra.mxu0 0
        %1672 = vmatprep.subr.bf16.mxu0 0
        %1673 = vmatpush1.bf16.msra.mxu0 0
        %1674 = vmatprep.subr.bf16.mxu0 0
        %1675 = vmatpush1.bf16.msra.mxu0 0
        %1676 = vmatprep.subr.bf16.mxu0 0
        %1677 = vmatpush1.bf16.msra.mxu0 0
        %1678 = vmatprep.subr.bf16.mxu0 0
        %1679 = vmatpush1.bf16.msra.mxu0 0
        %1680 = vmatprep.subr.bf16.mxu0 0
        %1681 = vmatpush1.bf16.msra.mxu0 0
        %1682 = vmatprep.subr.bf16.mxu0 0
        %1683 = vmatpush1.bf16.msra.mxu0 0
        %1684 = vmatprep.mubr.bf16.mxu0 0
        %1685 = vmatmul.mubr.bf16.gmra.mrb[0].mxu0 %v1587
        %v1686 = vpop.f32.mrb[0].mxu0
        %v1687 = vadd.f32 0.0, %v1686
        %v1688 = vpop.f32.mrb[0].mxu0
        %v1689 = vpop.f32.mrb[0].mxu0
        %v1690 = vpop.f32.mrb[0].mxu0
        %1691 = vdwg.mxu0
        %v1692 = vld [vmem:[%s10] sm:$0xf]
        %v1693 = vld [vmem:[%s10 + $0x4] sm:$0xf]
        %v1694 = vld [vmem:[%s10 + $0x8] sm:$0xf]
        %v1695 = vld [vmem:[%s10 + $0xc] sm:$0xf]
        %v1696 = vld [vmem:[%s10 + $0x10] sm:$0xf]
        %v1697 = vld [vmem:[%s10 + $0x14] sm:$0xf]
        %v1698 = vld [vmem:[%s10 + $0x18] sm:$0xf]
        %v1699 = vld [vmem:[%s10 + $0x1c] sm:$0xf]
        %v1700 = vld [vmem:[%s10 + $0x20] sm:$0xf]
        %v1701 = vld [vmem:[%s10 + $0x24] sm:$0xf]
        %v1702 = vld [vmem:[%s10 + $0x28] sm:$0xf]
        %v1703 = vld [vmem:[%s10 + $0x2c] sm:$0xf]
        %v1704 = vld [vmem:[%s10 + $0x30] sm:$0xf]
        %v1705 = vld [vmem:[%s10 + $0x34] sm:$0xf]
        %v1706 = vld [vmem:[%s10 + $0x38] sm:$0xf]
        %v1707 = vld [vmem:[%s10 + $0x3c] sm:$0xf]
        %v1724 = vunpack.c.l.b16 %v1692
        %v1725 = vunpack.c.l.b16 %v1693
        %v1726 = vunpack.c.l.b16 %v1694
        %v1727 = vunpack.c.l.b16 %v1695
        %v1728 = vunpack.c.l.b16 %v1696
        %v1729 = vunpack.c.l.b16 %v1697
        %v1730 = vunpack.c.l.b16 %v1698
        %v1731 = vunpack.c.l.b16 %v1699
        %v1732 = vunpack.c.l.b16 %v1700
        %v1733 = vunpack.c.l.b16 %v1701
        %v1734 = vunpack.c.l.b16 %v1702
        %v1735 = vunpack.c.l.b16 %v1703
        %v1736 = vunpack.c.l.b16 %v1704
        %v1737 = vunpack.c.l.b16 %v1705
        %v1738 = vunpack.c.l.b16 %v1706
        %v1739 = vunpack.c.l.b16 %v1707
        %v1740 = vpack.c.b16 %v1725, %v1724
        %v1741 = vpack.c.b16 %v1727, %v1726
        %v1742 = vpack.c.b16 %v1729, %v1728
        %v1743 = vpack.c.b16 %v1731, %v1730
        %v1744 = vpack.c.b16 %v1733, %v1732
        %v1745 = vpack.c.b16 %v1735, %v1734
        %v1746 = vpack.c.b16 %v1737, %v1736
        %v1747 = vpack.c.b16 %v1739, %v1738
        %1756 = vmatprep.subr.bf16.mxu0 0
        %1757 = vmatpush1.bf16.msra.mxu0 %v1740
        %1758 = vmatprep.subr.bf16.mxu0 0
        %1759 = vmatpush1.bf16.msra.mxu0 %v1741
        %1760 = vmatprep.subr.bf16.mxu0 0
        %1761 = vmatpush1.bf16.msra.mxu0 %v1742
        %1762 = vmatprep.subr.bf16.mxu0 0
        %1763 = vmatpush1.bf16.msra.mxu0 %v1743
        %1764 = vmatprep.subr.bf16.mxu0 0
        %1765 = vmatpush1.bf16.msra.mxu0 %v1744
        %1766 = vmatprep.subr.bf16.mxu0 0
        %1767 = vmatpush1.bf16.msra.mxu0 %v1745
        %1768 = vmatprep.subr.bf16.mxu0 0
        %1769 = vmatpush1.bf16.msra.mxu0 %v1746
        %1770 = vmatprep.subr.bf16.mxu0 0
        %1771 = vmatpush1.bf16.msra.mxu0 %v1747
        %1772 = vmatprep.subr.bf16.mxu0 0
        %1773 = vmatpush1.bf16.msra.mxu0 0
        %1774 = vmatprep.subr.bf16.mxu0 0
        %1775 = vmatpush1.bf16.msra.mxu0 0
        %1776 = vmatprep.subr.bf16.mxu0 0
        %1777 = vmatpush1.bf16.msra.mxu0 0
        %1778 = vmatprep.subr.bf16.mxu0 0
        %1779 = vmatpush1.bf16.msra.mxu0 0
        %1780 = vmatprep.subr.bf16.mxu0 0
        %1781 = vmatpush1.bf16.msra.mxu0 0
        %1782 = vmatprep.subr.bf16.mxu0 0
        %1783 = vmatpush1.bf16.msra.mxu0 0
        %1784 = vmatprep.subr.bf16.mxu0 0
        %1785 = vmatpush1.bf16.msra.mxu0 0
        %1786 = vmatprep.subr.bf16.mxu0 0
        %1787 = vmatpush1.bf16.msra.mxu0 0
        %1788 = vmatprep.mubr.bf16.mxu0 0
        %1789 = vmatmul.mubr.bf16.gmra.mrb[0].mxu0 %v1587
        %v1790 = vpop.f32.mrb[0].mxu0
        %v1791 = vadd.f32 0.0, %v1790
        %v1792 = vpop.f32.mrb[0].mxu0
        %v1793 = vpop.f32.mrb[0].mxu0
        %v1794 = vpop.f32.mrb[0].mxu0
        %1795 = vdwg.mxu0
        %v1796 = vmax.f32 %v1687, %v1791
        %vm1797 = vcmask 783360
        %1798 = vst.msk [vmem:[#allocation4] sm:$0x3f] %vm1797, 0.0
        %vm1799 = vcmask 781312
        %1800 = vst.msk [vmem:[#allocation4 + $0x1] sm:$0xf] %vm1799, %v1796
        %v1801 = vld [vmem:[#allocation4] sm:$0xf]
        %v1802 = vpack.c.bf16 %v1801, %v1801
        %v1803 = vld [vmem:[#allocation4 + $0x1] sm:$0xf]
        %v1804 = vpack.c.bf16 %v1803, %v1803
        %v1805 = vld [vmem:[#allocation4 + $0x2] sm:$0xf]
        %v1806 = vpack.c.bf16 %v1805, %v1805
        %v1807 = vld [vmem:[%s5] sm:$0xf]
        %v1808 = vld [vmem:[%s5 + $0x4] sm:$0xf]
        %v1809 = vld [vmem:[%s5 + $0x8] sm:$0xf]
        %v1810 = vld [vmem:[%s5 + $0xc] sm:$0xf]
        %v1811 = vld [vmem:[%s5 + $0x10] sm:$0xf]
        %v1812 = vld [vmem:[%s5 + $0x14] sm:$0xf]
        %v1813 = vld [vmem:[%s5 + $0x18] sm:$0xf]
        %v1814 = vld [vmem:[%s5 + $0x1c] sm:$0xf]
        %v1815 = vld [vmem:[%s5 + $0x20] sm:$0xf]
        %v1816 = vld [vmem:[%s5 + $0x24] sm:$0xf]
        %v1817 = vld [vmem:[%s5 + $0x28] sm:$0xf]
        %v1818 = vld [vmem:[%s5 + $0x2c] sm:$0xf]
        %s1819 = scalar_lea.vmem %s5, 48
        %v1820 = vld [vmem:[%s1819] sm:$0xf]
        %v1821 = vld [vmem:[%s1819 + $0x4] sm:$0xf]
        %v1822 = vld [vmem:[%s1819 + $0x8] sm:$0xf]
        %v1823 = vld [vmem:[%s1819 + $0xc] sm:$0xf]
        %v1824 = vld [vmem:[%s1819 + $0x10] sm:$0xf]
        %v1825 = vld [vmem:[%s1819 + $0x14] sm:$0xf]
        %v1826 = vld [vmem:[%s1819 + $0x18] sm:$0xf]
        %v1827 = vld [vmem:[%s1819 + $0x1c] sm:$0xf]
        %v1828 = vld [vmem:[%s1819 + $0x20] sm:$0xf]
        %v1829 = vld [vmem:[%s1819 + $0x24] sm:$0xf]
        %v1830 = vld [vmem:[%s1819 + $0x28] sm:$0xf]
        %v1831 = vld [vmem:[%s1819 + $0x2c] sm:$0xf]
        %v1844 = vunpack.c.l.b16 %v1820
        %v1845 = vunpack.c.l.b16 %v1821
        %v1846 = vunpack.c.l.b16 %v1822
        %v1847 = vunpack.c.l.b16 %v1823
        %v1848 = vunpack.c.l.b16 %v1824
        %v1849 = vunpack.c.l.b16 %v1825
        %v1850 = vunpack.c.l.b16 %v1826
        %v1851 = vunpack.c.l.b16 %v1827
        %v1852 = vunpack.c.l.b16 %v1828
        %v1853 = vunpack.c.l.b16 %v1829
        %v1854 = vunpack.c.l.b16 %v1830
        %v1855 = vunpack.c.l.b16 %v1831
        %v1856 = vpack.c.b16 %v1845, %v1844
        %v1857 = vpack.c.b16 %v1847, %v1846
        %v1858 = vpack.c.b16 %v1849, %v1848
        %v1859 = vpack.c.b16 %v1851, %v1850
        %v1860 = vpack.c.b16 %v1853, %v1852
        %v1861 = vpack.c.b16 %v1855, %v1854
        %vm1868 = vcmask 785408
        %v1870 = vsel %vm1868, %v1804, 0
        %1872 = vmatprep.subr.bf16.mxu0 0
        %1873 = vmatpush1.bf16.msra.mxu0 %v1856
        %1874 = vmatprep.subr.bf16.mxu0 0
        %1875 = vmatpush1.bf16.msra.mxu0 %v1857
        %1876 = vmatprep.subr.bf16.mxu0 0
        %1877 = vmatpush1.bf16.msra.mxu0 %v1858
        %1878 = vmatprep.subr.bf16.mxu0 0
        %1879 = vmatpush1.bf16.msra.mxu0 %v1859
        %1880 = vmatprep.subr.bf16.mxu0 0
        %1881 = vmatpush1.bf16.msra.mxu0 %v1860
        %1882 = vmatprep.subr.bf16.mxu0 0
        %1883 = vmatpush1.bf16.msra.mxu0 %v1861
        %1884 = vmatprep.subr.bf16.mxu0 0
        %1885 = vmatpush1.bf16.msra.mxu0 0
        %1886 = vmatprep.subr.bf16.mxu0 0
        %1887 = vmatpush1.bf16.msra.mxu0 0
        %1888 = vmatprep.subr.bf16.mxu0 0
        %1889 = vmatpush1.bf16.msra.mxu0 0
        %1890 = vmatprep.subr.bf16.mxu0 0
        %1891 = vmatpush1.bf16.msra.mxu0 0
        %1892 = vmatprep.subr.bf16.mxu0 0
        %1893 = vmatpush1.bf16.msra.mxu0 0
        %1894 = vmatprep.subr.bf16.mxu0 0
        %1895 = vmatpush1.bf16.msra.mxu0 0
        %1896 = vmatprep.subr.bf16.mxu0 0
        %1897 = vmatpush1.bf16.msra.mxu0 0
        %1898 = vmatprep.subr.bf16.mxu0 0
        %1899 = vmatpush1.bf16.msra.mxu0 0
        %1900 = vmatprep.subr.bf16.mxu0 0
        %1901 = vmatpush1.bf16.msra.mxu0 0
        %1902 = vmatprep.subr.bf16.mxu0 0
        %1903 = vmatpush1.bf16.msra.mxu0 0
        %1904 = vmatprep.mubr.bf16.mxu0 0
        %1905 = vmatmul.mubr.bf16.gmra.mrb[0].mxu0 %v1870
        %v1906 = vpop.f32.mrb[0].mxu0
        %v1907 = vadd.f32 0.0, %v1906
        %v1908 = vpop.f32.mrb[0].mxu0
        %v1909 = vpop.f32.mrb[0].mxu0
        %v1910 = vpop.f32.mrb[0].mxu0
        %1911 = vdwg.mxu0
        %v1924 = vunpack.c.l.b16 %v1807
        %v1925 = vunpack.c.l.b16 %v1808
        %v1926 = vunpack.c.l.b16 %v1809
        %v1927 = vunpack.c.l.b16 %v1810
        %v1928 = vunpack.c.l.b16 %v1811
        %v1929 = vunpack.c.l.b16 %v1812
        %v1930 = vunpack.c.l.b16 %v1813
        %v1931 = vunpack.c.l.b16 %v1814
        %v1932 = vunpack.c.l.b16 %v1815
        %v1933 = vunpack.c.l.b16 %v1816
        %v1934 = vunpack.c.l.b16 %v1817
        %v1935 = vunpack.c.l.b16 %v1818
        %v1936 = vpack.c.b16 %v1925, %v1924
        %v1937 = vpack.c.b16 %v1927, %v1926
        %v1938 = vpack.c.b16 %v1929, %v1928
        %v1939 = vpack.c.b16 %v1931, %v1930
        %v1940 = vpack.c.b16 %v1933, %v1932
        %v1941 = vpack.c.b16 %v1935, %v1934
        %v1949 = vsel %vm1868, %v1802, 0
        %1951 = vmatprep.subr.bf16.mxu0 0
        %1952 = vmatpush1.bf16.msra.mxu0 %v1936
        %1953 = vmatprep.subr.bf16.mxu0 0
        %1954 = vmatpush1.bf16.msra.mxu0 %v1937
        %1955 = vmatprep.subr.bf16.mxu0 0
        %1956 = vmatpush1.bf16.msra.mxu0 %v1938
        %1957 = vmatprep.subr.bf16.mxu0 0
        %1958 = vmatpush1.bf16.msra.mxu0 %v1939
        %1959 = vmatprep.subr.bf16.mxu0 0
        %1960 = vmatpush1.bf16.msra.mxu0 %v1940
        %1961 = vmatprep.subr.bf16.mxu0 0
        %1962 = vmatpush1.bf16.msra.mxu0 %v1941
        %1963 = vmatprep.subr.bf16.mxu0 0
        %1964 = vmatpush1.bf16.msra.mxu0 0
        %1965 = vmatprep.subr.bf16.mxu0 0
        %1966 = vmatpush1.bf16.msra.mxu0 0
        %1967 = vmatprep.subr.bf16.mxu0 0
        %1968 = vmatpush1.bf16.msra.mxu0 0
        %1969 = vmatprep.subr.bf16.mxu0 0
        %1970 = vmatpush1.bf16.msra.mxu0 0
        %1971 = vmatprep.subr.bf16.mxu0 0
        %1972 = vmatpush1.bf16.msra.mxu0 0
        %1973 = vmatprep.subr.bf16.mxu0 0
        %1974 = vmatpush1.bf16.msra.mxu0 0
        %1975 = vmatprep.subr.bf16.mxu0 0
        %1976 = vmatpush1.bf16.msra.mxu0 0
        %1977 = vmatprep.subr.bf16.mxu0 0
        %1978 = vmatpush1.bf16.msra.mxu0 0
        %1979 = vmatprep.subr.bf16.mxu0 0
        %1980 = vmatpush1.bf16.msra.mxu0 0
        %1981 = vmatprep.subr.bf16.mxu0 0
        %1982 = vmatpush1.bf16.msra.mxu0 0
        %1983 = vmatprep.mubr.bf16.mxu0 0
        %1984 = vmatmul.mubr.bf16.gmra.mrb[0].mxu0 %v1949
        %v1985 = vpop.f32.mrb[0].mxu0
        %v1986 = vadd.f32 %v1907, %v1985
        %v1987 = vpop.f32.mrb[0].mxu0
        %v1988 = vpop.f32.mrb[0].mxu0
        %v1989 = vpop.f32.mrb[0].mxu0
        %1990 = vdwg.mxu0
        %s1991 = scalar_lea.vmem %s5, 96
        %v1992 = vld [vmem:[%s1991] sm:$0xf]
        %v1993 = vld [vmem:[%s1991 + $0x4] sm:$0xf]
        %v1994 = vld [vmem:[%s1991 + $0x8] sm:$0xf]
        %v1995 = vld [vmem:[%s1991 + $0xc] sm:$0xf]
        %v1996 = vld [vmem:[%s1991 + $0x10] sm:$0xf]
        %v1997 = vld [vmem:[%s1991 + $0x14] sm:$0xf]
        %v1998 = vld [vmem:[%s1991 + $0x18] sm:$0xf]
        %v1999 = vld [vmem:[%s1991 + $0x1c] sm:$0xf]
        %v2000 = vld [vmem:[%s1991 + $0x20] sm:$0xf]
        %v2001 = vld [vmem:[%s1991 + $0x24] sm:$0xf]
        %v2002 = vld [vmem:[%s1991 + $0x28] sm:$0xf]
        %v2003 = vld [vmem:[%s1991 + $0x2c] sm:$0xf]
        %v2016 = vunpack.c.l.b16 %v1992
        %v2017 = vunpack.c.l.b16 %v1993
        %v2018 = vunpack.c.l.b16 %v1994
        %v2019 = vunpack.c.l.b16 %v1995
        %v2020 = vunpack.c.l.b16 %v1996
        %v2021 = vunpack.c.l.b16 %v1997
        %v2022 = vunpack.c.l.b16 %v1998
        %v2023 = vunpack.c.l.b16 %v1999
        %v2024 = vunpack.c.l.b16 %v2000
        %v2025 = vunpack.c.l.b16 %v2001
        %v2026 = vunpack.c.l.b16 %v2002
        %v2027 = vunpack.c.l.b16 %v2003
        %v2028 = vpack.c.b16 %v2017, %v2016
        %v2029 = vpack.c.b16 %v2019, %v2018
        %v2030 = vpack.c.b16 %v2021, %v2020
        %v2031 = vpack.c.b16 %v2023, %v2022
        %v2032 = vpack.c.b16 %v2025, %v2024
        %v2033 = vpack.c.b16 %v2027, %v2026
        %v2041 = vsel %vm1868, %v1806, 0
        %2043 = vmatprep.subr.bf16.mxu0 0
        %2044 = vmatpush1.bf16.msra.mxu0 %v2028
        %2045 = vmatprep.subr.bf16.mxu0 0
        %2046 = vmatpush1.bf16.msra.mxu0 %v2029
        %2047 = vmatprep.subr.bf16.mxu0 0
        %2048 = vmatpush1.bf16.msra.mxu0 %v2030
        %2049 = vmatprep.subr.bf16.mxu0 0
        %2050 = vmatpush1.bf16.msra.mxu0 %v2031
        %2051 = vmatprep.subr.bf16.mxu0 0
        %2052 = vmatpush1.bf16.msra.mxu0 %v2032
        %2053 = vmatprep.subr.bf16.mxu0 0
        %2054 = vmatpush1.bf16.msra.mxu0 %v2033
        %2055 = vmatprep.subr.bf16.mxu0 0
        %2056 = vmatpush1.bf16.msra.mxu0 0
        %2057 = vmatprep.subr.bf16.mxu0 0
        %2058 = vmatpush1.bf16.msra.mxu0 0
        %2059 = vmatprep.subr.bf16.mxu0 0
        %2060 = vmatpush1.bf16.msra.mxu0 0
        %2061 = vmatprep.subr.bf16.mxu0 0
        %2062 = vmatpush1.bf16.msra.mxu0 0
        %2063 = vmatprep.subr.bf16.mxu0 0
        %2064 = vmatpush1.bf16.msra.mxu0 0
        %2065 = vmatprep.subr.bf16.mxu0 0
        %2066 = vmatpush1.bf16.msra.mxu0 0
        %2067 = vmatprep.subr.bf16.mxu0 0
        %2068 = vmatpush1.bf16.msra.mxu0 0
        %2069 = vmatprep.subr.bf16.mxu0 0
        %2070 = vmatpush1.bf16.msra.mxu0 0
        %2071 = vmatprep.subr.bf16.mxu0 0
        %2072 = vmatpush1.bf16.msra.mxu0 0
        %2073 = vmatprep.subr.bf16.mxu0 0
        %2074 = vmatpush1.bf16.msra.mxu0 0
        %2075 = vmatprep.mubr.bf16.mxu0 0
        %2076 = vmatmul.mubr.bf16.gmra.mrb[0].mxu0 %v2041
        %v2077 = vpop.f32.mrb[0].mxu0
        %v2078 = vadd.f32 0.0, %v2077
        %v2079 = vpop.f32.mrb[0].mxu0
        %v2080 = vpop.f32.mrb[0].mxu0
        %v2081 = vpop.f32.mrb[0].mxu0
        %2082 = vdwg.mxu0
        %v2083 = vadd.f32 %v1986, %v2078
        %v2084 = vld [vmem:[%s6] sm:$0x1]
        %v2086 = vlaneseq
        %v2087 = vshrl.u32 %v2086, 7
        %v2088 = vsub.s32 0, %v2087
        %v2089 = vrot.slane %v2084, %v2088
        %v2091 = vadd.f32 %v2083, %v2089
        %v2092 = vmax.f32 %v2091, 0.0
        %2093 = vst [vmem:[#allocation2] sm:$0xf] %v2092
        %v2094 = vld [vmem:[#allocation2] ss:$2 sm:$0x3]
        %v2095 = vld [vmem:[%s1099] ss:$2 sm:$0x3]
        %v2096 = vmax.f32 %v2094, %v2095
        %v2097 = vpack.c.bf16 %v2096, %v2096
        %v2098 = vld [vmem:[%s11] sm:$0xf]
        %v2099 = vld [vmem:[%s11 + $0x4] sm:$0xf]
        %v2100 = vld [vmem:[%s11 + $0x8] sm:$0xf]
        %v2101 = vld [vmem:[%s11 + $0xc] sm:$0xf]
        %v2102 = vld [vmem:[%s11 + $0x10] sm:$0xf]
        %v2103 = vld [vmem:[%s11 + $0x14] sm:$0xf]
        %v2104 = vld [vmem:[%s11 + $0x18] sm:$0xf]
        %v2105 = vld [vmem:[%s11 + $0x1c] sm:$0xf]
        %v2106 = vld [vmem:[%s11 + $0x20] sm:$0xf]
        %v2107 = vld [vmem:[%s11 + $0x24] sm:$0xf]
        %v2108 = vld [vmem:[%s11 + $0x28] sm:$0xf]
        %v2109 = vld [vmem:[%s11 + $0x2c] sm:$0xf]
        %v2110 = vld [vmem:[%s11 + $0x30] sm:$0xf]
        %v2111 = vld [vmem:[%s11 + $0x34] sm:$0xf]
        %v2112 = vld [vmem:[%s11 + $0x38] sm:$0xf]
        %v2113 = vld [vmem:[%s11 + $0x3c] sm:$0xf]
        %v2130 = vunpack.c.l.b16 %v2098
        %v2131 = vunpack.c.l.b16 %v2099
        %v2132 = vunpack.c.l.b16 %v2100
        %v2133 = vunpack.c.l.b16 %v2101
        %v2134 = vunpack.c.l.b16 %v2102
        %v2135 = vunpack.c.l.b16 %v2103
        %v2136 = vunpack.c.l.b16 %v2104
        %v2137 = vunpack.c.l.b16 %v2105
        %v2138 = vunpack.c.l.b16 %v2106
        %v2139 = vunpack.c.l.b16 %v2107
        %v2140 = vunpack.c.l.b16 %v2108
        %v2141 = vunpack.c.l.b16 %v2109
        %v2142 = vunpack.c.l.b16 %v2110
        %v2143 = vunpack.c.l.b16 %v2111
        %v2144 = vunpack.c.l.b16 %v2112
        %v2145 = vunpack.c.l.b16 %v2113
        %v2146 = vpack.c.b16 %v2131, %v2130
        %v2147 = vpack.c.b16 %v2133, %v2132
        %v2148 = vpack.c.b16 %v2135, %v2134
        %v2149 = vpack.c.b16 %v2137, %v2136
        %v2150 = vpack.c.b16 %v2139, %v2138
        %v2151 = vpack.c.b16 %v2141, %v2140
        %v2152 = vpack.c.b16 %v2143, %v2142
        %v2153 = vpack.c.b16 %v2145, %v2144
        %2162 = vmatprep.subr.bf16.mxu0 0
        %2163 = vmatpush1.bf16.msra.mxu0 %v2146
        %2164 = vmatprep.subr.bf16.mxu0 0
        %2165 = vmatpush1.bf16.msra.mxu0 %v2147
        %2166 = vmatprep.subr.bf16.mxu0 0
        %2167 = vmatpush1.bf16.msra.mxu0 %v2148
        %2168 = vmatprep.subr.bf16.mxu0 0
        %2169 = vmatpush1.bf16.msra.mxu0 %v2149
        %2170 = vmatprep.subr.bf16.mxu0 0
        %2171 = vmatpush1.bf16.msra.mxu0 %v2150
        %2172 = vmatprep.subr.bf16.mxu0 0
        %2173 = vmatpush1.bf16.msra.mxu0 %v2151
        %2174 = vmatprep.subr.bf16.mxu0 0
        %2175 = vmatpush1.bf16.msra.mxu0 %v2152
        %2176 = vmatprep.subr.bf16.mxu0 0
        %2177 = vmatpush1.bf16.msra.mxu0 %v2153
        %2178 = vmatprep.subr.bf16.mxu0 0
        %2179 = vmatpush1.bf16.msra.mxu0 0
        %2180 = vmatprep.subr.bf16.mxu0 0
        %2181 = vmatpush1.bf16.msra.mxu0 0
        %2182 = vmatprep.subr.bf16.mxu0 0
        %2183 = vmatpush1.bf16.msra.mxu0 0
        %2184 = vmatprep.subr.bf16.mxu0 0
        %2185 = vmatpush1.bf16.msra.mxu0 0
        %2186 = vmatprep.subr.bf16.mxu0 0
        %2187 = vmatpush1.bf16.msra.mxu0 0
        %2188 = vmatprep.subr.bf16.mxu0 0
        %2189 = vmatpush1.bf16.msra.mxu0 0
        %2190 = vmatprep.subr.bf16.mxu0 0
        %2191 = vmatpush1.bf16.msra.mxu0 0
        %2192 = vmatprep.subr.bf16.mxu0 0
        %2193 = vmatpush1.bf16.msra.mxu0 0
        %2194 = vmatprep.mubr.bf16.mxu0 0
        %2195 = vmatmul.mubr.bf16.gmra.mrb[0].mxu0 %v2097
        %v2196 = vpop.f32.mrb[0].mxu0
        %v2197 = vadd.f32 0.0, %v2196
        %v2198 = vpop.f32.mrb[0].mxu0
        %v2199 = vpop.f32.mrb[0].mxu0
        %v2200 = vpop.f32.mrb[0].mxu0
        %2201 = vdwg.mxu0
        %v2202 = vld [vmem:[%s12] sm:$0xf]
        %v2203 = vld [vmem:[%s12 + $0x4] sm:$0xf]
        %v2204 = vld [vmem:[%s12 + $0x8] sm:$0xf]
        %v2205 = vld [vmem:[%s12 + $0xc] sm:$0xf]
        %v2206 = vld [vmem:[%s12 + $0x10] sm:$0xf]
        %v2207 = vld [vmem:[%s12 + $0x14] sm:$0xf]
        %v2208 = vld [vmem:[%s12 + $0x18] sm:$0xf]
        %v2209 = vld [vmem:[%s12 + $0x1c] sm:$0xf]
        %v2210 = vld [vmem:[%s12 + $0x20] sm:$0xf]
        %v2211 = vld [vmem:[%s12 + $0x24] sm:$0xf]
        %v2212 = vld [vmem:[%s12 + $0x28] sm:$0xf]
        %v2213 = vld [vmem:[%s12 + $0x2c] sm:$0xf]
        %v2214 = vld [vmem:[%s12 + $0x30] sm:$0xf]
        %v2215 = vld [vmem:[%s12 + $0x34] sm:$0xf]
        %v2216 = vld [vmem:[%s12 + $0x38] sm:$0xf]
        %v2217 = vld [vmem:[%s12 + $0x3c] sm:$0xf]
        %v2234 = vunpack.c.l.b16 %v2202
        %v2235 = vunpack.c.l.b16 %v2203
        %v2236 = vunpack.c.l.b16 %v2204
        %v2237 = vunpack.c.l.b16 %v2205
        %v2238 = vunpack.c.l.b16 %v2206
        %v2239 = vunpack.c.l.b16 %v2207
        %v2240 = vunpack.c.l.b16 %v2208
        %v2241 = vunpack.c.l.b16 %v2209
        %v2242 = vunpack.c.l.b16 %v2210
        %v2243 = vunpack.c.l.b16 %v2211
        %v2244 = vunpack.c.l.b16 %v2212
        %v2245 = vunpack.c.l.b16 %v2213
        %v2246 = vunpack.c.l.b16 %v2214
        %v2247 = vunpack.c.l.b16 %v2215
        %v2248 = vunpack.c.l.b16 %v2216
        %v2249 = vunpack.c.l.b16 %v2217
        %v2250 = vpack.c.b16 %v2235, %v2234
        %v2251 = vpack.c.b16 %v2237, %v2236
        %v2252 = vpack.c.b16 %v2239, %v2238
        %v2253 = vpack.c.b16 %v2241, %v2240
        %v2254 = vpack.c.b16 %v2243, %v2242
        %v2255 = vpack.c.b16 %v2245, %v2244
        %v2256 = vpack.c.b16 %v2247, %v2246
        %v2257 = vpack.c.b16 %v2249, %v2248
        %2266 = vmatprep.subr.bf16.mxu0 0
        %2267 = vmatpush1.bf16.msra.mxu0 %v2250
        %2268 = vmatprep.subr.bf16.mxu0 0
        %2269 = vmatpush1.bf16.msra.mxu0 %v2251
        %2270 = vmatprep.subr.bf16.mxu0 0
        %2271 = vmatpush1.bf16.msra.mxu0 %v2252
        %2272 = vmatprep.subr.bf16.mxu0 0
        %2273 = vmatpush1.bf16.msra.mxu0 %v2253
        %2274 = vmatprep.subr.bf16.mxu0 0
        %2275 = vmatpush1.bf16.msra.mxu0 %v2254
        %2276 = vmatprep.subr.bf16.mxu0 0
        %2277 = vmatpush1.bf16.msra.mxu0 %v2255
        %2278 = vmatprep.subr.bf16.mxu0 0
        %2279 = vmatpush1.bf16.msra.mxu0 %v2256
        %2280 = vmatprep.subr.bf16.mxu0 0
        %2281 = vmatpush1.bf16.msra.mxu0 %v2257
        %2282 = vmatprep.subr.bf16.mxu0 0
        %2283 = vmatpush1.bf16.msra.mxu0 0
        %2284 = vmatprep.subr.bf16.mxu0 0
        %2285 = vmatpush1.bf16.msra.mxu0 0
        %2286 = vmatprep.subr.bf16.mxu0 0
        %2287 = vmatpush1.bf16.msra.mxu0 0
        %2288 = vmatprep.subr.bf16.mxu0 0
        %2289 = vmatpush1.bf16.msra.mxu0 0
        %2290 = vmatprep.subr.bf16.mxu0 0
        %2291 = vmatpush1.bf16.msra.mxu0 0
        %2292 = vmatprep.subr.bf16.mxu0 0
        %2293 = vmatpush1.bf16.msra.mxu0 0
        %2294 = vmatprep.subr.bf16.mxu0 0
        %2295 = vmatpush1.bf16.msra.mxu0 0
        %2296 = vmatprep.subr.bf16.mxu0 0
        %2297 = vmatpush1.bf16.msra.mxu0 0
        %2298 = vmatprep.mubr.bf16.mxu0 0
        %2299 = vmatmul.mubr.bf16.gmra.mrb[0].mxu0 %v2097
        %v2300 = vpop.f32.mrb[0].mxu0
        %v2301 = vadd.f32 0.0, %v2300
        %v2302 = vpop.f32.mrb[0].mxu0
        %v2303 = vpop.f32.mrb[0].mxu0
        %v2304 = vpop.f32.mrb[0].mxu0
        %2305 = vdwg.mxu0
        %v2306 = vmax.f32 %v2197, %v2301
        %v2307 = vld [vmem:[%s14] sm:$0x3]
        %v2308 = vpack.c.bf16 %v2306, %v2306
        %v2309 = vld [vmem:[%s13] sm:$0xff]
        %v2310 = vld [vmem:[%s13 + $0x8] sm:$0xff]
        %v2311 = vld [vmem:[%s13 + $0x10] sm:$0xff]
        %v2312 = vld [vmem:[%s13 + $0x18] sm:$0xff]
        %v2313 = vld [vmem:[%s13 + $0x20] sm:$0xff]
        %v2314 = vld [vmem:[%s13 + $0x28] sm:$0xff]
        %v2315 = vld [vmem:[%s13 + $0x30] sm:$0xff]
        %v2316 = vld [vmem:[%s13 + $0x38] sm:$0xff]
        %v2325 = vunpack.c.l.b16 %v2309
        %v2326 = vunpack.c.h.b16 %v2309
        %v2327 = vunpack.c.l.b16 %v2310
        %v2328 = vunpack.c.h.b16 %v2310
        %v2329 = vunpack.c.l.b16 %v2311
        %v2330 = vunpack.c.h.b16 %v2311
        %v2331 = vunpack.c.l.b16 %v2312
        %v2332 = vunpack.c.h.b16 %v2312
        %v2333 = vunpack.c.l.b16 %v2313
        %v2334 = vunpack.c.h.b16 %v2313
        %v2335 = vunpack.c.l.b16 %v2314
        %v2336 = vunpack.c.h.b16 %v2314
        %v2337 = vunpack.c.l.b16 %v2315
        %v2338 = vunpack.c.h.b16 %v2315
        %v2339 = vunpack.c.l.b16 %v2316
        %v2340 = vunpack.c.h.b16 %v2316
        %v2341 = vpack.c.b16 %v2327, %v2325
        %v2342 = vpack.c.b16 %v2328, %v2326
        %v2343 = vpack.c.b16 %v2331, %v2329
        %v2344 = vpack.c.b16 %v2332, %v2330
        %v2345 = vpack.c.b16 %v2335, %v2333
        %v2346 = vpack.c.b16 %v2336, %v2334
        %v2347 = vpack.c.b16 %v2339, %v2337
        %v2348 = vpack.c.b16 %v2340, %v2338
        %vm2357 = vcmask 523264
        %v2359 = vsel %vm2357, %v2308, 0
        %2361 = vmatprep.subr.bf16.mxu0 %v2342
        %2362 = vmatpush1.bf16.msra.mxu0 %v2341
        %2363 = vmatprep.subr.bf16.mxu0 %v2344
        %2364 = vmatpush1.bf16.msra.mxu0 %v2343
        %2365 = vmatprep.subr.bf16.mxu0 %v2346
        %2366 = vmatpush1.bf16.msra.mxu0 %v2345
        %2367 = vmatprep.subr.bf16.mxu0 %v2348
        %2368 = vmatpush1.bf16.msra.mxu0 %v2347
        %2369 = vmatprep.subr.bf16.mxu0 0
        %2370 = vmatpush1.bf16.msra.mxu0 0
        %2371 = vmatprep.subr.bf16.mxu0 0
        %2372 = vmatpush1.bf16.msra.mxu0 0
        %2373 = vmatprep.subr.bf16.mxu0 0
        %2374 = vmatpush1.bf16.msra.mxu0 0
        %2375 = vmatprep.subr.bf16.mxu0 0
        %2376 = vmatpush1.bf16.msra.mxu0 0
        %2377 = vmatprep.subr.bf16.mxu0 0
        %2378 = vmatpush1.bf16.msra.mxu0 0
        %2379 = vmatprep.subr.bf16.mxu0 0
        %2380 = vmatpush1.bf16.msra.mxu0 0
        %2381 = vmatprep.subr.bf16.mxu0 0
        %2382 = vmatpush1.bf16.msra.mxu0 0
        %2383 = vmatprep.subr.bf16.mxu0 0
        %2384 = vmatpush1.bf16.msra.mxu0 0
        %2385 = vmatprep.subr.bf16.mxu0 0
        %2386 = vmatpush1.bf16.msra.mxu0 0
        %2387 = vmatprep.subr.bf16.mxu0 0
        %2388 = vmatpush1.bf16.msra.mxu0 0
        %2389 = vmatprep.subr.bf16.mxu0 0
        %2390 = vmatpush1.bf16.msra.mxu0 0
        %2391 = vmatprep.subr.bf16.mxu0 0
        %2392 = vmatpush1.bf16.msra.mxu0 0
        %2393 = vmatprep.mubr.bf16.mxu0 0
        %2394 = vmatmul.mubr.bf16.gmra.mrb[0].mxu0 %v2359
        %v2395 = vpop.f32.mrb[0].mxu0
        %v2396 = vadd.f32 0.0, %v2395
        %v2397 = vpop.f32.mrb[0].mxu0
        %v2398 = vadd.f32 0.0, %v2397
        %v2399 = vpop.f32.mrb[0].mxu0
        %v2400 = vpop.f32.mrb[0].mxu0
        %2401 = vdwg.mxu0
        %v2404 = vcombine.low %v2396, %v2398
        %v2406 = vunpack.c.l.s4 1966171168
        %v2407 = vunpack.c.0.s8 %v2406
        %v2408 = vlaneseq
        %v2409 = vshrl.u32 %v2408, 7
        %v2410 = vsub.s32 %v2407, %v2409
        %v2411 = vrot.slane %v2404, %v2410
        %v2413 = vunpack.c.l.s4 1966171168
        %v2414 = vunpack.c.0.s8 %v2413
        %v2415 = vlaneseq
        %v2416 = vshrl.u32 %v2415, 7
        %v2417 = vsub.s32 %v2414, %v2416
        %v2418 = vrot.slane %v2411, %v2417
        %v2420 = vadd.f32 %v2307, %v2418
        %v2421 = vld [vmem:[%s13 + $0x40] sm:$0xff]
        %v2422 = vld [vmem:[%s13 + $0x48] sm:$0xff]
        %v2423 = vld [vmem:[%s13 + $0x50] sm:$0xff]
        %v2424 = vld [vmem:[%s13 + $0x58] sm:$0xff]
        %v2425 = vld [vmem:[%s13 + $0x60] sm:$0xff]
        %v2426 = vld [vmem:[%s13 + $0x68] sm:$0xff]
        %v2427 = vld [vmem:[%s13 + $0x70] sm:$0xff]
        %v2428 = vld [vmem:[%s13 + $0x78] sm:$0xff]
        %v2429 = vshrl.u32 %v2308, 16
        %v2439 = vunpack.c.l.b16 %v2421
        %v2440 = vunpack.c.h.b16 %v2421
        %v2441 = vunpack.c.l.b16 %v2422
        %v2442 = vunpack.c.h.b16 %v2422
        %v2443 = vunpack.c.l.b16 %v2423
        %v2444 = vunpack.c.h.b16 %v2423
        %v2445 = vunpack.c.l.b16 %v2424
        %v2446 = vunpack.c.h.b16 %v2424
        %v2447 = vunpack.c.l.b16 %v2425
        %v2448 = vunpack.c.h.b16 %v2425
        %v2449 = vunpack.c.l.b16 %v2426
        %v2450 = vunpack.c.h.b16 %v2426
        %v2451 = vunpack.c.l.b16 %v2427
        %v2452 = vunpack.c.h.b16 %v2427
        %v2453 = vunpack.c.l.b16 %v2428
        %v2454 = vunpack.c.h.b16 %v2428
        %v2455 = vpack.c.b16 %v2441, %v2439
        %v2456 = vpack.c.b16 %v2442, %v2440
        %v2457 = vpack.c.b16 %v2445, %v2443
        %v2458 = vpack.c.b16 %v2446, %v2444
        %v2459 = vpack.c.b16 %v2449, %v2447
        %v2460 = vpack.c.b16 %v2450, %v2448
        %v2461 = vpack.c.b16 %v2453, %v2451
        %v2462 = vpack.c.b16 %v2454, %v2452
        %v2472 = vsel %vm2357, %v2429, 0
        %2474 = vmatprep.subr.bf16.mxu0 %v2456
        %2475 = vmatpush1.bf16.msra.mxu0 %v2455
        %2476 = vmatprep.subr.bf16.mxu0 %v2458
        %2477 = vmatpush1.bf16.msra.mxu0 %v2457
        %2478 = vmatprep.subr.bf16.mxu0 %v2460
        %2479 = vmatpush1.bf16.msra.mxu0 %v2459
        %2480 = vmatprep.subr.bf16.mxu0 %v2462
        %2481 = vmatpush1.bf16.msra.mxu0 %v2461
        %2482 = vmatprep.subr.bf16.mxu0 0
        %2483 = vmatpush1.bf16.msra.mxu0 0
        %2484 = vmatprep.subr.bf16.mxu0 0
        %2485 = vmatpush1.bf16.msra.mxu0 0
        %2486 = vmatprep.subr.bf16.mxu0 0
        %2487 = vmatpush1.bf16.msra.mxu0 0
        %2488 = vmatprep.subr.bf16.mxu0 0
        %2489 = vmatpush1.bf16.msra.mxu0 0
        %2490 = vmatprep.subr.bf16.mxu0 0
        %2491 = vmatpush1.bf16.msra.mxu0 0
        %2492 = vmatprep.subr.bf16.mxu0 0
        %2493 = vmatpush1.bf16.msra.mxu0 0
        %2494 = vmatprep.subr.bf16.mxu0 0
        %2495 = vmatpush1.bf16.msra.mxu0 0
        %2496 = vmatprep.subr.bf16.mxu0 0
        %2497 = vmatpush1.bf16.msra.mxu0 0
        %2498 = vmatprep.subr.bf16.mxu0 0
        %2499 = vmatpush1.bf16.msra.mxu0 0
        %2500 = vmatprep.subr.bf16.mxu0 0
        %2501 = vmatpush1.bf16.msra.mxu0 0
        %2502 = vmatprep.subr.bf16.mxu0 0
        %2503 = vmatpush1.bf16.msra.mxu0 0
        %2504 = vmatprep.subr.bf16.mxu0 0
        %2505 = vmatpush1.bf16.msra.mxu0 0
        %2506 = vmatprep.mubr.bf16.mxu0 0
        %2507 = vmatmul.mubr.bf16.gmra.mrb[0].mxu0 %v2472
        %v2508 = vpop.f32.mrb[0].mxu0
        %v2509 = vadd.f32 0.0, %v2508
        %v2510 = vpop.f32.mrb[0].mxu0
        %v2511 = vadd.f32 0.0, %v2510
        %v2512 = vpop.f32.mrb[0].mxu0
        %v2513 = vpop.f32.mrb[0].mxu0
        %2514 = vdwg.mxu0
        %v2517 = vcombine.low %v2509, %v2511
        %v2519 = vunpack.c.l.s4 1966171168
        %v2520 = vunpack.c.0.s8 %v2519
        %v2521 = vlaneseq
        %v2522 = vshrl.u32 %v2521, 7
        %v2523 = vsub.s32 %v2520, %v2522
        %v2524 = vrot.slane %v2517, %v2523
        %v2526 = vunpack.c.l.s4 1966171168
        %v2527 = vunpack.c.0.s8 %v2526
        %v2528 = vlaneseq
        %v2529 = vshrl.u32 %v2528, 7
        %v2530 = vsub.s32 %v2527, %v2529
        %v2531 = vrot.slane %v2524, %v2530
        %v2533 = vadd.f32 %v2420, %v2531
        %v2535 = vlaneseq
        %v2536 = vshrl.u32 %v2535, 7
        %v2537 = vsub.s32 0, %v2536
        %v2538 = vrot.slane %v2533, %v2537
        %v2539 = vlaneseq
        %v2540 = vshrl.u32 %v2539, 7
        %v2541 = vsub.s32 1, %v2540
        %v2542 = vrot.slane %v2533, %v2541
        %vm2545 = vcmask 1040384
        %v2546 = vsel %vm2545, %v2538, 0.0
        %v2547 = vsel %vm2545, %v2542, 0.0
        %v2548 = vadd.f32 %v2546, %v2547
        %2549 = vadd.xlane.f32.xlu0 %v2548
        %v2550 = vpop.xlane.xlu0 %2549
        %v2551 = vrcp.pop 256.0
        %v2552 = vmul.f32 %v2550, %v2551
        %v2554 = vlaneseq
        %v2555 = vshrl.u32 %v2554, 7
        %v2556 = vsub.s32 0, %v2555
        %v2557 = vrot.slane %v2552, %v2556
        %v2559 = vsub.f32 %v2533, %v2557
        %v2560 = vmul.f32 %v2559, %v2559
        %v2562 = vlaneseq
        %v2563 = vshrl.u32 %v2562, 7
        %v2564 = vsub.s32 0, %v2563
        %v2565 = vrot.slane %v2560, %v2564
        %v2566 = vlaneseq
        %v2567 = vshrl.u32 %v2566, 7
        %v2568 = vsub.s32 1, %v2567
        %v2569 = vrot.slane %v2560, %v2568
        %v2572 = vsel %vm2545, %v2565, 0.0
        %v2573 = vsel %vm2545, %v2569, 0.0
        %v2574 = vadd.f32 %v2572, %v2573
        %2575 = vadd.xlane.f32.xlu0 %v2574
        %v2576 = vpop.xlane.xlu0 %2575
        %v2577 = vmul.f32 %v2576, %v2551
        %v2578 = vadd.f32 %v2577, 1e-05
        %v2579 = vrsqrt.pop %v2578
        %v2581 = vlaneseq
        %v2582 = vshrl.u32 %v2581, 7
        %v2583 = vsub.s32 0, %v2582
        %v2584 = vrot.slane %v2579, %v2583
        %v2586 = vmul.f32 %v2559, %v2584
        %v2587 = vld [vmem:[%s15] sm:$0x3]
        %v2588 = vmul.f32 %v2586, %v2587
        %v2589 = vld [vmem:[%s16] sm:$0x3]
        %v2590 = vadd.f32 %v2588, %v2589
        %v2591 = vlaneseq
        %vm2592 = vcmp.ge.s32.totalorder %v2591, 0
        %vm2593 = vcmp.lt.s32.totalorder %v2591, 256
        %vm2594 = vmand %vm2592, %vm2593
        %2595 = vst.msk [vmem:[%s637] sm:$0x3] %vm2594, %v2590
        %v2597 = vlaneseq
        %v2598 = vshrl.u32 %v2597, 7
        %v2599 = vsub.s32 0, %v2598
        %v2600 = vrot.slane %v2590, %v2599
        %v2601 = vlaneseq
        %v2602 = vshrl.u32 %v2601, 7
        %v2603 = vsub.s32 1, %v2602
        %v2604 = vrot.slane %v2590, %v2603
        %v2607 = vpack.c.bf16 %v2600, %v2600
        %v2608 = vpack.c.bf16 %v2604, %v2604
        %v2609 = vld [vmem:[%s17] sm:$0xf]
        %v2610 = vld [vmem:[%s17 + $0x4] sm:$0xf]
        %v2611 = vld [vmem:[%s17 + $0x8] sm:$0xf]
        %v2612 = vld [vmem:[%s17 + $0xc] sm:$0xf]
        %v2613 = vld [vmem:[%s17 + $0x10] sm:$0xf]
        %v2614 = vld [vmem:[%s17 + $0x14] sm:$0xf]
        %v2615 = vld [vmem:[%s17 + $0x18] sm:$0xf]
        %v2616 = vld [vmem:[%s17 + $0x1c] sm:$0xf]
        %v2617 = vld [vmem:[%s17 + $0x20] sm:$0xf]
        %v2618 = vld [vmem:[%s17 + $0x24] sm:$0xf]
        %v2619 = vld [vmem:[%s17 + $0x28] sm:$0xf]
        %v2620 = vld [vmem:[%s17 + $0x2c] sm:$0xf]
        %v2621 = vld [vmem:[%s17 + $0x30] sm:$0xf]
        %v2622 = vld [vmem:[%s17 + $0x34] sm:$0xf]
        %v2623 = vld [vmem:[%s17 + $0x38] sm:$0xf]
        %v2624 = vld [vmem:[%s17 + $0x3c] sm:$0xf]
        %v2625 = vld [vmem:[%s17 + $0x40] sm:$0xf]
        %v2626 = vld [vmem:[%s17 + $0x44] sm:$0xf]
        %v2627 = vld [vmem:[%s17 + $0x48] sm:$0xf]
        %v2628 = vld [vmem:[%s17 + $0x4c] sm:$0xf]
        %v2629 = vld [vmem:[%s17 + $0x50] sm:$0xf]
        %v2630 = vld [vmem:[%s17 + $0x54] sm:$0xf]
        %v2631 = vld [vmem:[%s17 + $0x58] sm:$0xf]
        %v2632 = vld [vmem:[%s17 + $0x5c] sm:$0xf]
        %v2633 = vld [vmem:[%s17 + $0x60] sm:$0xf]
        %v2634 = vld [vmem:[%s17 + $0x64] sm:$0xf]
        %v2635 = vld [vmem:[%s17 + $0x68] sm:$0xf]
        %v2636 = vld [vmem:[%s17 + $0x6c] sm:$0xf]
        %v2637 = vld [vmem:[%s17 + $0x70] sm:$0xf]
        %v2638 = vld [vmem:[%s17 + $0x74] sm:$0xf]
        %v2639 = vld [vmem:[%s17 + $0x78] sm:$0xf]
        %v2640 = vld [vmem:[%s17 + $0x7c] sm:$0xf]
        %v2641 = vld [vmem:[%s18] sm:$0x1]
        %v2674 = vunpack.c.l.b16 %v2609
        %v2675 = vunpack.c.l.b16 %v2610
        %v2676 = vunpack.c.l.b16 %v2611
        %v2677 = vunpack.c.l.b16 %v2612
        %v2678 = vunpack.c.l.b16 %v2613
        %v2679 = vunpack.c.l.b16 %v2614
        %v2680 = vunpack.c.l.b16 %v2615
        %v2681 = vunpack.c.l.b16 %v2616
        %v2682 = vunpack.c.l.b16 %v2617
        %v2683 = vunpack.c.l.b16 %v2618
        %v2684 = vunpack.c.l.b16 %v2619
        %v2685 = vunpack.c.l.b16 %v2620
        %v2686 = vunpack.c.l.b16 %v2621
        %v2687 = vunpack.c.l.b16 %v2622
        %v2688 = vunpack.c.l.b16 %v2623
        %v2689 = vunpack.c.l.b16 %v2624
        %v2690 = vunpack.c.l.b16 %v2625
        %v2691 = vunpack.c.l.b16 %v2626
        %v2692 = vunpack.c.l.b16 %v2627
        %v2693 = vunpack.c.l.b16 %v2628
        %v2694 = vunpack.c.l.b16 %v2629
        %v2695 = vunpack.c.l.b16 %v2630
        %v2696 = vunpack.c.l.b16 %v2631
        %v2697 = vunpack.c.l.b16 %v2632
        %v2698 = vunpack.c.l.b16 %v2633
        %v2699 = vunpack.c.l.b16 %v2634
        %v2700 = vunpack.c.l.b16 %v2635
        %v2701 = vunpack.c.l.b16 %v2636
        %v2702 = vunpack.c.l.b16 %v2637
        %v2703 = vunpack.c.l.b16 %v2638
        %v2704 = vunpack.c.l.b16 %v2639
        %v2705 = vunpack.c.l.b16 %v2640
        %v2706 = vpack.c.b16 %v2675, %v2674
        %v2707 = vpack.c.b16 %v2677, %v2676
        %v2708 = vpack.c.b16 %v2679, %v2678
        %v2709 = vpack.c.b16 %v2681, %v2680
        %v2710 = vpack.c.b16 %v2683, %v2682
        %v2711 = vpack.c.b16 %v2685, %v2684
        %v2712 = vpack.c.b16 %v2687, %v2686
        %v2713 = vpack.c.b16 %v2689, %v2688
        %v2714 = vpack.c.b16 %v2691, %v2690
        %v2715 = vpack.c.b16 %v2693, %v2692
        %v2716 = vpack.c.b16 %v2695, %v2694
        %v2717 = vpack.c.b16 %v2697, %v2696
        %v2718 = vpack.c.b16 %v2699, %v2698
        %v2719 = vpack.c.b16 %v2701, %v2700
        %v2720 = vpack.c.b16 %v2703, %v2702
        %v2721 = vpack.c.b16 %v2705, %v2704
        %2738 = vmatprep.subr.bf16.mxu0 0
        %2739 = vmatpush1.bf16.msra.mxu0 %v2706
        %2740 = vmatprep.subr.bf16.mxu0 0
        %2741 = vmatpush1.bf16.msra.mxu0 %v2707
        %2742 = vmatprep.subr.bf16.mxu0 0
        %2743 = vmatpush1.bf16.msra.mxu0 %v2708
        %2744 = vmatprep.subr.bf16.mxu0 0
        %2745 = vmatpush1.bf16.msra.mxu0 %v2709
        %2746 = vmatprep.subr.bf16.mxu0 0
        %2747 = vmatpush1.bf16.msra.mxu0 %v2710
        %2748 = vmatprep.subr.bf16.mxu0 0
        %2749 = vmatpush1.bf16.msra.mxu0 %v2711
        %2750 = vmatprep.subr.bf16.mxu0 0
        %2751 = vmatpush1.bf16.msra.mxu0 %v2712
        %2752 = vmatprep.subr.bf16.mxu0 0
        %2753 = vmatpush1.bf16.msra.mxu0 %v2713
        %2754 = vmatprep.subr.bf16.mxu0 0
        %2755 = vmatpush1.bf16.msra.mxu0 %v2714
        %2756 = vmatprep.subr.bf16.mxu0 0
        %2757 = vmatpush1.bf16.msra.mxu0 %v2715
        %2758 = vmatprep.subr.bf16.mxu0 0
        %2759 = vmatpush1.bf16.msra.mxu0 %v2716
        %2760 = vmatprep.subr.bf16.mxu0 0
        %2761 = vmatpush1.bf16.msra.mxu0 %v2717
        %2762 = vmatprep.subr.bf16.mxu0 0
        %2763 = vmatpush1.bf16.msra.mxu0 %v2718
        %2764 = vmatprep.subr.bf16.mxu0 0
        %2765 = vmatpush1.bf16.msra.mxu0 %v2719
        %2766 = vmatprep.subr.bf16.mxu0 0
        %2767 = vmatpush1.bf16.msra.mxu0 %v2720
        %2768 = vmatprep.subr.bf16.mxu0 0
        %2769 = vmatpush1.bf16.msra.mxu0 %v2721
        %2770 = vmatprep.mubr.bf16.mxu0 %v2608
        %2771 = vmatmul.mubr.bf16.gmra.mrb[0].mxu0 %v2607
        %v2772 = vpop.f32.mrb[0].mxu0
        %v2773 = vadd.f32 %v2641, %v2772
        %v2774 = vpop.f32.mrb[0].mxu0
        %v2775 = vpop.f32.mrb[0].mxu0
        %v2776 = vpop.f32.mrb[0].mxu0
        %2777 = vdwg.mxu0
        %2778 = vst [vmem:[%s628] sm:$0x1] %v2773
        %p2779 = scmp.lt.s32.totalorder %s35, 1
        %s2780 = scalar_select %p2779, %s35, 1
        %s2781 = smul.addr %s2780, 2
        %s2782 = scalar_lea.vmem %s19, %s2781
        %s2783 = sand.u32 %s473, 1
        %s2784 = scalar_lea.sflag [#allocation6], %s2783
        %s2785 = sand.u32 %s473, 1
        %s2786 = scalar_lea.vmem [#allocation5], %s2785
        // Predicated region
        $region97: #{cnn_forward.1} parent=95 // pred_check
          %p2787 = pneg %p457
        $region98: #{cnn_forward.1} parent=95 // pred_check_branch
          %2789 = sbr.rel (%p2787) target = $region100
        $region99: #{cnn_forward.1} parent=95 // pred_region
          _
        $region100: #{cnn_forward.1} parent=95 // pred_fallthru
          _
        // Predicated region
        $region101: #{cnn_forward.1} parent=95 // pred_check
          %p2790 = pneg %p483
        $region102: #{cnn_forward.1} parent=95 // pred_check_branch
          %2792 = sbr.rel (%p2790) target = $region104
        $region103: #{cnn_forward.1} parent=95 // pred_region
          %s2794 = ssub.s32 16, 16
          %2795 = vsyncadd %s2784, %s2794
          %s2796 = smul.addr %s35, 16
          %s2797 = scalar_lea.hbm %s20, %s2796
          %s2799 = sshll.u32 %s2786, 4
          %s2800 = int_to_ptr.vmem [resolvable:$true] %s2799
          %2802 = dma.vmem_to_hbm [thread:$0]  %s2800, 16, %s2797, %s2784
        $region104: #{cnn_forward.1} parent=95 // pred_fallthru
          _
      $region96: #{cnn_forward.1} parent=5 // pred_fallthru
        _
      %p2803 = scmp.le.s32.totalorder 2, %s30
      // Predicated region
      $region105: #{cnn_forward.1} parent=5 // pred_check
        %p2804 = pneg %p2803
      $region106: #{cnn_forward.1} parent=5 // pred_check_branch
        %2806 = sbr.rel (%p2804) target = $region108
      $region107: #{cnn_forward.1} parent=5 // pred_region
        %s2807 = ssub.s32 %s30, 2
        // Predicated region
        $region109: #{cnn_forward.1} parent=107 // pred_check
          %p2808 = pneg %p463
        $region110: #{cnn_forward.1} parent=107 // pred_check_branch
          %2810 = sbr.rel (%p2808) target = $region112
        $region111: #{cnn_forward.1} parent=107 // pred_region
          %p2811 = scmp.lt.s32.totalorder %s36, 1
          %s2812 = scalar_select %p2811, %s36, 1
          %s2813 = smul.addr %s2812, 2
          %s2814 = scalar_lea.vmem %s19, %s2813
        $region112: #{cnn_forward.1} parent=107 // pred_fallthru
          _
        // Predicated region
        $region113: #{cnn_forward.1} parent=107 // pred_check
          %p2815 = pneg %p489
        $region114: #{cnn_forward.1} parent=107 // pred_check_branch
          %2817 = sbr.rel (%p2815) target = $region116
        $region115: #{cnn_forward.1} parent=107 // pred_region
          %s2818 = sand.u32 %s474, 1
          %s2819 = scalar_lea.sflag [#allocation6], %s2818
          %s2820 = sand.u32 %s474, 1
          %s2821 = scalar_lea.vmem [#allocation5], %s2820
          %2822 = dma.done %s2819, 16
        $region116: #{cnn_forward.1} parent=107 // pred_fallthru
          _
      $region108: #{cnn_forward.1} parent=5 // pred_fallthru
        _
    $region6: #{cnn_forward.1} parent=1 // loop_footer
      %s34 = sadd.s32 1, %s30
    $region7: #{cnn_forward.1} parent=1 // loop_footer_branch
      %29 = sbr.rel target = $region3
    $region8: #{cnn_forward.1} parent=1 // loop_exit
      _
    %2823 = vsyncpa [#allocation6], 1
    %s2824 = scalar_lea.sflag [#allocation6], 1
    %2825 = vsyncpa %s2824, 1

</llo_original>
